<compile_context>
chip_gen: v5e
topology: v5e:2x2
jax: 0.10.0
libtpu: 0.0.40
codegen_flags: <defaults>
</compile_context>

<pallas_src>
import math
import numpy as np
import jax
import jax.numpy as jnp
from jax.experimental import pallas as pl
from jax.experimental.pallas import tpu as pltpu

GP = 128                      # lane width of one LSTM gate block (and of h/c per direction)
CP = 128                      # lane-dense width of one head-output block (num_tags padded)
NEG = np.float32(-1e30)       # "minus infinity" that stays finite through matmuls


# ----------------------------------------------------------------------------
# Fused Pallas kernel: BiLSTM (fwd+bwd, packed-seq semantics) over the combined
# [subject ; object] batch + avg/max pooling + linear + softmax.
# ----------------------------------------------------------------------------
def make_fused_kernel(T, BBp, n_pairs):
    GF = 4 * GP                                     # per-direction gate width

    def _sigmoid(x):                                # one EUP op per gate (no exp + divide)
        return 0.5 * jnp.tanh(0.5 * x) + 0.5

    def kernel(x_ref, vm_ref, pmb_ref, il_ref, wih_ref, whh_ref, wh_ref, hb_ref,
               out_ref, gx_ref):
        # ---- Input projection for every (timestep, row, direction, gate) in one bf16 MXU
        # ---- matmul; the LSTM biases are folded in via the appended ones column of x.
        # ---- The result is parked in VMEM scratch, NOT kept live in registers.
        gx_ref[...] = jnp.dot(x_ref[...], wih_ref[...],
                              preferred_element_type=jnp.float32)       # (T*BBp, 2*GF) f32

        def cell(gates, c_prev, valid):
            # gate blocks are 128-lane aligned slices -> free vreg slices
            i_g = _sigmoid(gates[:, 0 * GP:1 * GP])
            f_g = _sigmoid(gates[:, 1 * GP:2 * GP])
            g_g = jnp.tanh(gates[:, 2 * GP:3 * GP])
            o_g = _sigmoid(gates[:, 3 * GP:4 * GP])
            # valid in {0,1}: zeros (h, c) outside each sequence, which gives both the packed
            # LSTM recurrence and pad_packed_sequence's zero-filled outputs.
            c_new = (f_g * c_prev + i_g * g_g) * valid
            h_new = o_g * jnp.tanh(c_new)
            return h_new, c_new

        zeros = jnp.zeros((BBp, GP), jnp.float32)
        h_f = c_f = h_b = c_b = zeros
        sum_f = sum_b = zeros
        max_f = max_b = jnp.full((BBp, GP), NEG, jnp.float32)

        # ---- Fully-unrolled time loop (T is static & small).  fwd walks t = 0..T-1, bwd
        # ---- walks t = T-1..0 (in-kernel "reversal" via indexing).  Both directions share
        # ---- ONE block-diagonal recurrent matmul per step.
        for j in range(T):
            tf, tb = j, T - 1 - j
            rf, rb = tf * BBp, tb * BBp             # tile-aligned row offsets (gx / masks)
            h_cat = jnp.concatenate([h_f, h_b], axis=1).astype(jnp.bfloat16)  # (BBp, 2*GP)
            # RHS read from the VMEM ref at the dot -> streamed, never a long-lived value.
            hdot = jnp.dot(h_cat, whh_ref[...],
                           preferred_element_type=jnp.float32)                # (BBp, 2*GF)
            gates_f = gx_ref[rf:rf + BBp, 0:GF] + hdot[:, 0:GF]
            gates_b = gx_ref[rb:rb + BBp, GF:2 * GF] + hdot[:, GF:2 * GF]
            h_f, c_f = cell(gates_f, c_f, vm_ref[rf:rf + BBp, :])
            h_b, c_b = cell(gates_b, c_b, vm_ref[rb:rb + BBp, :])
            # online avg / max pooling; pool mask pre-folded into an additive 0 / -1e30 bias
            sum_f = sum_f + h_f
            sum_b = sum_b + h_b
            max_f = jnp.maximum(max_f, h_f + pmb_ref[rf:rf + BBp, :])
            max_b = jnp.maximum(max_b, h_b + pmb_ref[rb:rb + BBp, :])

        # ---- pooled features -> single head matmul -> softmax
        inv_len = il_ref[...]                       # (BBp, GP): 1/Ts subj rows, 1/To obj rows
        pooled = jnp.concatenate(
            [sum_f * inv_len, sum_b * inv_len, max_f, max_b], axis=1)   # (BBp, 4*GP)
        # head weight (4*GP, 2*CP): lanes 0:CP = subject half of nn.Linear, CP:2*CP = object.
        res = jnp.dot(pooled.astype(jnp.bfloat16), wh_ref[...],
                      preferred_element_type=jnp.float32)               # (BBp, 2*CP)
        logits = (res[0:n_pairs, 0:CP]
                  + res[n_pairs:2 * n_pairs, CP:2 * CP]
                  + hb_ref[...])                    # bias pad lanes = -1e30 -> softmax-killed
        m = jnp.max(logits, axis=1, keepdims=True)
        e = jnp.exp(logits - m)                     # pad lanes underflow to exactly 0
        out_ref[...] = e / jnp.sum(e, axis=1, keepdims=True)
        # Note: the (n_pairs, CP) store is a one-time 2-row masked vst; padding it to a full
        # 8-sublane tile would need an unaligned sublane concat for no measurable gain.

    return kernel


# ----------------------------------------------------------------------------
# Weight packing into the lane-aligned kernel layout (plain JAX, done ONCE at setup).
# ----------------------------------------------------------------------------
def _pad_gate_cols(w, H):
    """[rows, 4H] in PyTorch (i, f, g, o) gate order -> [rows, 4*GP] with each gate in its own
    128-lane block; zero padding keeps the padded h/c lanes exactly 0 through the LSTM."""
    rows = w.shape[0]
    out = jnp.zeros((rows, 4 * GP), jnp.float32)
    for g in range(4):
        out = out.at[:, g * GP:g * GP + H].set(w[:, g * H:(g + 1) * H])
    return out


def pack_lstm_weights(p, H, D, Daug):
    """Both directions' input weights side by side with (bih+bhh) folded in as an extra row
    (matched by a ones column on x), plus the block-diagonal recurrent weight
    [[whh_f, 0], [0, whh_b]] so both directions share one per-step matmul.  bf16 MXU inputs."""
    wih = jnp.zeros((Daug, 8 * GP), jnp.float32)
    wih = wih.at[:D, 0:4 * GP].set(_pad_gate_cols(p["wih_f"].T, H))
    wih = wih.at[:D, 4 * GP:8 * GP].set(_pad_gate_cols(p["wih_b"].T, H))
    wih = wih.at[D, 0:4 * GP].set(_pad_gate_cols((p["bih_f"] + p["bhh_f"])[None, :], H)[0])
    wih = wih.at[D, 4 * GP:8 * GP].set(_pad_gate_cols((p["bih_b"] + p["bhh_b"])[None, :], H)[0])
    whh = jnp.zeros((2 * GP, 8 * GP), jnp.float32)
    whh = whh.at[:H, 0:4 * GP].set(_pad_gate_cols(p["whh_f"].T, H))
    whh = whh.at[GP:GP + H, 4 * GP:8 * GP].set(_pad_gate_cols(p["whh_b"].T, H))
    return wih.astype(jnp.bfloat16), whh.astype(jnp.bfloat16)


def pack_head_weights(lin_w, lin_b, H):
    """nn.Linear(8H -> C) packed as ONE (4*GP, 2*CP) matrix matching the lane-concatenated
    pooled stats [ave_f | ave_b | max_f | max_b]: lanes 0:CP hold the subject half of the
    weight, lanes CP:2*CP the object half.  Bias pad lanes are -1e30 so the in-kernel
    softmax ignores the padded classes."""
    C = lin_w.shape[0]
    w_t = lin_w.T          # (8H, C): rows = [s_ave_f, s_ave_b, s_max_f, s_max_b,
                           #                  o_ave_f, o_ave_b, o_max_f, o_max_b]
    wh = jnp.zeros((4 * GP, 2 * CP), jnp.float32)
    for k in range(4):
        wh = wh.at[k * GP:k * GP + H, 0:C].set(w_t[k * H:(k + 1) * H, :])
        wh = wh.at[k * GP:k * GP + H, CP:CP + C].set(w_t[(4 + k) * H:(5 + k) * H, :])
    hb = jnp.full((1, CP), NEG, jnp.float32).at[0, :C].set(lin_b)
    return wh.astype(jnp.bfloat16), hb


def pack_params(cfg, params):
    emb_table, lstm_layers, lin_w, lin_b = params
    H = cfg.lstm1_hidden_dim // 2
    D = cfg.embedding_dim
    Daug = ((D + 1 + 7) // 8) * 8                   # bias row + zero rows up to a sublane tile
    # TODO(synk): multi-layer BiLSTM (lstm1_layer_num > 1) would need a sequence-output kernel
    # variant; the config uses a single layer, so only that case is fused here.
    wih, whh = pack_lstm_weights(lstm_layers[0], H, D, Daug)
    wh, hb = pack_head_weights(lin_w, lin_b, H)
    return dict(emb=emb_table, wih=wih, whh=whh, wh=wh, hb=hb, H=H, D=D, Daug=Daug)


# ----------------------------------------------------------------------------
# Plain-JAX glue: span gather / padding (static span indices).
# ----------------------------------------------------------------------------
def get_so_embedded(text_embedded, so_pairs, max_len):
    s_emb, o_emb = [], []
    for i, ((s0, s1), (o0, o1)) in enumerate(so_pairs):
        s_len, o_len = s1 - s0 + 1, o1 - o0 + 1
        s_emb.append(jnp.pad(text_embedded[i, s0:s1 + 1], ((0, max_len - s_len), (0, 0))))
        o_emb.append(jnp.pad(text_embedded[i, o0:o1 + 1], ((0, max_len - o_len), (0, 0))))
    return jnp.stack(s_emb), jnp.stack(o_emb)


# ----------------------------------------------------------------------------
# Deterministic parameter initialization (synthetic; shapes follow the module's __init__).
# ----------------------------------------------------------------------------
class Config:
    embedding_dim = 32
    lstm1_hidden_dim = 32          # per-direction hidden = 16
    lstm1_layer_num = 1
    dropout = 0.0
    num_tags = 8
    vocab_size = 100


def init_params(cfg, key):
    keys = iter(jax.random.split(key, 64))
    H = cfg.lstm1_hidden_dim // 2
    k = 1.0 / math.sqrt(H)

    def u(shape):
        return jax.random.uniform(next(keys), shape, jnp.float32, -k, k)

    # TODO(synk): pretrained BertModel is replaced by a deterministic embedding table lookup
    # (the full transformer stack has no in-script checkpoint).
    emb_table = jax.random.normal(next(keys), (cfg.vocab_size, cfg.embedding_dim),
                                  jnp.float32) * 0.1

    lstm_layers = []
    in_dim = cfg.embedding_dim
    for _ in range(cfg.lstm1_layer_num):
        lstm_layers.append(dict(
            wih_f=u((4 * H, in_dim)), whh_f=u((4 * H, H)),
            bih_f=u((4 * H,)), bhh_f=u((4 * H,)),
            wih_b=u((4 * H, in_dim)), whh_b=u((4 * H, H)),
            bih_b=u((4 * H,)), bhh_b=u((4 * H,)),
        ))
        in_dim = 2 * H

    kl = 1.0 / math.sqrt(cfg.lstm1_hidden_dim * 4)
    lin_w = jax.random.uniform(next(keys), (cfg.num_tags, cfg.lstm1_hidden_dim * 4),
                               jnp.float32, -kl, kl)
    lin_b = jax.random.uniform(next(keys), (cfg.num_tags,), jnp.float32, -kl, kl)
    return emb_table, lstm_layers, lin_w, lin_b


# ----------------------------------------------------------------------------
# BertLSTM forward: embedding lookup + span gather in JAX, everything else fused
# into a single gridless pallas_call.
# ----------------------------------------------------------------------------
def bert_lstm_forward(cfg, packed, sentence_tokens, sentence_masks, so_pairs):
    D, Daug = packed["D"], packed["Daug"]

    text_embedded = packed["emb"][sentence_tokens]            # [B, S, E] ("Bert" stand-in)

    n_pairs = len(so_pairs)
    s_lengths = [int(p[0][1] - p[0][0] + 1) for p in so_pairs]
    o_lengths = [int(p[1][1] - p[1][0] + 1) for p in so_pairs]
    T = max(max(s_lengths), max(o_lengths))                   # common zero-pad length
    Ts, To = max(s_lengths), max(o_lengths)                   # pad_packed_sequence lengths

    s_emb, o_emb = get_so_embedded(text_embedded, so_pairs, T)

    # Combined batch: rows [0:n) subject spans, [n:2n) object spans, zero rows up to a
    # sublane multiple so every per-timestep row slice inside the kernel is tile aligned.
    BBp = ((2 * n_pairs + 7) // 8) * 8
    x = jnp.pad(jnp.concatenate([s_emb, o_emb], axis=0),
                ((0, BBp - 2 * n_pairs), (0, 0), (0, 0)))     # (BBp, T, D)
    x_tm = jnp.transpose(x, (1, 0, 2)).reshape(T * BBp, D)    # time-major, flattened
    aug = jnp.zeros((T * BBp, Daug - D), jnp.float32).at[:, 0].set(1.0)   # ones col = bias
    x_aug = jnp.concatenate([x_tm, aug], axis=1).astype(jnp.bfloat16)

    # Lane-wide (GP=128) masks precomputed on host: no per-step broadcasts in the kernel.
    lengths = np.zeros((BBp,), np.int32)
    lengths[:n_pairs] = s_lengths
    lengths[n_pairs:2 * n_pairs] = o_lengths
    caps = np.zeros((BBp,), np.int32)
    caps[:n_pairs] = Ts
    caps[n_pairs:2 * n_pairs] = To
    t_idx = np.arange(T)[:, None]
    valid = (t_idx < lengths[None, :]).astype(np.float32).reshape(T * BBp, 1)
    vm = np.tile(valid, (1, GP)).astype(np.float32)                         # (T*BBp, GP)
    pool = (t_idx < caps[None, :]).reshape(T * BBp, 1)
    pmb = np.tile(np.where(pool, np.float32(0.0), NEG), (1, GP)).astype(np.float32)
    inv = np.zeros((BBp, 1), np.float32)
    inv[:n_pairs] = 1.0 / Ts                      # F.avg_pool1d divides by the padded
    inv[n_pairs:2 * n_pairs] = 1.0 / To           # (pad_packed) group length
    il = np.tile(inv, (1, GP)).astype(np.float32)                           # (BBp, GP)

    kernel = make_fused_kernel(T, BBp, n_pairs)
    probs = pl.pallas_call(
        kernel,
        out_shape=jax.ShapeDtypeStruct((n_pairs, CP), jnp.float32),
        in_specs=[pl.BlockSpec(memory_space=pltpu.MemorySpace.VMEM)] * 8,
        out_specs=pl.BlockSpec(memory_space=pltpu.MemorySpace.VMEM),
        scratch_shapes=[pltpu.VMEM((T * BBp, 8 * GP), jnp.float32)],        # gx (input proj)
    )(x_aug, jnp.asarray(vm), jnp.asarray(pmb), jnp.asarray(il),
      packed["wih"], packed["whh"], packed["wh"], packed["hb"])
    return probs[:, :cfg.num_tags]


if __name__ == "__main__":
    cfg = Config()
    key = jax.random.PRNGKey(0)
    pkey, dkey = jax.random.split(key)
    params = init_params(cfg, pkey)
    packed = pack_params(cfg, params)          # one-time packing; reused across calls

    B, S = 2, 8
    sentence_tokens = jax.random.randint(dkey, (B, S), 0, cfg.vocab_size)
    sentence_masks = jnp.ones((B, S), jnp.int32)
    # static subject/object spans per example: [[s_start, s_end], [o_start, o_end]]
    so_pairs = [[[1, 3], [5, 6]],
                [[0, 1], [4, 7]]]

    y_hat = bert_lstm_forward(cfg, packed, sentence_tokens, sentence_masks, so_pairs)
    jax.block_until_ready(y_hat)
    assert y_hat.shape == (B, cfg.num_tags)
    assert bool(jnp.all(jnp.isfinite(y_hat)))
    assert bool(jnp.allclose(jnp.sum(y_hat, axis=1), 1.0, atol=1e-5))
    print("KERNEL_OK")
</pallas_src>

<mosaic_0001>
module attributes {stable_mosaic.version = 11 : i64} {
  func.func @kernel(%arg0: memref<32x40xbf16, #tpu.memory_space<vmem>>, %arg1: memref<32x128xf32, #tpu.memory_space<vmem>>, %arg2: memref<32x128xf32, #tpu.memory_space<vmem>>, %arg3: memref<8x128xf32, #tpu.memory_space<vmem>>, %arg4: memref<40x1024xbf16, #tpu.memory_space<vmem>>, %arg5: memref<256x1024xbf16, #tpu.memory_space<vmem>>, %arg6: memref<512x256xbf16, #tpu.memory_space<vmem>>, %arg7: memref<1x128xf32, #tpu.memory_space<vmem>>, %arg8: memref<2x128xf32, #tpu.memory_space<vmem>>, %arg9: memref<32x1024xf32, #tpu.memory_space<vmem>>) attributes {dimension_semantics = [], scalar_prefetch = 0 : i64, scratch_operands = 1 : i64, tpu.core_type = #tpu.core_type<tc>} {
    %c0 = arith.constant 0 : index
    %c0_0 = arith.constant 0 : index
    %0 = vector.load %arg0[%c0, %c0_0] : memref<32x40xbf16, #tpu.memory_space<vmem>>, vector<32x40xbf16>
    %c0_1 = arith.constant 0 : index
    %c0_2 = arith.constant 0 : index
    %1 = vector.load %arg4[%c0_1, %c0_2] : memref<40x1024xbf16, #tpu.memory_space<vmem>>, vector<40x1024xbf16>
    %cst = arith.constant dense<0.000000e+00> : vector<32x1024xf32>
    %2 = tpu.matmul %0, %1, %cst {dimension_numbers = #tpu.dot_dimension_numbers<[1], [0], [0], [1], [0, 0, 1, 1], [], []>} : vector<32x40xbf16>, vector<40x1024xbf16>, vector<32x1024xf32> -> vector<32x1024xf32>
    %c0_3 = arith.constant 0 : index
    %c0_4 = arith.constant 0 : index
    %3 = vector.load %arg9[%c0_3, %c0_4] : memref<32x1024xf32, #tpu.memory_space<vmem>>, vector<32x1024xf32>
    tpu.vector_store %arg9[%c0_3, %c0_4], %2 {strides = array<i32>} : memref<32x1024xf32, #tpu.memory_space<vmem>>, vector<32x1024xf32>,
    %cst_5 = arith.constant 0.000000e+00 : f32
    %4 = vector.broadcast %cst_5 : f32 to vector<8x128xf32>
    %cst_6 = arith.constant -1.000000e+30 : f32
    %5 = vector.broadcast %cst_6 : f32 to vector<8x128xf32>
    %6 = tpu.concatenate %4, %4 in 1 : vector<8x128xf32>, vector<8x128xf32> -> vector<8x256xf32>
    %7 = arith.truncf %6 : vector<8x256xf32> to vector<8x256xbf16>
    %c0_7 = arith.constant 0 : index
    %c0_8 = arith.constant 0 : index
    %8 = vector.load %arg5[%c0_7, %c0_8] : memref<256x1024xbf16, #tpu.memory_space<vmem>>, vector<256x1024xbf16>
    %cst_9 = arith.constant dense<0.000000e+00> : vector<8x1024xf32>
    %9 = tpu.matmul %7, %8, %cst_9 {dimension_numbers = #tpu.dot_dimension_numbers<[1], [0], [0], [1], [0, 0, 1, 1], [], []>} : vector<8x256xbf16>, vector<256x1024xbf16>, vector<8x1024xf32> -> vector<8x1024xf32>
    %c0_10 = arith.constant 0 : index
    %c0_11 = arith.constant 0 : index
    %10 = vector.load %arg9[%c0_10, %c0_11] : memref<32x1024xf32, #tpu.memory_space<vmem>>, vector<8x512xf32>
    %11 = vector.extract_strided_slice %9 {offsets = [0, 0], sizes = [8, 512], strides = [1, 1]} : vector<8x1024xf32> to vector<8x512xf32>
    %12 = arith.addf %10, %11 : vector<8x512xf32>
    %c24 = arith.constant 24 : index
    %c512 = arith.constant 512 : index
    %13 = vector.load %arg9[%c24, %c512] : memref<32x1024xf32, #tpu.memory_space<vmem>>, vector<8x512xf32>
    %14 = vector.extract_strided_slice %9 {offsets = [0, 512], sizes = [8, 512], strides = [1, 1]} : vector<8x1024xf32> to vector<8x512xf32>
    %15 = arith.addf %13, %14 : vector<8x512xf32>
    %c0_12 = arith.constant 0 : index
    %c0_13 = arith.constant 0 : index
    %16 = vector.load %arg1[%c0_12, %c0_13] : memref<32x128xf32, #tpu.memory_space<vmem>>, vector<8x128xf32>
    %17 = vector.extract_strided_slice %12 {offsets = [0, 0], sizes = [8, 128], strides = [1, 1]} : vector<8x512xf32> to vector<8x128xf32>
    %cst_14 = arith.constant 5.000000e-01 : f32
    %18 = vector.broadcast %cst_14 : f32 to vector<8x128xf32>
    %19 = arith.mulf %18, %17 : vector<8x128xf32>
    %20 = math.tanh %19 : vector<8x128xf32>
    %cst_15 = arith.constant 5.000000e-01 : f32
    %21 = vector.broadcast %cst_15 : f32 to vector<8x128xf32>
    %22 = arith.mulf %21, %20 : vector<8x128xf32>
    %cst_16 = arith.constant 5.000000e-01 : f32
    %23 = vector.broadcast %cst_16 : f32 to vector<8x128xf32>
    %24 = arith.addf %22, %23 : vector<8x128xf32>
    %25 = vector.extract_strided_slice %12 {offsets = [0, 128], sizes = [8, 128], strides = [1, 1]} : vector<8x512xf32> to vector<8x128xf32>
    %cst_17 = arith.constant 5.000000e-01 : f32
    %26 = vector.broadcast %cst_17 : f32 to vector<8x128xf32>
    %27 = arith.mulf %26, %25 : vector<8x128xf32>
    %28 = math.tanh %27 : vector<8x128xf32>
    %cst_18 = arith.constant 5.000000e-01 : f32
    %29 = vector.broadcast %cst_18 : f32 to vector<8x128xf32>
    %30 = arith.mulf %29, %28 : vector<8x128xf32>
    %cst_19 = arith.constant 5.000000e-01 : f32
    %31 = vector.broadcast %cst_19 : f32 to vector<8x128xf32>
    %32 = arith.addf %30, %31 : vector<8x128xf32>
    %33 = vector.extract_strided_slice %12 {offsets = [0, 256], sizes = [8, 128], strides = [1, 1]} : vector<8x512xf32> to vector<8x128xf32>
    %34 = math.tanh %33 : vector<8x128xf32>
    %35 = vector.extract_strided_slice %12 {offsets = [0, 384], sizes = [8, 128], strides = [1, 1]} : vector<8x512xf32> to vector<8x128xf32>
    %cst_20 = arith.constant 5.000000e-01 : f32
    %36 = vector.broadcast %cst_20 : f32 to vector<8x128xf32>
    %37 = arith.mulf %36, %35 : vector<8x128xf32>
    %38 = math.tanh %37 : vector<8x128xf32>
    %cst_21 = arith.constant 5.000000e-01 : f32
    %39 = vector.broadcast %cst_21 : f32 to vector<8x128xf32>
    %40 = arith.mulf %39, %38 : vector<8x128xf32>
    %cst_22 = arith.constant 5.000000e-01 : f32
    %41 = vector.broadcast %cst_22 : f32 to vector<8x128xf32>
    %42 = arith.addf %40, %41 : vector<8x128xf32>
    %43 = arith.mulf %32, %4 : vector<8x128xf32>
    %44 = arith.mulf %24, %34 : vector<8x128xf32>
    %45 = arith.addf %43, %44 : vector<8x128xf32>
    %46 = arith.mulf %45, %16 : vector<8x128xf32>
    %47 = math.tanh %46 : vector<8x128xf32>
    %48 = arith.mulf %42, %47 : vector<8x128xf32>
    %c24_23 = arith.constant 24 : index
    %c0_24 = arith.constant 0 : index
    %49 = vector.load %arg1[%c24_23, %c0_24] : memref<32x128xf32, #tpu.memory_space<vmem>>, vector<8x128xf32>
    %50 = vector.extract_strided_slice %15 {offsets = [0, 0], sizes = [8, 128], strides = [1, 1]} : vector<8x512xf32> to vector<8x128xf32>
    %cst_25 = arith.constant 5.000000e-01 : f32
    %51 = vector.broadcast %cst_25 : f32 to vector<8x128xf32>
    %52 = arith.mulf %51, %50 : vector<8x128xf32>
    %53 = math.tanh %52 : vector<8x128xf32>
    %cst_26 = arith.constant 5.000000e-01 : f32
    %54 = vector.broadcast %cst_26 : f32 to vector<8x128xf32>
    %55 = arith.mulf %54, %53 : vector<8x128xf32>
    %cst_27 = arith.constant 5.000000e-01 : f32
    %56 = vector.broadcast %cst_27 : f32 to vector<8x128xf32>
    %57 = arith.addf %55, %56 : vector<8x128xf32>
    %58 = vector.extract_strided_slice %15 {offsets = [0, 128], sizes = [8, 128], strides = [1, 1]} : vector<8x512xf32> to vector<8x128xf32>
    %cst_28 = arith.constant 5.000000e-01 : f32
    %59 = vector.broadcast %cst_28 : f32 to vector<8x128xf32>
    %60 = arith.mulf %59, %58 : vector<8x128xf32>
    %61 = math.tanh %60 : vector<8x128xf32>
    %cst_29 = arith.constant 5.000000e-01 : f32
    %62 = vector.broadcast %cst_29 : f32 to vector<8x128xf32>
    %63 = arith.mulf %62, %61 : vector<8x128xf32>
    %cst_30 = arith.constant 5.000000e-01 : f32
    %64 = vector.broadcast %cst_30 : f32 to vector<8x128xf32>
    %65 = arith.addf %63, %64 : vector<8x128xf32>
    %66 = vector.extract_strided_slice %15 {offsets = [0, 256], sizes = [8, 128], strides = [1, 1]} : vector<8x512xf32> to vector<8x128xf32>
    %67 = math.tanh %66 : vector<8x128xf32>
    %68 = vector.extract_strided_slice %15 {offsets = [0, 384], sizes = [8, 128], strides = [1, 1]} : vector<8x512xf32> to vector<8x128xf32>
    %cst_31 = arith.constant 5.000000e-01 : f32
    %69 = vector.broadcast %cst_31 : f32 to vector<8x128xf32>
    %70 = arith.mulf %69, %68 : vector<8x128xf32>
    %71 = math.tanh %70 : vector<8x128xf32>
    %cst_32 = arith.constant 5.000000e-01 : f32
    %72 = vector.broadcast %cst_32 : f32 to vector<8x128xf32>
    %73 = arith.mulf %72, %71 : vector<8x128xf32>
    %cst_33 = arith.constant 5.000000e-01 : f32
    %74 = vector.broadcast %cst_33 : f32 to vector<8x128xf32>
    %75 = arith.addf %73, %74 : vector<8x128xf32>
    %76 = arith.mulf %65, %4 : vector<8x128xf32>
    %77 = arith.mulf %57, %67 : vector<8x128xf32>
    %78 = arith.addf %76, %77 : vector<8x128xf32>
    %79 = arith.mulf %78, %49 : vector<8x128xf32>
    %80 = math.tanh %79 : vector<8x128xf32>
    %81 = arith.mulf %75, %80 : vector<8x128xf32>
    %82 = arith.addf %4, %48 : vector<8x128xf32>
    %83 = arith.addf %4, %81 : vector<8x128xf32>
    %c0_34 = arith.constant 0 : index
    %c0_35 = arith.constant 0 : index
    %84 = vector.load %arg2[%c0_34, %c0_35] : memref<32x128xf32, #tpu.memory_space<vmem>>, vector<8x128xf32>
    %85 = arith.addf %48, %84 : vector<8x128xf32>
    %86 = arith.maximumf %5, %85 : vector<8x128xf32>
    %c24_36 = arith.constant 24 : index
    %c0_37 = arith.constant 0 : index
    %87 = vector.load %arg2[%c24_36, %c0_37] : memref<32x128xf32, #tpu.memory_space<vmem>>, vector<8x128xf32>
    %88 = arith.addf %81, %87 : vector<8x128xf32>
    %89 = arith.maximumf %5, %88 : vector<8x128xf32>
    %90 = tpu.concatenate %48, %81 in 1 : vector<8x128xf32>, vector<8x128xf32> -> vector<8x256xf32>
    %91 = arith.truncf %90 : vector<8x256xf32> to vector<8x256xbf16>
    %c0_38 = arith.constant 0 : index
    %c0_39 = arith.constant 0 : index
    %92 = vector.load %arg5[%c0_38, %c0_39] : memref<256x1024xbf16, #tpu.memory_space<vmem>>, vector<256x1024xbf16>
    %cst_40 = arith.constant dense<0.000000e+00> : vector<8x1024xf32>
    %93 = tpu.matmul %91, %92, %cst_40 {dimension_numbers = #tpu.dot_dimension_numbers<[1], [0], [0], [1], [0, 0, 1, 1], [], []>} : vector<8x256xbf16>, vector<256x1024xbf16>, vector<8x1024xf32> -> vector<8x1024xf32>
    %c8 = arith.constant 8 : index
    %c0_41 = arith.constant 0 : index
    %94 = vector.load %arg9[%c8, %c0_41] : memref<32x1024xf32, #tpu.memory_space<vmem>>, vector<8x512xf32>
    %95 = vector.extract_strided_slice %93 {offsets = [0, 0], sizes = [8, 512], strides = [1, 1]} : vector<8x1024xf32> to vector<8x512xf32>
    %96 = arith.addf %94, %95 : vector<8x512xf32>
    %c16 = arith.constant 16 : index
    %c512_42 = arith.constant 512 : index
    %97 = vector.load %arg9[%c16, %c512_42] : memref<32x1024xf32, #tpu.memory_space<vmem>>, vector<8x512xf32>
    %98 = vector.extract_strided_slice %93 {offsets = [0, 512], sizes = [8, 512], strides = [1, 1]} : vector<8x1024xf32> to vector<8x512xf32>
    %99 = arith.addf %97, %98 : vector<8x512xf32>
    %c8_43 = arith.constant 8 : index
    %c0_44 = arith.constant 0 : index
    %100 = vector.load %arg1[%c8_43, %c0_44] : memref<32x128xf32, #tpu.memory_space<vmem>>, vector<8x128xf32>
    %101 = vector.extract_strided_slice %96 {offsets = [0, 0], sizes = [8, 128], strides = [1, 1]} : vector<8x512xf32> to vector<8x128xf32>
    %cst_45 = arith.constant 5.000000e-01 : f32
    %102 = vector.broadcast %cst_45 : f32 to vector<8x128xf32>
    %103 = arith.mulf %102, %101 : vector<8x128xf32>
    %104 = math.tanh %103 : vector<8x128xf32>
    %cst_46 = arith.constant 5.000000e-01 : f32
    %105 = vector.broadcast %cst_46 : f32 to vector<8x128xf32>
    %106 = arith.mulf %105, %104 : vector<8x128xf32>
    %cst_47 = arith.constant 5.000000e-01 : f32
    %107 = vector.broadcast %cst_47 : f32 to vector<8x128xf32>
    %108 = arith.addf %106, %107 : vector<8x128xf32>
    %109 = vector.extract_strided_slice %96 {offsets = [0, 128], sizes = [8, 128], strides = [1, 1]} : vector<8x512xf32> to vector<8x128xf32>
    %cst_48 = arith.constant 5.000000e-01 : f32
    %110 = vector.broadcast %cst_48 : f32 to vector<8x128xf32>
    %111 = arith.mulf %110, %109 : vector<8x128xf32>
    %112 = math.tanh %111 : vector<8x128xf32>
    %cst_49 = arith.constant 5.000000e-01 : f32
    %113 = vector.broadcast %cst_49 : f32 to vector<8x128xf32>
    %114 = arith.mulf %113, %112 : vector<8x128xf32>
    %cst_50 = arith.constant 5.000000e-01 : f32
    %115 = vector.broadcast %cst_50 : f32 to vector<8x128xf32>
    %116 = arith.addf %114, %115 : vector<8x128xf32>
    %117 = vector.extract_strided_slice %96 {offsets = [0, 256], sizes = [8, 128], strides = [1, 1]} : vector<8x512xf32> to vector<8x128xf32>
    %118 = math.tanh %117 : vector<8x128xf32>
    %119 = vector.extract_strided_slice %96 {offsets = [0, 384], sizes = [8, 128], strides = [1, 1]} : vector<8x512xf32> to vector<8x128xf32>
    %cst_51 = arith.constant 5.000000e-01 : f32
    %120 = vector.broadcast %cst_51 : f32 to vector<8x128xf32>
    %121 = arith.mulf %120, %119 : vector<8x128xf32>
    %122 = math.tanh %121 : vector<8x128xf32>
    %cst_52 = arith.constant 5.000000e-01 : f32
    %123 = vector.broadcast %cst_52 : f32 to vector<8x128xf32>
    %124 = arith.mulf %123, %122 : vector<8x128xf32>
    %cst_53 = arith.constant 5.000000e-01 : f32
    %125 = vector.broadcast %cst_53 : f32 to vector<8x128xf32>
    %126 = arith.addf %124, %125 : vector<8x128xf32>
    %127 = arith.mulf %116, %46 : vector<8x128xf32>
    %128 = arith.mulf %108, %118 : vector<8x128xf32>
    %129 = arith.addf %127, %128 : vector<8x128xf32>
    %130 = arith.mulf %129, %100 : vector<8x128xf32>
    %131 = math.tanh %130 : vector<8x128xf32>
    %132 = arith.mulf %126, %131 : vector<8x128xf32>
    %c16_54 = arith.constant 16 : index
    %c0_55 = arith.constant 0 : index
    %133 = vector.load %arg1[%c16_54, %c0_55] : memref<32x128xf32, #tpu.memory_space<vmem>>, vector<8x128xf32>
    %134 = vector.extract_strided_slice %99 {offsets = [0, 0], sizes = [8, 128], strides = [1, 1]} : vector<8x512xf32> to vector<8x128xf32>
    %cst_56 = arith.constant 5.000000e-01 : f32
    %135 = vector.broadcast %cst_56 : f32 to vector<8x128xf32>
    %136 = arith.mulf %135, %134 : vector<8x128xf32>
    %137 = math.tanh %136 : vector<8x128xf32>
    %cst_57 = arith.constant 5.000000e-01 : f32
    %138 = vector.broadcast %cst_57 : f32 to vector<8x128xf32>
    %139 = arith.mulf %138, %137 : vector<8x128xf32>
    %cst_58 = arith.constant 5.000000e-01 : f32
    %140 = vector.broadcast %cst_58 : f32 to vector<8x128xf32>
    %141 = arith.addf %139, %140 : vector<8x128xf32>
    %142 = vector.extract_strided_slice %99 {offsets = [0, 128], sizes = [8, 128], strides = [1, 1]} : vector<8x512xf32> to vector<8x128xf32>
    %cst_59 = arith.constant 5.000000e-01 : f32
    %143 = vector.broadcast %cst_59 : f32 to vector<8x128xf32>
    %144 = arith.mulf %143, %142 : vector<8x128xf32>
    %145 = math.tanh %144 : vector<8x128xf32>
    %cst_60 = arith.constant 5.000000e-01 : f32
    %146 = vector.broadcast %cst_60 : f32 to vector<8x128xf32>
    %147 = arith.mulf %146, %145 : vector<8x128xf32>
    %cst_61 = arith.constant 5.000000e-01 : f32
    %148 = vector.broadcast %cst_61 : f32 to vector<8x128xf32>
    %149 = arith.addf %147, %148 : vector<8x128xf32>
    %150 = vector.extract_strided_slice %99 {offsets = [0, 256], sizes = [8, 128], strides = [1, 1]} : vector<8x512xf32> to vector<8x128xf32>
    %151 = math.tanh %150 : vector<8x128xf32>
    %152 = vector.extract_strided_slice %99 {offsets = [0, 384], sizes = [8, 128], strides = [1, 1]} : vector<8x512xf32> to vector<8x128xf32>
    %cst_62 = arith.constant 5.000000e-01 : f32
    %153 = vector.broadcast %cst_62 : f32 to vector<8x128xf32>
    %154 = arith.mulf %153, %152 : vector<8x128xf32>
    %155 = math.tanh %154 : vector<8x128xf32>
    %cst_63 = arith.constant 5.000000e-01 : f32
    %156 = vector.broadcast %cst_63 : f32 to vector<8x128xf32>
    %157 = arith.mulf %156, %155 : vector<8x128xf32>
    %cst_64 = arith.constant 5.000000e-01 : f32
    %158 = vector.broadcast %cst_64 : f32 to vector<8x128xf32>
    %159 = arith.addf %157, %158 : vector<8x128xf32>
    %160 = arith.mulf %149, %79 : vector<8x128xf32>
    %161 = arith.mulf %141, %151 : vector<8x128xf32>
    %162 = arith.addf %160, %161 : vector<8x128xf32>
    %163 = arith.mulf %162, %133 : vector<8x128xf32>
    %164 = math.tanh %163 : vector<8x128xf32>
    %165 = arith.mulf %159, %164 : vector<8x128xf32>
    %166 = arith.addf %82, %132 : vector<8x128xf32>
    %167 = arith.addf %83, %165 : vector<8x128xf32>
    %c8_65 = arith.constant 8 : index
    %c0_66 = arith.constant 0 : index
    %168 = vector.load %arg2[%c8_65, %c0_66] : memref<32x128xf32, #tpu.memory_space<vmem>>, vector<8x128xf32>
    %169 = arith.addf %132, %168 : vector<8x128xf32>
    %170 = arith.maximumf %86, %169 : vector<8x128xf32>
    %c16_67 = arith.constant 16 : index
    %c0_68 = arith.constant 0 : index
    %171 = vector.load %arg2[%c16_67, %c0_68] : memref<32x128xf32, #tpu.memory_space<vmem>>, vector<8x128xf32>
    %172 = arith.addf %165, %171 : vector<8x128xf32>
    %173 = arith.maximumf %89, %172 : vector<8x128xf32>
    %174 = tpu.concatenate %132, %165 in 1 : vector<8x128xf32>, vector<8x128xf32> -> vector<8x256xf32>
    %175 = arith.truncf %174 : vector<8x256xf32> to vector<8x256xbf16>
    %c0_69 = arith.constant 0 : index
    %c0_70 = arith.constant 0 : index
    %176 = vector.load %arg5[%c0_69, %c0_70] : memref<256x1024xbf16, #tpu.memory_space<vmem>>, vector<256x1024xbf16>
    %cst_71 = arith.constant dense<0.000000e+00> : vector<8x1024xf32>
    %177 = tpu.matmul %175, %176, %cst_71 {dimension_numbers = #tpu.dot_dimension_numbers<[1], [0], [0], [1], [0, 0, 1, 1], [], []>} : vector<8x256xbf16>, vector<256x1024xbf16>, vector<8x1024xf32> -> vector<8x1024xf32>
    %c16_72 = arith.constant 16 : index
    %c0_73 = arith.constant 0 : index
    %178 = vector.load %arg9[%c16_72, %c0_73] : memref<32x1024xf32, #tpu.memory_space<vmem>>, vector<8x512xf32>
    %179 = vector.extract_strided_slice %177 {offsets = [0, 0], sizes = [8, 512], strides = [1, 1]} : vector<8x1024xf32> to vector<8x512xf32>
    %180 = arith.addf %178, %179 : vector<8x512xf32>
    %c8_74 = arith.constant 8 : index
    %c512_75 = arith.constant 512 : index
    %181 = vector.load %arg9[%c8_74, %c512_75] : memref<32x1024xf32, #tpu.memory_space<vmem>>, vector<8x512xf32>
    %182 = vector.extract_strided_slice %177 {offsets = [0, 512], sizes = [8, 512], strides = [1, 1]} : vector<8x1024xf32> to vector<8x512xf32>
    %183 = arith.addf %181, %182 : vector<8x512xf32>
    %c16_76 = arith.constant 16 : index
    %c0_77 = arith.constant 0 : index
    %184 = vector.load %arg1[%c16_76, %c0_77] : memref<32x128xf32, #tpu.memory_space<vmem>>, vector<8x128xf32>
    %185 = vector.extract_strided_slice %180 {offsets = [0, 0], sizes = [8, 128], strides = [1, 1]} : vector<8x512xf32> to vector<8x128xf32>
    %cst_78 = arith.constant 5.000000e-01 : f32
    %186 = vector.broadcast %cst_78 : f32 to vector<8x128xf32>
    %187 = arith.mulf %186, %185 : vector<8x128xf32>
    %188 = math.tanh %187 : vector<8x128xf32>
    %cst_79 = arith.constant 5.000000e-01 : f32
    %189 = vector.broadcast %cst_79 : f32 to vector<8x128xf32>
    %190 = arith.mulf %189, %188 : vector<8x128xf32>
    %cst_80 = arith.constant 5.000000e-01 : f32
    %191 = vector.broadcast %cst_80 : f32 to vector<8x128xf32>
    %192 = arith.addf %190, %191 : vector<8x128xf32>
    %193 = vector.extract_strided_slice %180 {offsets = [0, 128], sizes = [8, 128], strides = [1, 1]} : vector<8x512xf32> to vector<8x128xf32>
    %cst_81 = arith.constant 5.000000e-01 : f32
    %194 = vector.broadcast %cst_81 : f32 to vector<8x128xf32>
    %195 = arith.mulf %194, %193 : vector<8x128xf32>
    %196 = math.tanh %195 : vector<8x128xf32>
    %cst_82 = arith.constant 5.000000e-01 : f32
    %197 = vector.broadcast %cst_82 : f32 to vector<8x128xf32>
    %198 = arith.mulf %197, %196 : vector<8x128xf32>
    %cst_83 = arith.constant 5.000000e-01 : f32
    %199 = vector.broadcast %cst_83 : f32 to vector<8x128xf32>
    %200 = arith.addf %198, %199 : vector<8x128xf32>
    %201 = vector.extract_strided_slice %180 {offsets = [0, 256], sizes = [8, 128], strides = [1, 1]} : vector<8x512xf32> to vector<8x128xf32>
    %202 = math.tanh %201 : vector<8x128xf32>
    %203 = vector.extract_strided_slice %180 {offsets = [0, 384], sizes = [8, 128], strides = [1, 1]} : vector<8x512xf32> to vector<8x128xf32>
    %cst_84 = arith.constant 5.000000e-01 : f32
    %204 = vector.broadcast %cst_84 : f32 to vector<8x128xf32>
    %205 = arith.mulf %204, %203 : vector<8x128xf32>
    %206 = math.tanh %205 : vector<8x128xf32>
    %cst_85 = arith.constant 5.000000e-01 : f32
    %207 = vector.broadcast %cst_85 : f32 to vector<8x128xf32>
    %208 = arith.mulf %207, %206 : vector<8x128xf32>
    %cst_86 = arith.constant 5.000000e-01 : f32
    %209 = vector.broadcast %cst_86 : f32 to vector<8x128xf32>
    %210 = arith.addf %208, %209 : vector<8x128xf32>
    %211 = arith.mulf %200, %130 : vector<8x128xf32>
    %212 = arith.mulf %192, %202 : vector<8x128xf32>
    %213 = arith.addf %211, %212 : vector<8x128xf32>
    %214 = arith.mulf %213, %184 : vector<8x128xf32>
    %215 = math.tanh %214 : vector<8x128xf32>
    %216 = arith.mulf %210, %215 : vector<8x128xf32>
    %c8_87 = arith.constant 8 : index
    %c0_88 = arith.constant 0 : index
    %217 = vector.load %arg1[%c8_87, %c0_88] : memref<32x128xf32, #tpu.memory_space<vmem>>, vector<8x128xf32>
    %218 = vector.extract_strided_slice %183 {offsets = [0, 0], sizes = [8, 128], strides = [1, 1]} : vector<8x512xf32> to vector<8x128xf32>
    %cst_89 = arith.constant 5.000000e-01 : f32
    %219 = vector.broadcast %cst_89 : f32 to vector<8x128xf32>
    %220 = arith.mulf %219, %218 : vector<8x128xf32>
    %221 = math.tanh %220 : vector<8x128xf32>
    %cst_90 = arith.constant 5.000000e-01 : f32
    %222 = vector.broadcast %cst_90 : f32 to vector<8x128xf32>
    %223 = arith.mulf %222, %221 : vector<8x128xf32>
    %cst_91 = arith.constant 5.000000e-01 : f32
    %224 = vector.broadcast %cst_91 : f32 to vector<8x128xf32>
    %225 = arith.addf %223, %224 : vector<8x128xf32>
    %226 = vector.extract_strided_slice %183 {offsets = [0, 128], sizes = [8, 128], strides = [1, 1]} : vector<8x512xf32> to vector<8x128xf32>
    %cst_92 = arith.constant 5.000000e-01 : f32
    %227 = vector.broadcast %cst_92 : f32 to vector<8x128xf32>
    %228 = arith.mulf %227, %226 : vector<8x128xf32>
    %229 = math.tanh %228 : vector<8x128xf32>
    %cst_93 = arith.constant 5.000000e-01 : f32
    %230 = vector.broadcast %cst_93 : f32 to vector<8x128xf32>
    %231 = arith.mulf %230, %229 : vector<8x128xf32>
    %cst_94 = arith.constant 5.000000e-01 : f32
    %232 = vector.broadcast %cst_94 : f32 to vector<8x128xf32>
    %233 = arith.addf %231, %232 : vector<8x128xf32>
    %234 = vector.extract_strided_slice %183 {offsets = [0, 256], sizes = [8, 128], strides = [1, 1]} : vector<8x512xf32> to vector<8x128xf32>
    %235 = math.tanh %234 : vector<8x128xf32>
    %236 = vector.extract_strided_slice %183 {offsets = [0, 384], sizes = [8, 128], strides = [1, 1]} : vector<8x512xf32> to vector<8x128xf32>
    %cst_95 = arith.constant 5.000000e-01 : f32
    %237 = vector.broadcast %cst_95 : f32 to vector<8x128xf32>
    %238 = arith.mulf %237, %236 : vector<8x128xf32>
    %239 = math.tanh %238 : vector<8x128xf32>
    %cst_96 = arith.constant 5.000000e-01 : f32
    %240 = vector.broadcast %cst_96 : f32 to vector<8x128xf32>
    %241 = arith.mulf %240, %239 : vector<8x128xf32>
    %cst_97 = arith.constant 5.000000e-01 : f32
    %242 = vector.broadcast %cst_97 : f32 to vector<8x128xf32>
    %243 = arith.addf %241, %242 : vector<8x128xf32>
    %244 = arith.mulf %233, %163 : vector<8x128xf32>
    %245 = arith.mulf %225, %235 : vector<8x128xf32>
    %246 = arith.addf %244, %245 : vector<8x128xf32>
    %247 = arith.mulf %246, %217 : vector<8x128xf32>
    %248 = math.tanh %247 : vector<8x128xf32>
    %249 = arith.mulf %243, %248 : vector<8x128xf32>
    %250 = arith.addf %166, %216 : vector<8x128xf32>
    %251 = arith.addf %167, %249 : vector<8x128xf32>
    %c16_98 = arith.constant 16 : index
    %c0_99 = arith.constant 0 : index
    %252 = vector.load %arg2[%c16_98, %c0_99] : memref<32x128xf32, #tpu.memory_space<vmem>>, vector<8x128xf32>
    %253 = arith.addf %216, %252 : vector<8x128xf32>
    %254 = arith.maximumf %170, %253 : vector<8x128xf32>
    %c8_100 = arith.constant 8 : index
    %c0_101 = arith.constant 0 : index
    %255 = vector.load %arg2[%c8_100, %c0_101] : memref<32x128xf32, #tpu.memory_space<vmem>>, vector<8x128xf32>
    %256 = arith.addf %249, %255 : vector<8x128xf32>
    %257 = arith.maximumf %173, %256 : vector<8x128xf32>
    %258 = tpu.concatenate %216, %249 in 1 : vector<8x128xf32>, vector<8x128xf32> -> vector<8x256xf32>
    %259 = arith.truncf %258 : vector<8x256xf32> to vector<8x256xbf16>
    %c0_102 = arith.constant 0 : index
    %c0_103 = arith.constant 0 : index
    %260 = vector.load %arg5[%c0_102, %c0_103] : memref<256x1024xbf16, #tpu.memory_space<vmem>>, vector<256x1024xbf16>
    %cst_104 = arith.constant dense<0.000000e+00> : vector<8x1024xf32>
    %261 = tpu.matmul %259, %260, %cst_104 {dimension_numbers = #tpu.dot_dimension_numbers<[1], [0], [0], [1], [0, 0, 1, 1], [], []>} : vector<8x256xbf16>, vector<256x1024xbf16>, vector<8x1024xf32> -> vector<8x1024xf32>
    %c24_105 = arith.constant 24 : index
    %c0_106 = arith.constant 0 : index
    %262 = vector.load %arg9[%c24_105, %c0_106] : memref<32x1024xf32, #tpu.memory_space<vmem>>, vector<8x512xf32>
    %263 = vector.extract_strided_slice %261 {offsets = [0, 0], sizes = [8, 512], strides = [1, 1]} : vector<8x1024xf32> to vector<8x512xf32>
    %264 = arith.addf %262, %263 : vector<8x512xf32>
    %c0_107 = arith.constant 0 : index
    %c512_108 = arith.constant 512 : index
    %265 = vector.load %arg9[%c0_107, %c512_108] : memref<32x1024xf32, #tpu.memory_space<vmem>>, vector<8x512xf32>
    %266 = vector.extract_strided_slice %261 {offsets = [0, 512], sizes = [8, 512], strides = [1, 1]} : vector<8x1024xf32> to vector<8x512xf32>
    %267 = arith.addf %265, %266 : vector<8x512xf32>
    %c24_109 = arith.constant 24 : index
    %c0_110 = arith.constant 0 : index
    %268 = vector.load %arg1[%c24_109, %c0_110] : memref<32x128xf32, #tpu.memory_space<vmem>>, vector<8x128xf32>
    %269 = vector.extract_strided_slice %264 {offsets = [0, 0], sizes = [8, 128], strides = [1, 1]} : vector<8x512xf32> to vector<8x128xf32>
    %cst_111 = arith.constant 5.000000e-01 : f32
    %270 = vector.broadcast %cst_111 : f32 to vector<8x128xf32>
    %271 = arith.mulf %270, %269 : vector<8x128xf32>
    %272 = math.tanh %271 : vector<8x128xf32>
    %cst_112 = arith.constant 5.000000e-01 : f32
    %273 = vector.broadcast %cst_112 : f32 to vector<8x128xf32>
    %274 = arith.mulf %273, %272 : vector<8x128xf32>
    %cst_113 = arith.constant 5.000000e-01 : f32
    %275 = vector.broadcast %cst_113 : f32 to vector<8x128xf32>
    %276 = arith.addf %274, %275 : vector<8x128xf32>
    %277 = vector.extract_strided_slice %264 {offsets = [0, 128], sizes = [8, 128], strides = [1, 1]} : vector<8x512xf32> to vector<8x128xf32>
    %cst_114 = arith.constant 5.000000e-01 : f32
    %278 = vector.broadcast %cst_114 : f32 to vector<8x128xf32>
    %279 = arith.mulf %278, %277 : vector<8x128xf32>
    %280 = math.tanh %279 : vector<8x128xf32>
    %cst_115 = arith.constant 5.000000e-01 : f32
    %281 = vector.broadcast %cst_115 : f32 to vector<8x128xf32>
    %282 = arith.mulf %281, %280 : vector<8x128xf32>
    %cst_116 = arith.constant 5.000000e-01 : f32
    %283 = vector.broadcast %cst_116 : f32 to vector<8x128xf32>
    %284 = arith.addf %282, %283 : vector<8x128xf32>
    %285 = vector.extract_strided_slice %264 {offsets = [0, 256], sizes = [8, 128], strides = [1, 1]} : vector<8x512xf32> to vector<8x128xf32>
    %286 = math.tanh %285 : vector<8x128xf32>
    %287 = vector.extract_strided_slice %264 {offsets = [0, 384], sizes = [8, 128], strides = [1, 1]} : vector<8x512xf32> to vector<8x128xf32>
    %cst_117 = arith.constant 5.000000e-01 : f32
    %288 = vector.broadcast %cst_117 : f32 to vector<8x128xf32>
    %289 = arith.mulf %288, %287 : vector<8x128xf32>
    %290 = math.tanh %289 : vector<8x128xf32>
    %cst_118 = arith.constant 5.000000e-01 : f32
    %291 = vector.broadcast %cst_118 : f32 to vector<8x128xf32>
    %292 = arith.mulf %291, %290 : vector<8x128xf32>
    %cst_119 = arith.constant 5.000000e-01 : f32
    %293 = vector.broadcast %cst_119 : f32 to vector<8x128xf32>
    %294 = arith.addf %292, %293 : vector<8x128xf32>
    %295 = arith.mulf %284, %214 : vector<8x128xf32>
    %296 = arith.mulf %276, %286 : vector<8x128xf32>
    %297 = arith.addf %295, %296 : vector<8x128xf32>
    %298 = arith.mulf %297, %268 : vector<8x128xf32>
    %299 = math.tanh %298 : vector<8x128xf32>
    %300 = arith.mulf %294, %299 : vector<8x128xf32>
    %c0_120 = arith.constant 0 : index
    %c0_121 = arith.constant 0 : index
    %301 = vector.load %arg1[%c0_120, %c0_121] : memref<32x128xf32, #tpu.memory_space<vmem>>, vector<8x128xf32>
    %302 = vector.extract_strided_slice %267 {offsets = [0, 0], sizes = [8, 128], strides = [1, 1]} : vector<8x512xf32> to vector<8x128xf32>
    %cst_122 = arith.constant 5.000000e-01 : f32
    %303 = vector.broadcast %cst_122 : f32 to vector<8x128xf32>
    %304 = arith.mulf %303, %302 : vector<8x128xf32>
    %305 = math.tanh %304 : vector<8x128xf32>
    %cst_123 = arith.constant 5.000000e-01 : f32
    %306 = vector.broadcast %cst_123 : f32 to vector<8x128xf32>
    %307 = arith.mulf %306, %305 : vector<8x128xf32>
    %cst_124 = arith.constant 5.000000e-01 : f32
    %308 = vector.broadcast %cst_124 : f32 to vector<8x128xf32>
    %309 = arith.addf %307, %308 : vector<8x128xf32>
    %310 = vector.extract_strided_slice %267 {offsets = [0, 128], sizes = [8, 128], strides = [1, 1]} : vector<8x512xf32> to vector<8x128xf32>
    %cst_125 = arith.constant 5.000000e-01 : f32
    %311 = vector.broadcast %cst_125 : f32 to vector<8x128xf32>
    %312 = arith.mulf %311, %310 : vector<8x128xf32>
    %313 = math.tanh %312 : vector<8x128xf32>
    %cst_126 = arith.constant 5.000000e-01 : f32
    %314 = vector.broadcast %cst_126 : f32 to vector<8x128xf32>
    %315 = arith.mulf %314, %313 : vector<8x128xf32>
    %cst_127 = arith.constant 5.000000e-01 : f32
    %316 = vector.broadcast %cst_127 : f32 to vector<8x128xf32>
    %317 = arith.addf %315, %316 : vector<8x128xf32>
    %318 = vector.extract_strided_slice %267 {offsets = [0, 256], sizes = [8, 128], strides = [1, 1]} : vector<8x512xf32> to vector<8x128xf32>
    %319 = math.tanh %318 : vector<8x128xf32>
    %320 = vector.extract_strided_slice %267 {offsets = [0, 384], sizes = [8, 128], strides = [1, 1]} : vector<8x512xf32> to vector<8x128xf32>
    %cst_128 = arith.constant 5.000000e-01 : f32
    %321 = vector.broadcast %cst_128 : f32 to vector<8x128xf32>
    %322 = arith.mulf %321, %320 : vector<8x128xf32>
    %323 = math.tanh %322 : vector<8x128xf32>
    %cst_129 = arith.constant 5.000000e-01 : f32
    %324 = vector.broadcast %cst_129 : f32 to vector<8x128xf32>
    %325 = arith.mulf %324, %323 : vector<8x128xf32>
    %cst_130 = arith.constant 5.000000e-01 : f32
    %326 = vector.broadcast %cst_130 : f32 to vector<8x128xf32>
    %327 = arith.addf %325, %326 : vector<8x128xf32>
    %328 = arith.mulf %317, %247 : vector<8x128xf32>
    %329 = arith.mulf %309, %319 : vector<8x128xf32>
    %330 = arith.addf %328, %329 : vector<8x128xf32>
    %331 = arith.mulf %330, %301 : vector<8x128xf32>
    %332 = math.tanh %331 : vector<8x128xf32>
    %333 = arith.mulf %327, %332 : vector<8x128xf32>
    %334 = arith.addf %250, %300 : vector<8x128xf32>
    %335 = arith.addf %251, %333 : vector<8x128xf32>
    %c24_131 = arith.constant 24 : index
    %c0_132 = arith.constant 0 : index
    %336 = vector.load %arg2[%c24_131, %c0_132] : memref<32x128xf32, #tpu.memory_space<vmem>>, vector<8x128xf32>
    %337 = arith.addf %300, %336 : vector<8x128xf32>
    %338 = arith.maximumf %254, %337 : vector<8x128xf32>
    %c0_133 = arith.constant 0 : index
    %c0_134 = arith.constant 0 : index
    %339 = vector.load %arg2[%c0_133, %c0_134] : memref<32x128xf32, #tpu.memory_space<vmem>>, vector<8x128xf32>
    %340 = arith.addf %333, %339 : vector<8x128xf32>
    %341 = arith.maximumf %257, %340 : vector<8x128xf32>
    %c0_135 = arith.constant 0 : index
    %c0_136 = arith.constant 0 : index
    %342 = vector.load %arg3[%c0_135, %c0_136] : memref<8x128xf32, #tpu.memory_space<vmem>>, vector<8x128xf32>
    %343 = arith.mulf %334, %342 : vector<8x128xf32>
    %344 = arith.mulf %335, %342 : vector<8x128xf32>
    %345 = tpu.concatenate %343, %344, %338, %341 in 1 : vector<8x128xf32>, vector<8x128xf32>, vector<8x128xf32>, vector<8x128xf32> -> vector<8x512xf32>
    %346 = arith.truncf %345 : vector<8x512xf32> to vector<8x512xbf16>
    %c0_137 = arith.constant 0 : index
    %c0_138 = arith.constant 0 : index
    %347 = vector.load %arg6[%c0_137, %c0_138] : memref<512x256xbf16, #tpu.memory_space<vmem>>, vector<512x256xbf16>
    %cst_139 = arith.constant dense<0.000000e+00> : vector<8x256xf32>
    %348 = tpu.matmul %346, %347, %cst_139 {dimension_numbers = #tpu.dot_dimension_numbers<[1], [0], [0], [1], [0, 0, 1, 1], [], []>} : vector<8x512xbf16>, vector<512x256xbf16>, vector<8x256xf32> -> vector<8x256xf32>
    %349 = vector.extract_strided_slice %348 {offsets = [0, 0], sizes = [2, 128], strides = [1, 1]} : vector<8x256xf32> to vector<2x128xf32>
    %350 = vector.extract_strided_slice %348 {offsets = [2, 128], sizes = [2, 128], strides = [1, 1]} : vector<8x256xf32> to vector<2x128xf32>
    %351 = arith.addf %349, %350 : vector<2x128xf32>
    %c0_140 = arith.constant 0 : index
    %c0_141 = arith.constant 0 : index
    %352 = vector.load %arg7[%c0_140, %c0_141] : memref<1x128xf32, #tpu.memory_space<vmem>>, vector<1x128xf32>
    %353 = vector.broadcast %352 : vector<1x128xf32> to vector<2x128xf32>
    %354 = arith.addf %351, %353 : vector<2x128xf32>
    %cst_142 = arith.constant dense<0xFF800000> : vector<2xf32>
    %355 = vector.multi_reduction <maximumf>, %354, %cst_142 [1] : vector<2x128xf32> to vector<2xf32>
    %356 = vector.shape_cast %355 : vector<2xf32> to vector<2x1xf32>
    %357 = vector.broadcast %356 : vector<2x1xf32> to vector<2x128xf32>
    %358 = arith.subf %354, %357 : vector<2x128xf32>
    %359 = math.exp %358 : vector<2x128xf32>
    %cst_143 = arith.constant dense<0.000000e+00> : vector<2xf32>
    %360 = vector.multi_reduction <add>, %359, %cst_143 [1] : vector<2x128xf32> to vector<2xf32>
    %361 = vector.shape_cast %360 : vector<2xf32> to vector<2x1xf32>
    %362 = vector.broadcast %361 : vector<2x1xf32> to vector<2x128xf32>
    %363 = arith.divf %359, %362 : vector<2x128xf32>
    %c0_144 = arith.constant 0 : index
    %c0_145 = arith.constant 0 : index
    %364 = vector.load %arg8[%c0_144, %c0_145] : memref<2x128xf32, #tpu.memory_space<vmem>>, vector<2x128xf32>
    tpu.vector_store %arg8[%c0_144, %c0_145], %363 {strides = array<i32>} : memref<2x128xf32, #tpu.memory_space<vmem>>, vector<2x128xf32>,
    return
  }
}

</mosaic_0001>

<llo_original>
// kernel: tpu_custom_call.1
$region0: #{tpu_custom_call.1}
  #allocation0 [shape = 'u32[]', space=smem, size = 0x4, offset = 0x4, fixed_abs, tag = 'smem constant byte address 0x4 - core index']
  #allocation1 [shape = 'u32[72,128]{1,0:T(1,128)}', space=vmem, size = 0x9000, scoped, tag = 'internal scratch']
  #allocation2 [shape = 'f32[32,1024]{1,0:T(8,128)}', space=vmem, size = 0x20000, scoped, tag = 'scratch operand']
  %s0 = inlined_call_operand.hbm [shape: bf16[32,40], index: 0, kind: input, shape index: {}]
  %s1 = inlined_call_operand.hbm [shape: f32[32,128], index: 1, kind: input, shape index: {}]
  %s2 = inlined_call_operand.hbm [shape: f32[32,128], index: 2, kind: input, shape index: {}]
  %s3 = inlined_call_operand.hbm [shape: f32[8,128], index: 3, kind: input, shape index: {}]
  %s4 = inlined_call_operand.hbm [shape: bf16[40,1024], index: 4, kind: input, shape index: {}]
  %s5 = inlined_call_operand.hbm [shape: bf16[256,1024], index: 5, kind: input, shape index: {}]
  %s6 = inlined_call_operand.hbm [shape: bf16[512,256], index: 6, kind: input, shape index: {}]
  %s7 = inlined_call_operand.vmem [shape: f32[1,128], index: 7, kind: input, shape index: {}]
  %s8 = inlined_call_operand.hbm [shape: f32[2,128], index: 8, kind: output, shape index: {}]
  %s9 = sld [smem:[#allocation0]]
  $region70: #{tpu_custom_call.1} parent=0
    _
  %s11 = ssub.s32 1, %s9
  %s12 = scalar_select 0, %s11, %s9
  $region1: #{tpu_custom_call.1} parent=0
    #allocation3 [shape = 'u8[8192]{0}', space=vmem, size = 0x2000, scoped, tag = 'input window, operand 0, single buffered']
    #allocation4 [shape = 's32[1]{0}', space=sflag, size = 0x4, scoped, tag = 'scoped memory for tpu_custom_call.1']
    #allocation5 [shape = 's32[1]{0}', space=sflag, size = 0x4, scoped, tag = 'scoped memory for tpu_custom_call.1']
    #allocation6 [shape = 'u8[16384]{0}', space=vmem, size = 0x4000, scoped, tag = 'input window, operand 1, single buffered']
    #allocation7 [shape = 's32[1]{0}', space=sflag, size = 0x4, scoped, tag = 'scoped memory for tpu_custom_call.1']
    #allocation8 [shape = 'u8[16384]{0}', space=vmem, size = 0x4000, scoped, tag = 'input window, operand 2, single buffered']
    #allocation9 [shape = 'u8[4096]{0}', space=vmem, size = 0x1000, scoped, tag = 'input window, operand 3, single buffered']
    #allocation10 [shape = 's32[1]{0}', space=sflag, size = 0x4, scoped, tag = 'scoped memory for tpu_custom_call.1']
    #allocation11 [shape = 'u8[81920]{0}', space=vmem, size = 0x14000, scoped, tag = 'input window, operand 4, single buffered']
    #allocation12 [shape = 'u8[524288]{0}', space=vmem, size = 0x80000, scoped, tag = 'input window, operand 5, single buffered']
    #allocation13 [shape = 's32[1]{0}', space=sflag, size = 0x4, scoped, tag = 'scoped memory for tpu_custom_call.1']
    #allocation14 [shape = 'u8[262144]{0}', space=vmem, size = 0x40000, scoped, tag = 'input window, operand 6, single buffered']
    #allocation15 [shape = 'u8[1024]{0}', space=vmem, size = 0x400, scoped, tag = 'output window, operand 0, single buffered']
    %13 = vsyncpa [#allocation4], 0
    %14 = vsyncpa [#allocation7], 0
    %15 = vsyncpa [#allocation10], 0
    %16 = vsyncpa [#allocation13], 0
    %17 = vsyncpa [#allocation5], 0
    // Predicated region
    $region2: #{tpu_custom_call.1} parent=1 // pred_check
      _
    $region3: #{tpu_custom_call.1} parent=1 // pred_check_branch
      %19 = sbr.rel (0) target = $region5
    $region4: #{tpu_custom_call.1} parent=1 // pred_region
      %21 = vsyncadd [#allocation4], 0
      %s22 = sshll.u32 %s0, 4
      %s23 = int_to_ptr.hbm [resolvable:$true] %s22
      %s24 = sshll.u32 [#allocation3], 4
      %s25 = int_to_ptr.vmem [resolvable:$true] %s24
      %30 = dma.hbm_to_vmem [thread:$0]  %s23, 256, %s25, [#allocation4], 64, 64, 4
    $region5: #{tpu_custom_call.1} parent=1 // pred_fallthru
      _
    // Predicated region
    $region6: #{tpu_custom_call.1} parent=1 // pred_check
      _
    $region7: #{tpu_custom_call.1} parent=1 // pred_check_branch
      %32 = sbr.rel (0) target = $region9
    $region8: #{tpu_custom_call.1} parent=1 // pred_region
      %34 = vsyncadd [#allocation7], 0
      %s35 = sshll.u32 %s1, 4
      %s36 = int_to_ptr.hbm [resolvable:$true] %s35
      %s37 = sshll.u32 [#allocation6], 4
      %s38 = int_to_ptr.vmem [resolvable:$true] %s37
      %43 = dma.hbm_to_vmem [thread:$0]  %s36, 512, %s38, [#allocation7], 128, 128, 8
    $region9: #{tpu_custom_call.1} parent=1 // pred_fallthru
      _
    // Predicated region
    $region10: #{tpu_custom_call.1} parent=1 // pred_check
      _
    $region11: #{tpu_custom_call.1} parent=1 // pred_check_branch
      %45 = sbr.rel (0) target = $region13
    $region12: #{tpu_custom_call.1} parent=1 // pred_region
      %47 = vsyncadd [#allocation7], 0
      %s48 = sshll.u32 %s2, 4
      %s49 = int_to_ptr.hbm [resolvable:$true] %s48
      %s50 = sshll.u32 [#allocation8], 4
      %s51 = int_to_ptr.vmem [resolvable:$true] %s50
      %56 = dma.hbm_to_vmem [thread:$0]  %s49, 512, %s51, [#allocation7], 128, 128, 8
    $region13: #{tpu_custom_call.1} parent=1 // pred_fallthru
      _
    // Predicated region
    $region14: #{tpu_custom_call.1} parent=1 // pred_check
      _
    $region15: #{tpu_custom_call.1} parent=1 // pred_check_branch
      %58 = sbr.rel (0) target = $region17
    $region16: #{tpu_custom_call.1} parent=1 // pred_region
      %60 = vsyncadd [#allocation10], 0
      %s62 = sshll.u32 %s3, 4
      %s63 = int_to_ptr.hbm [resolvable:$true] %s62
      %s64 = sshll.u32 [#allocation9], 4
      %s65 = int_to_ptr.vmem [resolvable:$true] %s64
      %67 = dma.hbm_to_vmem [thread:$0]  %s63, 128, %s65, [#allocation10]
    $region17: #{tpu_custom_call.1} parent=1 // pred_fallthru
      _
    // Predicated region
    $region18: #{tpu_custom_call.1} parent=1 // pred_check
      _
    $region19: #{tpu_custom_call.1} parent=1 // pred_check_branch
      %69 = sbr.rel (0) target = $region21
    $region20: #{tpu_custom_call.1} parent=1 // pred_region
      %71 = vsyncadd [#allocation10], 0
      %s72 = sshll.u32 %s4, 4
      %s73 = int_to_ptr.hbm [resolvable:$true] %s72
      %s74 = sshll.u32 [#allocation11], 4
      %s75 = int_to_ptr.vmem [resolvable:$true] %s74
      %80 = dma.hbm_to_vmem [thread:$0]  %s73, 2560, %s75, [#allocation10], 512, 512, 32
    $region21: #{tpu_custom_call.1} parent=1 // pred_fallthru
      _
    // Predicated region
    $region22: #{tpu_custom_call.1} parent=1 // pred_check
      _
    $region23: #{tpu_custom_call.1} parent=1 // pred_check_branch
      %82 = sbr.rel (0) target = $region25
    $region24: #{tpu_custom_call.1} parent=1 // pred_region
      %84 = vsyncadd [#allocation13], 0
      %s85 = sshll.u32 %s5, 4
      %s86 = int_to_ptr.hbm [resolvable:$true] %s85
      %s87 = sshll.u32 [#allocation12], 4
      %s88 = int_to_ptr.vmem [resolvable:$true] %s87
      %93 = dma.hbm_to_vmem [thread:$0]  %s86, 16384, %s88, [#allocation13], 512, 512, 32
    $region25: #{tpu_custom_call.1} parent=1 // pred_fallthru
      _
    // Predicated region
    $region26: #{tpu_custom_call.1} parent=1 // pred_check
      _
    $region27: #{tpu_custom_call.1} parent=1 // pred_check_branch
      %95 = sbr.rel (0) target = $region29
    $region28: #{tpu_custom_call.1} parent=1 // pred_region
      %97 = vsyncadd [#allocation13], 0
      %s98 = sshll.u32 %s6, 4
      %s99 = int_to_ptr.hbm [resolvable:$true] %s98
      %s100 = sshll.u32 [#allocation14], 4
      %s101 = int_to_ptr.vmem [resolvable:$true] %s100
      %106 = dma.hbm_to_vmem [thread:$0]  %s99, 8192, %s101, [#allocation13], 128, 128, 8
    $region29: #{tpu_custom_call.1} parent=1 // pred_fallthru
      _
    // Predicated region
    $region30: #{tpu_custom_call.1} parent=1 // pred_check
      _
    $region31: #{tpu_custom_call.1} parent=1 // pred_check_branch
      %108 = sbr.rel (0) target = $region33
    $region32: #{tpu_custom_call.1} parent=1 // pred_region
      _
    $region33: #{tpu_custom_call.1} parent=1 // pred_fallthru
      _
    // Predicated region
    $region34: #{tpu_custom_call.1} parent=1 // pred_check
      _
    $region35: #{tpu_custom_call.1} parent=1 // pred_check_branch
      %110 = sbr.rel (0) target = $region37
    $region36: #{tpu_custom_call.1} parent=1 // pred_region
      %112 = dma.done [#allocation4], 256
    $region37: #{tpu_custom_call.1} parent=1 // pred_fallthru
      _
    // Predicated region
    $region38: #{tpu_custom_call.1} parent=1 // pred_check
      _
    $region39: #{tpu_custom_call.1} parent=1 // pred_check_branch
      %114 = sbr.rel (0) target = $region41
    $region40: #{tpu_custom_call.1} parent=1 // pred_region
      %116 = dma.done [#allocation7], 512
    $region41: #{tpu_custom_call.1} parent=1 // pred_fallthru
      _
    // Predicated region
    $region42: #{tpu_custom_call.1} parent=1 // pred_check
      _
    $region43: #{tpu_custom_call.1} parent=1 // pred_check_branch
      %118 = sbr.rel (0) target = $region45
    $region44: #{tpu_custom_call.1} parent=1 // pred_region
      %120 = dma.done [#allocation7], 512
    $region45: #{tpu_custom_call.1} parent=1 // pred_fallthru
      _
    // Predicated region
    $region46: #{tpu_custom_call.1} parent=1 // pred_check
      _
    $region47: #{tpu_custom_call.1} parent=1 // pred_check_branch
      %122 = sbr.rel (0) target = $region49
    $region48: #{tpu_custom_call.1} parent=1 // pred_region
      %124 = dma.done [#allocation10], 128
    $region49: #{tpu_custom_call.1} parent=1 // pred_fallthru
      _
    // Predicated region
    $region50: #{tpu_custom_call.1} parent=1 // pred_check
      _
    $region51: #{tpu_custom_call.1} parent=1 // pred_check_branch
      %126 = sbr.rel (0) target = $region53
    $region52: #{tpu_custom_call.1} parent=1 // pred_region
      %128 = dma.done [#allocation10], 2560
    $region53: #{tpu_custom_call.1} parent=1 // pred_fallthru
      _
    // Predicated region
    $region54: #{tpu_custom_call.1} parent=1 // pred_check
      _
    $region55: #{tpu_custom_call.1} parent=1 // pred_check_branch
      %130 = sbr.rel (0) target = $region57
    $region56: #{tpu_custom_call.1} parent=1 // pred_region
      %132 = dma.done [#allocation13], 16384
    $region57: #{tpu_custom_call.1} parent=1 // pred_fallthru
      _
    // Predicated region
    $region58: #{tpu_custom_call.1} parent=1 // pred_check
      _
    $region59: #{tpu_custom_call.1} parent=1 // pred_check_branch
      %134 = sbr.rel (0) target = $region61
    $region60: #{tpu_custom_call.1} parent=1 // pred_region
      %136 = dma.done [#allocation13], 8192
    $region61: #{tpu_custom_call.1} parent=1 // pred_fallthru
      _
    %v138 = vld [vmem:[#allocation3] sm:$0xf]
    %v139 = vld [vmem:[#allocation3 + $0x4] sm:$0xf]
    %v140 = vld [vmem:[#allocation3 + $0x8] sm:$0xf]
    %v141 = vld [vmem:[#allocation3 + $0xc] sm:$0xf]
    %v142 = vld [vmem:[#allocation11] sm:$0xff]
    %v143 = vld [vmem:[#allocation11 + $0x8] sm:$0xff]
    %v144 = vld [vmem:[#allocation11 + $0x10] sm:$0xff]
    %v145 = vld [vmem:[#allocation11 + $0x18] sm:$0xff]
    %v146 = vld [vmem:[#allocation11 + $0x20] sm:$0xff]
    %v147 = vld [vmem:[#allocation11 + $0x28] sm:$0xff]
    %v148 = vld [vmem:[#allocation11 + $0x30] sm:$0xff]
    %v149 = vld [vmem:[#allocation11 + $0x38] sm:$0xff]
    %v150 = vld [vmem:[#allocation11 + $0x40] sm:$0xff]
    %v151 = vld [vmem:[#allocation11 + $0x48] sm:$0xff]
    %v152 = vld [vmem:[#allocation11 + $0x50] sm:$0xff]
    %v153 = vld [vmem:[#allocation11 + $0x58] sm:$0xff]
    %v154 = vld [vmem:[#allocation11 + $0x60] sm:$0xff]
    %v155 = vld [vmem:[#allocation11 + $0x68] sm:$0xff]
    %v156 = vld [vmem:[#allocation11 + $0x70] sm:$0xff]
    %v157 = vld [vmem:[#allocation11 + $0x78] sm:$0xff]
    %v158 = vld [vmem:[#allocation11 + $0x80] sm:$0xff]
    %v159 = vld [vmem:[#allocation11 + $0x88] sm:$0xff]
    %v160 = vld [vmem:[#allocation11 + $0x90] sm:$0xff]
    %v161 = vld [vmem:[#allocation11 + $0x98] sm:$0xff]
    %v166 = vunpack.c.l.b16 %v138
    %v167 = vunpack.c.l.b16 %v139
    %v168 = vunpack.c.l.b16 %v140
    %v169 = vunpack.c.l.b16 %v141
    %v170 = vpack.c.b16 %v167, %v166
    %v171 = vpack.c.b16 %v169, %v168
    %v192 = vunpack.c.l.b16 %v142
    %v193 = vunpack.c.h.b16 %v142
    %v194 = vunpack.c.l.b16 %v143
    %v195 = vunpack.c.h.b16 %v143
    %v196 = vunpack.c.l.b16 %v144
    %v197 = vunpack.c.h.b16 %v144
    %v198 = vunpack.c.l.b16 %v145
    %v199 = vunpack.c.h.b16 %v145
    %v200 = vunpack.c.l.b16 %v146
    %v201 = vunpack.c.h.b16 %v146
    %v202 = vunpack.c.l.b16 %v147
    %v203 = vunpack.c.h.b16 %v147
    %v204 = vunpack.c.l.b16 %v148
    %v205 = vunpack.c.h.b16 %v148
    %v206 = vunpack.c.l.b16 %v149
    %v207 = vunpack.c.h.b16 %v149
    %v208 = vunpack.c.l.b16 %v150
    %v209 = vunpack.c.h.b16 %v150
    %v210 = vunpack.c.l.b16 %v151
    %v211 = vunpack.c.h.b16 %v151
    %v212 = vunpack.c.l.b16 %v152
    %v213 = vunpack.c.h.b16 %v152
    %v214 = vunpack.c.l.b16 %v153
    %v215 = vunpack.c.h.b16 %v153
    %v216 = vunpack.c.l.b16 %v154
    %v217 = vunpack.c.h.b16 %v154
    %v218 = vunpack.c.l.b16 %v155
    %v219 = vunpack.c.h.b16 %v155
    %v220 = vunpack.c.l.b16 %v156
    %v221 = vunpack.c.h.b16 %v156
    %v222 = vunpack.c.l.b16 %v157
    %v223 = vunpack.c.h.b16 %v157
    %v224 = vunpack.c.l.b16 %v158
    %v225 = vunpack.c.h.b16 %v158
    %v226 = vunpack.c.l.b16 %v159
    %v227 = vunpack.c.h.b16 %v159
    %v228 = vunpack.c.l.b16 %v160
    %v229 = vunpack.c.h.b16 %v160
    %v230 = vunpack.c.l.b16 %v161
    %v231 = vunpack.c.h.b16 %v161
    %v232 = vpack.c.b16 %v200, %v192
    %v233 = vpack.c.b16 %v201, %v193
    %v234 = vpack.c.b16 %v202, %v194
    %v235 = vpack.c.b16 %v203, %v195
    %v236 = vpack.c.b16 %v204, %v196
    %v237 = vpack.c.b16 %v205, %v197
    %v238 = vpack.c.b16 %v206, %v198
    %v239 = vpack.c.b16 %v207, %v199
    %v240 = vpack.c.b16 %v216, %v208
    %v241 = vpack.c.b16 %v217, %v209
    %v242 = vpack.c.b16 %v218, %v210
    %v243 = vpack.c.b16 %v219, %v211
    %v244 = vpack.c.b16 %v220, %v212
    %v245 = vpack.c.b16 %v221, %v213
    %v246 = vpack.c.b16 %v222, %v214
    %v247 = vpack.c.b16 %v223, %v215
    %v248 = vpack.c.b16 %v224, %v224
    %v249 = vpack.c.b16 %v225, %v225
    %v250 = vpack.c.b16 %v226, %v226
    %v251 = vpack.c.b16 %v227, %v227
    %v252 = vpack.c.b16 %v228, %v228
    %v253 = vpack.c.b16 %v229, %v229
    %v254 = vpack.c.b16 %v230, %v230
    %v255 = vpack.c.b16 %v231, %v231
    %vm272 = vcmask 326656
    %v274 = vsel %vm272, %v170, 0
    %v277 = vsel %vm272, %v171, 0
    %vm279 = vcmask 1043456
    %v281 = vsel %vm279, %v248, 0
    %v284 = vsel %vm279, %v249, 0
    %v287 = vsel %vm279, %v250, 0
    %v290 = vsel %vm279, %v251, 0
    %v293 = vsel %vm279, %v252, 0
    %v296 = vsel %vm279, %v253, 0
    %v299 = vsel %vm279, %v254, 0
    %v302 = vsel %vm279, %v255, 0
    %304 = vmatpush.bf16.msra.mxu0 0
    %305 = vmatpush.bf16.msra.mxu0 0
    %306 = vmatpush.bf16.msra.mxu0 0
    %307 = vmatpush.bf16.msra.mxu0 0
    %308 = vmatpush.bf16.msra.mxu0 0
    %309 = vmatpush.bf16.msra.mxu0 %v281
    %310 = vmatpush.bf16.msra.mxu0 %v240
    %311 = vmatpush.bf16.msra.mxu0 %v232
    %312 = vmatmul.bf16.gmra.mxu0 %v274
    %v313 = vpop.f32.mrf.mxu0
    %v314 = vadd.f32 0.0, %v313
    %v315 = vpop.f32.mrf.mxu0
    %v316 = vadd.f32 0.0, %v315
    %317 = vmatmul.bf16.gmra.mxu0 %v277
    %v318 = vpop.f32.mrf.mxu0
    %v319 = vadd.f32 0.0, %v318
    %v320 = vpop.f32.mrf.mxu0
    %v321 = vadd.f32 0.0, %v320
    %322 = vdwg.mxu0
    %323 = vmatpush.bf16.msra.mxu0 0
    %324 = vmatpush.bf16.msra.mxu0 0
    %325 = vmatpush.bf16.msra.mxu0 0
    %326 = vmatpush.bf16.msra.mxu0 0
    %327 = vmatpush.bf16.msra.mxu0 0
    %328 = vmatpush.bf16.msra.mxu0 %v284
    %329 = vmatpush.bf16.msra.mxu0 %v241
    %330 = vmatpush.bf16.msra.mxu0 %v233
    %331 = vmatmul.bf16.gmra.mxu0 %v274
    %v332 = vpop.f32.mrf.mxu0
    %v333 = vadd.f32 0.0, %v332
    %v334 = vpop.f32.mrf.mxu0
    %v335 = vadd.f32 0.0, %v334
    %336 = vmatmul.bf16.gmra.mxu0 %v277
    %v337 = vpop.f32.mrf.mxu0
    %v338 = vadd.f32 0.0, %v337
    %v339 = vpop.f32.mrf.mxu0
    %v340 = vadd.f32 0.0, %v339
    %341 = vdwg.mxu0
    %342 = vmatpush.bf16.msra.mxu0 0
    %343 = vmatpush.bf16.msra.mxu0 0
    %344 = vmatpush.bf16.msra.mxu0 0
    %345 = vmatpush.bf16.msra.mxu0 0
    %346 = vmatpush.bf16.msra.mxu0 0
    %347 = vmatpush.bf16.msra.mxu0 %v287
    %348 = vmatpush.bf16.msra.mxu0 %v242
    %349 = vmatpush.bf16.msra.mxu0 %v234
    %350 = vmatmul.bf16.gmra.mxu0 %v274
    %v351 = vpop.f32.mrf.mxu0
    %v352 = vadd.f32 0.0, %v351
    %v353 = vpop.f32.mrf.mxu0
    %v354 = vadd.f32 0.0, %v353
    %355 = vmatmul.bf16.gmra.mxu0 %v277
    %v356 = vpop.f32.mrf.mxu0
    %v357 = vadd.f32 0.0, %v356
    %v358 = vpop.f32.mrf.mxu0
    %v359 = vadd.f32 0.0, %v358
    %360 = vdwg.mxu0
    %361 = vmatpush.bf16.msra.mxu0 0
    %362 = vmatpush.bf16.msra.mxu0 0
    %363 = vmatpush.bf16.msra.mxu0 0
    %364 = vmatpush.bf16.msra.mxu0 0
    %365 = vmatpush.bf16.msra.mxu0 0
    %366 = vmatpush.bf16.msra.mxu0 %v290
    %367 = vmatpush.bf16.msra.mxu0 %v243
    %368 = vmatpush.bf16.msra.mxu0 %v235
    %369 = vmatmul.bf16.gmra.mxu0 %v274
    %v370 = vpop.f32.mrf.mxu0
    %v371 = vadd.f32 0.0, %v370
    %v372 = vpop.f32.mrf.mxu0
    %v373 = vadd.f32 0.0, %v372
    %374 = vmatmul.bf16.gmra.mxu0 %v277
    %v375 = vpop.f32.mrf.mxu0
    %v376 = vadd.f32 0.0, %v375
    %v377 = vpop.f32.mrf.mxu0
    %v378 = vadd.f32 0.0, %v377
    %379 = vdwg.mxu0
    %380 = vmatpush.bf16.msra.mxu0 0
    %381 = vmatpush.bf16.msra.mxu0 0
    %382 = vmatpush.bf16.msra.mxu0 0
    %383 = vmatpush.bf16.msra.mxu0 0
    %384 = vmatpush.bf16.msra.mxu0 0
    %385 = vmatpush.bf16.msra.mxu0 %v293
    %386 = vmatpush.bf16.msra.mxu0 %v244
    %387 = vmatpush.bf16.msra.mxu0 %v236
    %388 = vmatmul.bf16.gmra.mxu0 %v274
    %v389 = vpop.f32.mrf.mxu0
    %v390 = vadd.f32 0.0, %v389
    %v391 = vpop.f32.mrf.mxu0
    %v392 = vadd.f32 0.0, %v391
    %393 = vmatmul.bf16.gmra.mxu0 %v277
    %v394 = vpop.f32.mrf.mxu0
    %v395 = vadd.f32 0.0, %v394
    %v396 = vpop.f32.mrf.mxu0
    %v397 = vadd.f32 0.0, %v396
    %398 = vdwg.mxu0
    %399 = vmatpush.bf16.msra.mxu0 0
    %400 = vmatpush.bf16.msra.mxu0 0
    %401 = vmatpush.bf16.msra.mxu0 0
    %402 = vmatpush.bf16.msra.mxu0 0
    %403 = vmatpush.bf16.msra.mxu0 0
    %404 = vmatpush.bf16.msra.mxu0 %v296
    %405 = vmatpush.bf16.msra.mxu0 %v245
    %406 = vmatpush.bf16.msra.mxu0 %v237
    %407 = vmatmul.bf16.gmra.mxu0 %v274
    %v408 = vpop.f32.mrf.mxu0
    %v409 = vadd.f32 0.0, %v408
    %v410 = vpop.f32.mrf.mxu0
    %v411 = vadd.f32 0.0, %v410
    %412 = vmatmul.bf16.gmra.mxu0 %v277
    %v413 = vpop.f32.mrf.mxu0
    %v414 = vadd.f32 0.0, %v413
    %v415 = vpop.f32.mrf.mxu0
    %v416 = vadd.f32 0.0, %v415
    %417 = vdwg.mxu0
    %418 = vmatpush.bf16.msra.mxu0 0
    %419 = vmatpush.bf16.msra.mxu0 0
    %420 = vmatpush.bf16.msra.mxu0 0
    %421 = vmatpush.bf16.msra.mxu0 0
    %422 = vmatpush.bf16.msra.mxu0 0
    %423 = vmatpush.bf16.msra.mxu0 %v299
    %424 = vmatpush.bf16.msra.mxu0 %v246
    %425 = vmatpush.bf16.msra.mxu0 %v238
    %426 = vmatmul.bf16.gmra.mxu0 %v274
    %v427 = vpop.f32.mrf.mxu0
    %v428 = vadd.f32 0.0, %v427
    %v429 = vpop.f32.mrf.mxu0
    %v430 = vadd.f32 0.0, %v429
    %431 = vmatmul.bf16.gmra.mxu0 %v277
    %v432 = vpop.f32.mrf.mxu0
    %v433 = vadd.f32 0.0, %v432
    %v434 = vpop.f32.mrf.mxu0
    %v435 = vadd.f32 0.0, %v434
    %436 = vdwg.mxu0
    %437 = vmatpush.bf16.msra.mxu0 0
    %438 = vmatpush.bf16.msra.mxu0 0
    %439 = vmatpush.bf16.msra.mxu0 0
    %440 = vmatpush.bf16.msra.mxu0 0
    %441 = vmatpush.bf16.msra.mxu0 0
    %442 = vmatpush.bf16.msra.mxu0 %v302
    %443 = vmatpush.bf16.msra.mxu0 %v247
    %444 = vmatpush.bf16.msra.mxu0 %v239
    %445 = vmatmul.bf16.gmra.mxu0 %v274
    %v446 = vpop.f32.mrf.mxu0
    %v447 = vadd.f32 0.0, %v446
    %v448 = vpop.f32.mrf.mxu0
    %v449 = vadd.f32 0.0, %v448
    %450 = vmatmul.bf16.gmra.mxu0 %v277
    %v451 = vpop.f32.mrf.mxu0
    %v452 = vadd.f32 0.0, %v451
    %v453 = vpop.f32.mrf.mxu0
    %v454 = vadd.f32 0.0, %v453
    %455 = vdwg.mxu0
    %456 = vst [vmem:[#allocation2] sm:$0xff] %v314
    %457 = vst [vmem:[#allocation2 + $0x8] sm:$0xff] %v333
    %458 = vst [vmem:[#allocation2 + $0x10] sm:$0xff] %v352
    %459 = vst [vmem:[#allocation2 + $0x18] sm:$0xff] %v371
    %460 = vst [vmem:[#allocation2 + $0x20] sm:$0xff] %v390
    %461 = vst [vmem:[#allocation2 + $0x28] sm:$0xff] %v409
    %462 = vst [vmem:[#allocation2 + $0x30] sm:$0xff] %v428
    %463 = vst [vmem:[#allocation2 + $0x38] sm:$0xff] %v447
    %464 = vst [vmem:[#allocation2 + $0x40] sm:$0xff] %v316
    %465 = vst [vmem:[#allocation2 + $0x48] sm:$0xff] %v335
    %466 = vst [vmem:[#allocation2 + $0x50] sm:$0xff] %v354
    %467 = vst [vmem:[#allocation2 + $0x58] sm:$0xff] %v373
    %468 = vst [vmem:[#allocation2 + $0x60] sm:$0xff] %v392
    %469 = vst [vmem:[#allocation2 + $0x68] sm:$0xff] %v411
    %470 = vst [vmem:[#allocation2 + $0x70] sm:$0xff] %v430
    %471 = vst [vmem:[#allocation2 + $0x78] sm:$0xff] %v449
    %472 = vst [vmem:[#allocation2 + $0x80] sm:$0xff] %v319
    %473 = vst [vmem:[#allocation2 + $0x88] sm:$0xff] %v338
    %474 = vst [vmem:[#allocation2 + $0x90] sm:$0xff] %v357
    %475 = vst [vmem:[#allocation2 + $0x98] sm:$0xff] %v376
    %476 = vst [vmem:[#allocation2 + $0xa0] sm:$0xff] %v395
    %477 = vst [vmem:[#allocation2 + $0xa8] sm:$0xff] %v414
    %478 = vst [vmem:[#allocation2 + $0xb0] sm:$0xff] %v433
    %479 = vst [vmem:[#allocation2 + $0xb8] sm:$0xff] %v452
    %480 = vst [vmem:[#allocation2 + $0xc0] sm:$0xff] %v321
    %481 = vst [vmem:[#allocation2 + $0xc8] sm:$0xff] %v340
    %482 = vst [vmem:[#allocation2 + $0xd0] sm:$0xff] %v359
    %483 = vst [vmem:[#allocation2 + $0xd8] sm:$0xff] %v378
    %484 = vst [vmem:[#allocation2 + $0xe0] sm:$0xff] %v397
    %485 = vst [vmem:[#allocation2 + $0xe8] sm:$0xff] %v416
    %486 = vst [vmem:[#allocation2 + $0xf0] sm:$0xff] %v435
    %487 = vst [vmem:[#allocation2 + $0xf8] sm:$0xff] %v454
    %v488 = vpack.c.bf16 0.0, 0.0
    %v489 = vld [vmem:[#allocation12] sm:$0xff]
    %v490 = vld [vmem:[#allocation12 + $0x8] sm:$0xff]
    %v491 = vld [vmem:[#allocation12 + $0x10] sm:$0xff]
    %v492 = vld [vmem:[#allocation12 + $0x18] sm:$0xff]
    %v493 = vld [vmem:[#allocation12 + $0x20] sm:$0xff]
    %v494 = vld [vmem:[#allocation12 + $0x28] sm:$0xff]
    %v495 = vld [vmem:[#allocation12 + $0x30] sm:$0xff]
    %v496 = vld [vmem:[#allocation12 + $0x38] sm:$0xff]
    %v497 = vld [vmem:[#allocation12 + $0x40] sm:$0xff]
    %v498 = vld [vmem:[#allocation12 + $0x48] sm:$0xff]
    %v499 = vld [vmem:[#allocation12 + $0x50] sm:$0xff]
    %v500 = vld [vmem:[#allocation12 + $0x58] sm:$0xff]
    %v501 = vld [vmem:[#allocation12 + $0x60] sm:$0xff]
    %v502 = vld [vmem:[#allocation12 + $0x68] sm:$0xff]
    %v503 = vld [vmem:[#allocation12 + $0x70] sm:$0xff]
    %v504 = vld [vmem:[#allocation12 + $0x78] sm:$0xff]
    %v505 = vld [vmem:[#allocation12 + $0x80] sm:$0xff]
    %v506 = vld [vmem:[#allocation12 + $0x88] sm:$0xff]
    %v507 = vld [vmem:[#allocation12 + $0x90] sm:$0xff]
    %v508 = vld [vmem:[#allocation12 + $0x98] sm:$0xff]
    %v509 = vld [vmem:[#allocation12 + $0xa0] sm:$0xff]
    %v510 = vld [vmem:[#allocation12 + $0xa8] sm:$0xff]
    %v511 = vld [vmem:[#allocation12 + $0xb0] sm:$0xff]
    %v512 = vld [vmem:[#allocation12 + $0xb8] sm:$0xff]
    %v513 = vld [vmem:[#allocation12 + $0xc0] sm:$0xff]
    %v514 = vld [vmem:[#allocation12 + $0xc8] sm:$0xff]
    %v515 = vld [vmem:[#allocation12 + $0xd0] sm:$0xff]
    %v516 = vld [vmem:[#allocation12 + $0xd8] sm:$0xff]
    %v517 = vld [vmem:[#allocation12 + $0xe0] sm:$0xff]
    %v518 = vld [vmem:[#allocation12 + $0xe8] sm:$0xff]
    %v519 = vld [vmem:[#allocation12 + $0xf0] sm:$0xff]
    %v520 = vld [vmem:[#allocation12 + $0xf8] sm:$0xff]
    %v521 = vld [vmem:[#allocation12 + $0x100] sm:$0xff]
    %v522 = vld [vmem:[#allocation12 + $0x108] sm:$0xff]
    %v523 = vld [vmem:[#allocation12 + $0x110] sm:$0xff]
    %v524 = vld [vmem:[#allocation12 + $0x118] sm:$0xff]
    %v525 = vld [vmem:[#allocation12 + $0x120] sm:$0xff]
    %v526 = vld [vmem:[#allocation12 + $0x128] sm:$0xff]
    %v527 = vld [vmem:[#allocation12 + $0x130] sm:$0xff]
    %v528 = vld [vmem:[#allocation12 + $0x138] sm:$0xff]
    %v529 = vld [vmem:[#allocation12 + $0x140] sm:$0xff]
    %v530 = vld [vmem:[#allocation12 + $0x148] sm:$0xff]
    %v531 = vld [vmem:[#allocation12 + $0x150] sm:$0xff]
    %v532 = vld [vmem:[#allocation12 + $0x158] sm:$0xff]
    %v533 = vld [vmem:[#allocation12 + $0x160] sm:$0xff]
    %v534 = vld [vmem:[#allocation12 + $0x168] sm:$0xff]
    %v535 = vld [vmem:[#allocation12 + $0x170] sm:$0xff]
    %v536 = vld [vmem:[#allocation12 + $0x178] sm:$0xff]
    %v537 = vld [vmem:[#allocation12 + $0x180] sm:$0xff]
    %v538 = vld [vmem:[#allocation12 + $0x188] sm:$0xff]
    %v539 = vld [vmem:[#allocation12 + $0x190] sm:$0xff]
    %v540 = vld [vmem:[#allocation12 + $0x198] sm:$0xff]
    %v541 = vld [vmem:[#allocation12 + $0x1a0] sm:$0xff]
    %v542 = vld [vmem:[#allocation12 + $0x1a8] sm:$0xff]
    %v543 = vld [vmem:[#allocation12 + $0x1b0] sm:$0xff]
    %v544 = vld [vmem:[#allocation12 + $0x1b8] sm:$0xff]
    %v545 = vld [vmem:[#allocation12 + $0x1c0] sm:$0xff]
    %v546 = vld [vmem:[#allocation12 + $0x1c8] sm:$0xff]
    %v547 = vld [vmem:[#allocation12 + $0x1d0] sm:$0xff]
    %v548 = vld [vmem:[#allocation12 + $0x1d8] sm:$0xff]
    %v549 = vld [vmem:[#allocation12 + $0x1e0] sm:$0xff]
    %v550 = vld [vmem:[#allocation12 + $0x1e8] sm:$0xff]
    %v551 = vld [vmem:[#allocation12 + $0x1f0] sm:$0xff]
    %v552 = vld [vmem:[#allocation12 + $0x1f8] sm:$0xff]
    %v553 = vld [vmem:[#allocation12 + $0x200] sm:$0xff]
    %v554 = vld [vmem:[#allocation12 + $0x208] sm:$0xff]
    %v555 = vld [vmem:[#allocation12 + $0x210] sm:$0xff]
    %v556 = vld [vmem:[#allocation12 + $0x218] sm:$0xff]
    %v557 = vld [vmem:[#allocation12 + $0x220] sm:$0xff]
    %v558 = vld [vmem:[#allocation12 + $0x228] sm:$0xff]
    %v559 = vld [vmem:[#allocation12 + $0x230] sm:$0xff]
    %v560 = vld [vmem:[#allocation12 + $0x238] sm:$0xff]
    %v561 = vld [vmem:[#allocation12 + $0x240] sm:$0xff]
    %v562 = vld [vmem:[#allocation12 + $0x248] sm:$0xff]
    %v563 = vld [vmem:[#allocation12 + $0x250] sm:$0xff]
    %v564 = vld [vmem:[#allocation12 + $0x258] sm:$0xff]
    %v565 = vld [vmem:[#allocation12 + $0x260] sm:$0xff]
    %v566 = vld [vmem:[#allocation12 + $0x268] sm:$0xff]
    %v567 = vld [vmem:[#allocation12 + $0x270] sm:$0xff]
    %v568 = vld [vmem:[#allocation12 + $0x278] sm:$0xff]
    %v569 = vld [vmem:[#allocation12 + $0x280] sm:$0xff]
    %v570 = vld [vmem:[#allocation12 + $0x288] sm:$0xff]
    %v571 = vld [vmem:[#allocation12 + $0x290] sm:$0xff]
    %v572 = vld [vmem:[#allocation12 + $0x298] sm:$0xff]
    %v573 = vld [vmem:[#allocation12 + $0x2a0] sm:$0xff]
    %v574 = vld [vmem:[#allocation12 + $0x2a8] sm:$0xff]
    %v575 = vld [vmem:[#allocation12 + $0x2b0] sm:$0xff]
    %v576 = vld [vmem:[#allocation12 + $0x2b8] sm:$0xff]
    %v577 = vld [vmem:[#allocation12 + $0x2c0] sm:$0xff]
    %v578 = vld [vmem:[#allocation12 + $0x2c8] sm:$0xff]
    %v579 = vld [vmem:[#allocation12 + $0x2d0] sm:$0xff]
    %v580 = vld [vmem:[#allocation12 + $0x2d8] sm:$0xff]
    %v581 = vld [vmem:[#allocation12 + $0x2e0] sm:$0xff]
    %v582 = vld [vmem:[#allocation12 + $0x2e8] sm:$0xff]
    %v583 = vld [vmem:[#allocation12 + $0x2f0] sm:$0xff]
    %v584 = vld [vmem:[#allocation12 + $0x2f8] sm:$0xff]
    %v585 = vld [vmem:[#allocation12 + $0x300] sm:$0xff]
    %v586 = vld [vmem:[#allocation12 + $0x308] sm:$0xff]
    %v587 = vld [vmem:[#allocation12 + $0x310] sm:$0xff]
    %v588 = vld [vmem:[#allocation12 + $0x318] sm:$0xff]
    %v589 = vld [vmem:[#allocation12 + $0x320] sm:$0xff]
    %v590 = vld [vmem:[#allocation12 + $0x328] sm:$0xff]
    %v591 = vld [vmem:[#allocation12 + $0x330] sm:$0xff]
    %v592 = vld [vmem:[#allocation12 + $0x338] sm:$0xff]
    %v593 = vld [vmem:[#allocation12 + $0x340] sm:$0xff]
    %v594 = vld [vmem:[#allocation12 + $0x348] sm:$0xff]
    %v595 = vld [vmem:[#allocation12 + $0x350] sm:$0xff]
    %v596 = vld [vmem:[#allocation12 + $0x358] sm:$0xff]
    %v597 = vld [vmem:[#allocation12 + $0x360] sm:$0xff]
    %v598 = vld [vmem:[#allocation12 + $0x368] sm:$0xff]
    %v599 = vld [vmem:[#allocation12 + $0x370] sm:$0xff]
    %v600 = vld [vmem:[#allocation12 + $0x378] sm:$0xff]
    %v601 = vld [vmem:[#allocation12 + $0x380] sm:$0xff]
    %v602 = vld [vmem:[#allocation12 + $0x388] sm:$0xff]
    %v603 = vld [vmem:[#allocation12 + $0x390] sm:$0xff]
    %v604 = vld [vmem:[#allocation12 + $0x398] sm:$0xff]
    %v605 = vld [vmem:[#allocation12 + $0x3a0] sm:$0xff]
    %v606 = vld [vmem:[#allocation12 + $0x3a8] sm:$0xff]
    %v607 = vld [vmem:[#allocation12 + $0x3b0] sm:$0xff]
    %v608 = vld [vmem:[#allocation12 + $0x3b8] sm:$0xff]
    %v609 = vld [vmem:[#allocation12 + $0x3c0] sm:$0xff]
    %v610 = vld [vmem:[#allocation12 + $0x3c8] sm:$0xff]
    %v611 = vld [vmem:[#allocation12 + $0x3d0] sm:$0xff]
    %v612 = vld [vmem:[#allocation12 + $0x3d8] sm:$0xff]
    %v613 = vld [vmem:[#allocation12 + $0x3e0] sm:$0xff]
    %v614 = vld [vmem:[#allocation12 + $0x3e8] sm:$0xff]
    %v615 = vld [vmem:[#allocation12 + $0x3f0] sm:$0xff]
    %v616 = vld [vmem:[#allocation12 + $0x3f8] sm:$0xff]
    %v745 = vunpack.c.l.b16 %v489
    %v746 = vunpack.c.h.b16 %v489
    %v747 = vunpack.c.l.b16 %v490
    %v748 = vunpack.c.h.b16 %v490
    %v749 = vunpack.c.l.b16 %v491
    %v750 = vunpack.c.h.b16 %v491
    %v751 = vunpack.c.l.b16 %v492
    %v752 = vunpack.c.h.b16 %v492
    %v753 = vunpack.c.l.b16 %v493
    %v754 = vunpack.c.h.b16 %v493
    %v755 = vunpack.c.l.b16 %v494
    %v756 = vunpack.c.h.b16 %v494
    %v757 = vunpack.c.l.b16 %v495
    %v758 = vunpack.c.h.b16 %v495
    %v759 = vunpack.c.l.b16 %v496
    %v760 = vunpack.c.h.b16 %v496
    %v761 = vunpack.c.l.b16 %v497
    %v762 = vunpack.c.h.b16 %v497
    %v763 = vunpack.c.l.b16 %v498
    %v764 = vunpack.c.h.b16 %v498
    %v765 = vunpack.c.l.b16 %v499
    %v766 = vunpack.c.h.b16 %v499
    %v767 = vunpack.c.l.b16 %v500
    %v768 = vunpack.c.h.b16 %v500
    %v769 = vunpack.c.l.b16 %v501
    %v770 = vunpack.c.h.b16 %v501
    %v771 = vunpack.c.l.b16 %v502
    %v772 = vunpack.c.h.b16 %v502
    %v773 = vunpack.c.l.b16 %v503
    %v774 = vunpack.c.h.b16 %v503
    %v775 = vunpack.c.l.b16 %v504
    %v776 = vunpack.c.h.b16 %v504
    %v777 = vunpack.c.l.b16 %v505
    %v778 = vunpack.c.h.b16 %v505
    %v779 = vunpack.c.l.b16 %v506
    %v780 = vunpack.c.h.b16 %v506
    %v781 = vunpack.c.l.b16 %v507
    %v782 = vunpack.c.h.b16 %v507
    %v783 = vunpack.c.l.b16 %v508
    %v784 = vunpack.c.h.b16 %v508
    %v785 = vunpack.c.l.b16 %v509
    %v786 = vunpack.c.h.b16 %v509
    %v787 = vunpack.c.l.b16 %v510
    %v788 = vunpack.c.h.b16 %v510
    %v789 = vunpack.c.l.b16 %v511
    %v790 = vunpack.c.h.b16 %v511
    %v791 = vunpack.c.l.b16 %v512
    %v792 = vunpack.c.h.b16 %v512
    %v793 = vunpack.c.l.b16 %v513
    %v794 = vunpack.c.h.b16 %v513
    %v795 = vunpack.c.l.b16 %v514
    %v796 = vunpack.c.h.b16 %v514
    %v797 = vunpack.c.l.b16 %v515
    %v798 = vunpack.c.h.b16 %v515
    %v799 = vunpack.c.l.b16 %v516
    %v800 = vunpack.c.h.b16 %v516
    %v801 = vunpack.c.l.b16 %v517
    %v802 = vunpack.c.h.b16 %v517
    %v803 = vunpack.c.l.b16 %v518
    %v804 = vunpack.c.h.b16 %v518
    %v805 = vunpack.c.l.b16 %v519
    %v806 = vunpack.c.h.b16 %v519
    %v807 = vunpack.c.l.b16 %v520
    %v808 = vunpack.c.h.b16 %v520
    %v809 = vunpack.c.l.b16 %v521
    %v810 = vunpack.c.h.b16 %v521
    %v811 = vunpack.c.l.b16 %v522
    %v812 = vunpack.c.h.b16 %v522
    %v813 = vunpack.c.l.b16 %v523
    %v814 = vunpack.c.h.b16 %v523
    %v815 = vunpack.c.l.b16 %v524
    %v816 = vunpack.c.h.b16 %v524
    %v817 = vunpack.c.l.b16 %v525
    %v818 = vunpack.c.h.b16 %v525
    %v819 = vunpack.c.l.b16 %v526
    %v820 = vunpack.c.h.b16 %v526
    %v821 = vunpack.c.l.b16 %v527
    %v822 = vunpack.c.h.b16 %v527
    %v823 = vunpack.c.l.b16 %v528
    %v824 = vunpack.c.h.b16 %v528
    %v825 = vunpack.c.l.b16 %v529
    %v826 = vunpack.c.h.b16 %v529
    %v827 = vunpack.c.l.b16 %v530
    %v828 = vunpack.c.h.b16 %v530
    %v829 = vunpack.c.l.b16 %v531
    %v830 = vunpack.c.h.b16 %v531
    %v831 = vunpack.c.l.b16 %v532
    %v832 = vunpack.c.h.b16 %v532
    %v833 = vunpack.c.l.b16 %v533
    %v834 = vunpack.c.h.b16 %v533
    %v835 = vunpack.c.l.b16 %v534
    %v836 = vunpack.c.h.b16 %v534
    %v837 = vunpack.c.l.b16 %v535
    %v838 = vunpack.c.h.b16 %v535
    %v839 = vunpack.c.l.b16 %v536
    %v840 = vunpack.c.h.b16 %v536
    %v841 = vunpack.c.l.b16 %v537
    %v842 = vunpack.c.h.b16 %v537
    %v843 = vunpack.c.l.b16 %v538
    %v844 = vunpack.c.h.b16 %v538
    %v845 = vunpack.c.l.b16 %v539
    %v846 = vunpack.c.h.b16 %v539
    %v847 = vunpack.c.l.b16 %v540
    %v848 = vunpack.c.h.b16 %v540
    %v849 = vunpack.c.l.b16 %v541
    %v850 = vunpack.c.h.b16 %v541
    %v851 = vunpack.c.l.b16 %v542
    %v852 = vunpack.c.h.b16 %v542
    %v853 = vunpack.c.l.b16 %v543
    %v854 = vunpack.c.h.b16 %v543
    %v855 = vunpack.c.l.b16 %v544
    %v856 = vunpack.c.h.b16 %v544
    %v857 = vunpack.c.l.b16 %v545
    %v858 = vunpack.c.h.b16 %v545
    %v859 = vunpack.c.l.b16 %v546
    %v860 = vunpack.c.h.b16 %v546
    %v861 = vunpack.c.l.b16 %v547
    %v862 = vunpack.c.h.b16 %v547
    %v863 = vunpack.c.l.b16 %v548
    %v864 = vunpack.c.h.b16 %v548
    %v865 = vunpack.c.l.b16 %v549
    %v866 = vunpack.c.h.b16 %v549
    %v867 = vunpack.c.l.b16 %v550
    %v868 = vunpack.c.h.b16 %v550
    %v869 = vunpack.c.l.b16 %v551
    %v870 = vunpack.c.h.b16 %v551
    %v871 = vunpack.c.l.b16 %v552
    %v872 = vunpack.c.h.b16 %v552
    %v873 = vunpack.c.l.b16 %v553
    %v874 = vunpack.c.h.b16 %v553
    %v875 = vunpack.c.l.b16 %v554
    %v876 = vunpack.c.h.b16 %v554
    %v877 = vunpack.c.l.b16 %v555
    %v878 = vunpack.c.h.b16 %v555
    %v879 = vunpack.c.l.b16 %v556
    %v880 = vunpack.c.h.b16 %v556
    %v881 = vunpack.c.l.b16 %v557
    %v882 = vunpack.c.h.b16 %v557
    %v883 = vunpack.c.l.b16 %v558
    %v884 = vunpack.c.h.b16 %v558
    %v885 = vunpack.c.l.b16 %v559
    %v886 = vunpack.c.h.b16 %v559
    %v887 = vunpack.c.l.b16 %v560
    %v888 = vunpack.c.h.b16 %v560
    %v889 = vunpack.c.l.b16 %v561
    %v890 = vunpack.c.h.b16 %v561
    %v891 = vunpack.c.l.b16 %v562
    %v892 = vunpack.c.h.b16 %v562
    %v893 = vunpack.c.l.b16 %v563
    %v894 = vunpack.c.h.b16 %v563
    %v895 = vunpack.c.l.b16 %v564
    %v896 = vunpack.c.h.b16 %v564
    %v897 = vunpack.c.l.b16 %v565
    %v898 = vunpack.c.h.b16 %v565
    %v899 = vunpack.c.l.b16 %v566
    %v900 = vunpack.c.h.b16 %v566
    %v901 = vunpack.c.l.b16 %v567
    %v902 = vunpack.c.h.b16 %v567
    %v903 = vunpack.c.l.b16 %v568
    %v904 = vunpack.c.h.b16 %v568
    %v905 = vunpack.c.l.b16 %v569
    %v906 = vunpack.c.h.b16 %v569
    %v907 = vunpack.c.l.b16 %v570
    %v908 = vunpack.c.h.b16 %v570
    %v909 = vunpack.c.l.b16 %v571
    %v910 = vunpack.c.h.b16 %v571
    %v911 = vunpack.c.l.b16 %v572
    %v912 = vunpack.c.h.b16 %v572
    %v913 = vunpack.c.l.b16 %v573
    %v914 = vunpack.c.h.b16 %v573
    %v915 = vunpack.c.l.b16 %v574
    %v916 = vunpack.c.h.b16 %v574
    %v917 = vunpack.c.l.b16 %v575
    %v918 = vunpack.c.h.b16 %v575
    %v919 = vunpack.c.l.b16 %v576
    %v920 = vunpack.c.h.b16 %v576
    %v921 = vunpack.c.l.b16 %v577
    %v922 = vunpack.c.h.b16 %v577
    %v923 = vunpack.c.l.b16 %v578
    %v924 = vunpack.c.h.b16 %v578
    %v925 = vunpack.c.l.b16 %v579
    %v926 = vunpack.c.h.b16 %v579
    %v927 = vunpack.c.l.b16 %v580
    %v928 = vunpack.c.h.b16 %v580
    %v929 = vunpack.c.l.b16 %v581
    %v930 = vunpack.c.h.b16 %v581
    %v931 = vunpack.c.l.b16 %v582
    %v932 = vunpack.c.h.b16 %v582
    %v933 = vunpack.c.l.b16 %v583
    %v934 = vunpack.c.h.b16 %v583
    %v935 = vunpack.c.l.b16 %v584
    %v936 = vunpack.c.h.b16 %v584
    %v937 = vunpack.c.l.b16 %v585
    %v938 = vunpack.c.h.b16 %v585
    %v939 = vunpack.c.l.b16 %v586
    %v940 = vunpack.c.h.b16 %v586
    %v941 = vunpack.c.l.b16 %v587
    %v942 = vunpack.c.h.b16 %v587
    %v943 = vunpack.c.l.b16 %v588
    %v944 = vunpack.c.h.b16 %v588
    %v945 = vunpack.c.l.b16 %v589
    %v946 = vunpack.c.h.b16 %v589
    %v947 = vunpack.c.l.b16 %v590
    %v948 = vunpack.c.h.b16 %v590
    %v949 = vunpack.c.l.b16 %v591
    %v950 = vunpack.c.h.b16 %v591
    %v951 = vunpack.c.l.b16 %v592
    %v952 = vunpack.c.h.b16 %v592
    %v953 = vunpack.c.l.b16 %v593
    %v954 = vunpack.c.h.b16 %v593
    %v955 = vunpack.c.l.b16 %v594
    %v956 = vunpack.c.h.b16 %v594
    %v957 = vunpack.c.l.b16 %v595
    %v958 = vunpack.c.h.b16 %v595
    %v959 = vunpack.c.l.b16 %v596
    %v960 = vunpack.c.h.b16 %v596
    %v961 = vunpack.c.l.b16 %v597
    %v962 = vunpack.c.h.b16 %v597
    %v963 = vunpack.c.l.b16 %v598
    %v964 = vunpack.c.h.b16 %v598
    %v965 = vunpack.c.l.b16 %v599
    %v966 = vunpack.c.h.b16 %v599
    %v967 = vunpack.c.l.b16 %v600
    %v968 = vunpack.c.h.b16 %v600
    %v969 = vunpack.c.l.b16 %v601
    %v970 = vunpack.c.h.b16 %v601
    %v971 = vunpack.c.l.b16 %v602
    %v972 = vunpack.c.h.b16 %v602
    %v973 = vunpack.c.l.b16 %v603
    %v974 = vunpack.c.h.b16 %v603
    %v975 = vunpack.c.l.b16 %v604
    %v976 = vunpack.c.h.b16 %v604
    %v977 = vunpack.c.l.b16 %v605
    %v978 = vunpack.c.h.b16 %v605
    %v979 = vunpack.c.l.b16 %v606
    %v980 = vunpack.c.h.b16 %v606
    %v981 = vunpack.c.l.b16 %v607
    %v982 = vunpack.c.h.b16 %v607
    %v983 = vunpack.c.l.b16 %v608
    %v984 = vunpack.c.h.b16 %v608
    %v985 = vunpack.c.l.b16 %v609
    %v986 = vunpack.c.h.b16 %v609
    %v987 = vunpack.c.l.b16 %v610
    %v988 = vunpack.c.h.b16 %v610
    %v989 = vunpack.c.l.b16 %v611
    %v990 = vunpack.c.h.b16 %v611
    %v991 = vunpack.c.l.b16 %v612
    %v992 = vunpack.c.h.b16 %v612
    %v993 = vunpack.c.l.b16 %v613
    %v994 = vunpack.c.h.b16 %v613
    %v995 = vunpack.c.l.b16 %v614
    %v996 = vunpack.c.h.b16 %v614
    %v997 = vunpack.c.l.b16 %v615
    %v998 = vunpack.c.h.b16 %v615
    %v999 = vunpack.c.l.b16 %v616
    %v1000 = vunpack.c.h.b16 %v616
    %v1001 = vpack.c.b16 %v753, %v745
    %v1002 = vpack.c.b16 %v754, %v746
    %v1003 = vpack.c.b16 %v755, %v747
    %v1004 = vpack.c.b16 %v756, %v748
    %v1005 = vpack.c.b16 %v757, %v749
    %v1006 = vpack.c.b16 %v758, %v750
    %v1007 = vpack.c.b16 %v759, %v751
    %v1008 = vpack.c.b16 %v760, %v752
    %v1009 = vpack.c.b16 %v769, %v761
    %v1010 = vpack.c.b16 %v770, %v762
    %v1011 = vpack.c.b16 %v771, %v763
    %v1012 = vpack.c.b16 %v772, %v764
    %v1013 = vpack.c.b16 %v773, %v765
    %v1014 = vpack.c.b16 %v774, %v766
    %v1015 = vpack.c.b16 %v775, %v767
    %v1016 = vpack.c.b16 %v776, %v768
    %v1017 = vpack.c.b16 %v785, %v777
    %v1018 = vpack.c.b16 %v786, %v778
    %v1019 = vpack.c.b16 %v787, %v779
    %v1020 = vpack.c.b16 %v788, %v780
    %v1021 = vpack.c.b16 %v789, %v781
    %v1022 = vpack.c.b16 %v790, %v782
    %v1023 = vpack.c.b16 %v791, %v783
    %v1024 = vpack.c.b16 %v792, %v784
    %v1025 = vpack.c.b16 %v801, %v793
    %v1026 = vpack.c.b16 %v802, %v794
    %v1027 = vpack.c.b16 %v803, %v795
    %v1028 = vpack.c.b16 %v804, %v796
    %v1029 = vpack.c.b16 %v805, %v797
    %v1030 = vpack.c.b16 %v806, %v798
    %v1031 = vpack.c.b16 %v807, %v799
    %v1032 = vpack.c.b16 %v808, %v800
    %v1033 = vpack.c.b16 %v817, %v809
    %v1034 = vpack.c.b16 %v818, %v810
    %v1035 = vpack.c.b16 %v819, %v811
    %v1036 = vpack.c.b16 %v820, %v812
    %v1037 = vpack.c.b16 %v821, %v813
    %v1038 = vpack.c.b16 %v822, %v814
    %v1039 = vpack.c.b16 %v823, %v815
    %v1040 = vpack.c.b16 %v824, %v816
    %v1041 = vpack.c.b16 %v833, %v825
    %v1042 = vpack.c.b16 %v834, %v826
    %v1043 = vpack.c.b16 %v835, %v827
    %v1044 = vpack.c.b16 %v836, %v828
    %v1045 = vpack.c.b16 %v837, %v829
    %v1046 = vpack.c.b16 %v838, %v830
    %v1047 = vpack.c.b16 %v839, %v831
    %v1048 = vpack.c.b16 %v840, %v832
    %v1049 = vpack.c.b16 %v849, %v841
    %v1050 = vpack.c.b16 %v850, %v842
    %v1051 = vpack.c.b16 %v851, %v843
    %v1052 = vpack.c.b16 %v852, %v844
    %v1053 = vpack.c.b16 %v853, %v845
    %v1054 = vpack.c.b16 %v854, %v846
    %v1055 = vpack.c.b16 %v855, %v847
    %v1056 = vpack.c.b16 %v856, %v848
    %v1057 = vpack.c.b16 %v865, %v857
    %v1058 = vpack.c.b16 %v866, %v858
    %v1059 = vpack.c.b16 %v867, %v859
    %v1060 = vpack.c.b16 %v868, %v860
    %v1061 = vpack.c.b16 %v869, %v861
    %v1062 = vpack.c.b16 %v870, %v862
    %v1063 = vpack.c.b16 %v871, %v863
    %v1064 = vpack.c.b16 %v872, %v864
    %v1065 = vpack.c.b16 %v881, %v873
    %v1066 = vpack.c.b16 %v882, %v874
    %v1067 = vpack.c.b16 %v883, %v875
    %v1068 = vpack.c.b16 %v884, %v876
    %v1069 = vpack.c.b16 %v885, %v877
    %v1070 = vpack.c.b16 %v886, %v878
    %v1071 = vpack.c.b16 %v887, %v879
    %v1072 = vpack.c.b16 %v888, %v880
    %v1073 = vpack.c.b16 %v897, %v889
    %v1074 = vpack.c.b16 %v898, %v890
    %v1075 = vpack.c.b16 %v899, %v891
    %v1076 = vpack.c.b16 %v900, %v892
    %v1077 = vpack.c.b16 %v901, %v893
    %v1078 = vpack.c.b16 %v902, %v894
    %v1079 = vpack.c.b16 %v903, %v895
    %v1080 = vpack.c.b16 %v904, %v896
    %v1081 = vpack.c.b16 %v913, %v905
    %v1082 = vpack.c.b16 %v914, %v906
    %v1083 = vpack.c.b16 %v915, %v907
    %v1084 = vpack.c.b16 %v916, %v908
    %v1085 = vpack.c.b16 %v917, %v909
    %v1086 = vpack.c.b16 %v918, %v910
    %v1087 = vpack.c.b16 %v919, %v911
    %v1088 = vpack.c.b16 %v920, %v912
    %v1089 = vpack.c.b16 %v929, %v921
    %v1090 = vpack.c.b16 %v930, %v922
    %v1091 = vpack.c.b16 %v931, %v923
    %v1092 = vpack.c.b16 %v932, %v924
    %v1093 = vpack.c.b16 %v933, %v925
    %v1094 = vpack.c.b16 %v934, %v926
    %v1095 = vpack.c.b16 %v935, %v927
    %v1096 = vpack.c.b16 %v936, %v928
    %v1097 = vpack.c.b16 %v945, %v937
    %v1098 = vpack.c.b16 %v946, %v938
    %v1099 = vpack.c.b16 %v947, %v939
    %v1100 = vpack.c.b16 %v948, %v940
    %v1101 = vpack.c.b16 %v949, %v941
    %v1102 = vpack.c.b16 %v950, %v942
    %v1103 = vpack.c.b16 %v951, %v943
    %v1104 = vpack.c.b16 %v952, %v944
    %v1105 = vpack.c.b16 %v961, %v953
    %v1106 = vpack.c.b16 %v962, %v954
    %v1107 = vpack.c.b16 %v963, %v955
    %v1108 = vpack.c.b16 %v964, %v956
    %v1109 = vpack.c.b16 %v965, %v957
    %v1110 = vpack.c.b16 %v966, %v958
    %v1111 = vpack.c.b16 %v967, %v959
    %v1112 = vpack.c.b16 %v968, %v960
    %v1113 = vpack.c.b16 %v977, %v969
    %v1114 = vpack.c.b16 %v978, %v970
    %v1115 = vpack.c.b16 %v979, %v971
    %v1116 = vpack.c.b16 %v980, %v972
    %v1117 = vpack.c.b16 %v981, %v973
    %v1118 = vpack.c.b16 %v982, %v974
    %v1119 = vpack.c.b16 %v983, %v975
    %v1120 = vpack.c.b16 %v984, %v976
    %v1121 = vpack.c.b16 %v993, %v985
    %v1122 = vpack.c.b16 %v994, %v986
    %v1123 = vpack.c.b16 %v995, %v987
    %v1124 = vpack.c.b16 %v996, %v988
    %v1125 = vpack.c.b16 %v997, %v989
    %v1126 = vpack.c.b16 %v998, %v990
    %v1127 = vpack.c.b16 %v999, %v991
    %v1128 = vpack.c.b16 %v1000, %v992
    %1257 = vmatpush.bf16.msra.mxu0 %v1057
    %1258 = vmatpush.bf16.msra.mxu0 %v1049
    %1259 = vmatpush.bf16.msra.mxu0 %v1041
    %1260 = vmatpush.bf16.msra.mxu0 %v1033
    %1261 = vmatpush.bf16.msra.mxu0 %v1025
    %1262 = vmatpush.bf16.msra.mxu0 %v1017
    %1263 = vmatpush.bf16.msra.mxu0 %v1009
    %1264 = vmatpush.bf16.msra.mxu0 %v1001
    %1265 = vmatmul.bf16.gmra.mxu0 %v488
    %v1266 = vpop.f32.mrf.mxu0
    %v1267 = vadd.f32 0.0, %v1266
    %v1268 = vpop.f32.mrf.mxu0
    %1269 = vdwg.mxu0
    %1270 = vmatpush.bf16.msra.mxu0 %v1121
    %1271 = vmatpush.bf16.msra.mxu0 %v1113
    %1272 = vmatpush.bf16.msra.mxu0 %v1105
    %1273 = vmatpush.bf16.msra.mxu0 %v1097
    %1274 = vmatpush.bf16.msra.mxu0 %v1089
    %1275 = vmatpush.bf16.msra.mxu0 %v1081
    %1276 = vmatpush.bf16.msra.mxu0 %v1073
    %1277 = vmatpush.bf16.msra.mxu0 %v1065
    %1278 = vmatmul.bf16.gmra.mxu0 %v488
    %v1279 = vpop.f32.mrf.mxu0
    %v1280 = vadd.f32 %v1267, %v1279
    %v1281 = vpop.f32.mrf.mxu0
    %1282 = vdwg.mxu0
    %1283 = vmatpush.bf16.msra.mxu0 %v1058
    %1284 = vmatpush.bf16.msra.mxu0 %v1050
    %1285 = vmatpush.bf16.msra.mxu0 %v1042
    %1286 = vmatpush.bf16.msra.mxu0 %v1034
    %1287 = vmatpush.bf16.msra.mxu0 %v1026
    %1288 = vmatpush.bf16.msra.mxu0 %v1018
    %1289 = vmatpush.bf16.msra.mxu0 %v1010
    %1290 = vmatpush.bf16.msra.mxu0 %v1002
    %1291 = vmatmul.bf16.gmra.mxu0 %v488
    %v1292 = vpop.f32.mrf.mxu0
    %v1293 = vadd.f32 0.0, %v1292
    %v1294 = vpop.f32.mrf.mxu0
    %1295 = vdwg.mxu0
    %1296 = vmatpush.bf16.msra.mxu0 %v1122
    %1297 = vmatpush.bf16.msra.mxu0 %v1114
    %1298 = vmatpush.bf16.msra.mxu0 %v1106
    %1299 = vmatpush.bf16.msra.mxu0 %v1098
    %1300 = vmatpush.bf16.msra.mxu0 %v1090
    %1301 = vmatpush.bf16.msra.mxu0 %v1082
    %1302 = vmatpush.bf16.msra.mxu0 %v1074
    %1303 = vmatpush.bf16.msra.mxu0 %v1066
    %1304 = vmatmul.bf16.gmra.mxu0 %v488
    %v1305 = vpop.f32.mrf.mxu0
    %v1306 = vadd.f32 %v1293, %v1305
    %v1307 = vpop.f32.mrf.mxu0
    %1308 = vdwg.mxu0
    %1309 = vmatpush.bf16.msra.mxu0 %v1059
    %1310 = vmatpush.bf16.msra.mxu0 %v1051
    %1311 = vmatpush.bf16.msra.mxu0 %v1043
    %1312 = vmatpush.bf16.msra.mxu0 %v1035
    %1313 = vmatpush.bf16.msra.mxu0 %v1027
    %1314 = vmatpush.bf16.msra.mxu0 %v1019
    %1315 = vmatpush.bf16.msra.mxu0 %v1011
    %1316 = vmatpush.bf16.msra.mxu0 %v1003
    %1317 = vmatmul.bf16.gmra.mxu0 %v488
    %v1318 = vpop.f32.mrf.mxu0
    %v1319 = vadd.f32 0.0, %v1318
    %v1320 = vpop.f32.mrf.mxu0
    %1321 = vdwg.mxu0
    %1322 = vmatpush.bf16.msra.mxu0 %v1123
    %1323 = vmatpush.bf16.msra.mxu0 %v1115
    %1324 = vmatpush.bf16.msra.mxu0 %v1107
    %1325 = vmatpush.bf16.msra.mxu0 %v1099
    %1326 = vmatpush.bf16.msra.mxu0 %v1091
    %1327 = vmatpush.bf16.msra.mxu0 %v1083
    %1328 = vmatpush.bf16.msra.mxu0 %v1075
    %1329 = vmatpush.bf16.msra.mxu0 %v1067
    %1330 = vmatmul.bf16.gmra.mxu0 %v488
    %v1331 = vpop.f32.mrf.mxu0
    %v1332 = vadd.f32 %v1319, %v1331
    %v1333 = vpop.f32.mrf.mxu0
    %1334 = vdwg.mxu0
    %1335 = vmatpush.bf16.msra.mxu0 %v1060
    %1336 = vmatpush.bf16.msra.mxu0 %v1052
    %1337 = vmatpush.bf16.msra.mxu0 %v1044
    %1338 = vmatpush.bf16.msra.mxu0 %v1036
    %1339 = vmatpush.bf16.msra.mxu0 %v1028
    %1340 = vmatpush.bf16.msra.mxu0 %v1020
    %1341 = vmatpush.bf16.msra.mxu0 %v1012
    %1342 = vmatpush.bf16.msra.mxu0 %v1004
    %1343 = vmatmul.bf16.gmra.mxu0 %v488
    %v1344 = vpop.f32.mrf.mxu0
    %v1345 = vadd.f32 0.0, %v1344
    %v1346 = vpop.f32.mrf.mxu0
    %1347 = vdwg.mxu0
    %1348 = vmatpush.bf16.msra.mxu0 %v1124
    %1349 = vmatpush.bf16.msra.mxu0 %v1116
    %1350 = vmatpush.bf16.msra.mxu0 %v1108
    %1351 = vmatpush.bf16.msra.mxu0 %v1100
    %1352 = vmatpush.bf16.msra.mxu0 %v1092
    %1353 = vmatpush.bf16.msra.mxu0 %v1084
    %1354 = vmatpush.bf16.msra.mxu0 %v1076
    %1355 = vmatpush.bf16.msra.mxu0 %v1068
    %1356 = vmatmul.bf16.gmra.mxu0 %v488
    %v1357 = vpop.f32.mrf.mxu0
    %v1358 = vadd.f32 %v1345, %v1357
    %v1359 = vpop.f32.mrf.mxu0
    %1360 = vdwg.mxu0
    %1361 = vmatpush.bf16.msra.mxu0 %v1061
    %1362 = vmatpush.bf16.msra.mxu0 %v1053
    %1363 = vmatpush.bf16.msra.mxu0 %v1045
    %1364 = vmatpush.bf16.msra.mxu0 %v1037
    %1365 = vmatpush.bf16.msra.mxu0 %v1029
    %1366 = vmatpush.bf16.msra.mxu0 %v1021
    %1367 = vmatpush.bf16.msra.mxu0 %v1013
    %1368 = vmatpush.bf16.msra.mxu0 %v1005
    %1369 = vmatmul.bf16.gmra.mxu0 %v488
    %v1370 = vpop.f32.mrf.mxu0
    %v1371 = vadd.f32 0.0, %v1370
    %v1372 = vpop.f32.mrf.mxu0
    %1373 = vdwg.mxu0
    %1374 = vmatpush.bf16.msra.mxu0 %v1125
    %1375 = vmatpush.bf16.msra.mxu0 %v1117
    %1376 = vmatpush.bf16.msra.mxu0 %v1109
    %1377 = vmatpush.bf16.msra.mxu0 %v1101
    %1378 = vmatpush.bf16.msra.mxu0 %v1093
    %1379 = vmatpush.bf16.msra.mxu0 %v1085
    %1380 = vmatpush.bf16.msra.mxu0 %v1077
    %1381 = vmatpush.bf16.msra.mxu0 %v1069
    %1382 = vmatmul.bf16.gmra.mxu0 %v488
    %v1383 = vpop.f32.mrf.mxu0
    %v1384 = vadd.f32 %v1371, %v1383
    %v1385 = vpop.f32.mrf.mxu0
    %1386 = vdwg.mxu0
    %1387 = vmatpush.bf16.msra.mxu0 %v1062
    %1388 = vmatpush.bf16.msra.mxu0 %v1054
    %1389 = vmatpush.bf16.msra.mxu0 %v1046
    %1390 = vmatpush.bf16.msra.mxu0 %v1038
    %1391 = vmatpush.bf16.msra.mxu0 %v1030
    %1392 = vmatpush.bf16.msra.mxu0 %v1022
    %1393 = vmatpush.bf16.msra.mxu0 %v1014
    %1394 = vmatpush.bf16.msra.mxu0 %v1006
    %1395 = vmatmul.bf16.gmra.mxu0 %v488
    %v1396 = vpop.f32.mrf.mxu0
    %v1397 = vadd.f32 0.0, %v1396
    %v1398 = vpop.f32.mrf.mxu0
    %1399 = vdwg.mxu0
    %1400 = vmatpush.bf16.msra.mxu0 %v1126
    %1401 = vmatpush.bf16.msra.mxu0 %v1118
    %1402 = vmatpush.bf16.msra.mxu0 %v1110
    %1403 = vmatpush.bf16.msra.mxu0 %v1102
    %1404 = vmatpush.bf16.msra.mxu0 %v1094
    %1405 = vmatpush.bf16.msra.mxu0 %v1086
    %1406 = vmatpush.bf16.msra.mxu0 %v1078
    %1407 = vmatpush.bf16.msra.mxu0 %v1070
    %1408 = vmatmul.bf16.gmra.mxu0 %v488
    %v1409 = vpop.f32.mrf.mxu0
    %v1410 = vadd.f32 %v1397, %v1409
    %v1411 = vpop.f32.mrf.mxu0
    %1412 = vdwg.mxu0
    %1413 = vmatpush.bf16.msra.mxu0 %v1063
    %1414 = vmatpush.bf16.msra.mxu0 %v1055
    %1415 = vmatpush.bf16.msra.mxu0 %v1047
    %1416 = vmatpush.bf16.msra.mxu0 %v1039
    %1417 = vmatpush.bf16.msra.mxu0 %v1031
    %1418 = vmatpush.bf16.msra.mxu0 %v1023
    %1419 = vmatpush.bf16.msra.mxu0 %v1015
    %1420 = vmatpush.bf16.msra.mxu0 %v1007
    %1421 = vmatmul.bf16.gmra.mxu0 %v488
    %v1422 = vpop.f32.mrf.mxu0
    %v1423 = vadd.f32 0.0, %v1422
    %v1424 = vpop.f32.mrf.mxu0
    %1425 = vdwg.mxu0
    %1426 = vmatpush.bf16.msra.mxu0 %v1127
    %1427 = vmatpush.bf16.msra.mxu0 %v1119
    %1428 = vmatpush.bf16.msra.mxu0 %v1111
    %1429 = vmatpush.bf16.msra.mxu0 %v1103
    %1430 = vmatpush.bf16.msra.mxu0 %v1095
    %1431 = vmatpush.bf16.msra.mxu0 %v1087
    %1432 = vmatpush.bf16.msra.mxu0 %v1079
    %1433 = vmatpush.bf16.msra.mxu0 %v1071
    %1434 = vmatmul.bf16.gmra.mxu0 %v488
    %v1435 = vpop.f32.mrf.mxu0
    %v1436 = vadd.f32 %v1423, %v1435
    %v1437 = vpop.f32.mrf.mxu0
    %1438 = vdwg.mxu0
    %1439 = vmatpush.bf16.msra.mxu0 %v1064
    %1440 = vmatpush.bf16.msra.mxu0 %v1056
    %1441 = vmatpush.bf16.msra.mxu0 %v1048
    %1442 = vmatpush.bf16.msra.mxu0 %v1040
    %1443 = vmatpush.bf16.msra.mxu0 %v1032
    %1444 = vmatpush.bf16.msra.mxu0 %v1024
    %1445 = vmatpush.bf16.msra.mxu0 %v1016
    %1446 = vmatpush.bf16.msra.mxu0 %v1008
    %1447 = vmatmul.bf16.gmra.mxu0 %v488
    %v1448 = vpop.f32.mrf.mxu0
    %v1449 = vadd.f32 0.0, %v1448
    %v1450 = vpop.f32.mrf.mxu0
    %1451 = vdwg.mxu0
    %1452 = vmatpush.bf16.msra.mxu0 %v1128
    %1453 = vmatpush.bf16.msra.mxu0 %v1120
    %1454 = vmatpush.bf16.msra.mxu0 %v1112
    %1455 = vmatpush.bf16.msra.mxu0 %v1104
    %1456 = vmatpush.bf16.msra.mxu0 %v1096
    %1457 = vmatpush.bf16.msra.mxu0 %v1088
    %1458 = vmatpush.bf16.msra.mxu0 %v1080
    %1459 = vmatpush.bf16.msra.mxu0 %v1072
    %1460 = vmatmul.bf16.gmra.mxu0 %v488
    %v1461 = vpop.f32.mrf.mxu0
    %v1462 = vadd.f32 %v1449, %v1461
    %v1463 = vpop.f32.mrf.mxu0
    %1464 = vdwg.mxu0
    %v1465 = vld [vmem:[#allocation2] sm:$0xff]
    %v1466 = vld [vmem:[#allocation2 + $0x8] sm:$0xff]
    %v1467 = vld [vmem:[#allocation2 + $0x10] sm:$0xff]
    %v1468 = vld [vmem:[#allocation2 + $0x18] sm:$0xff]
    %v1469 = vadd.f32 %v1465, %v1280
    %v1470 = vadd.f32 %v1466, %v1306
    %v1471 = vadd.f32 %v1467, %v1332
    %v1472 = vadd.f32 %v1468, %v1358
    %v1473 = vld [vmem:[#allocation2 + $0xe0] sm:$0xff]
    %v1474 = vld [vmem:[#allocation2 + $0xe8] sm:$0xff]
    %v1475 = vld [vmem:[#allocation2 + $0xf0] sm:$0xff]
    %v1476 = vld [vmem:[#allocation2 + $0xf8] sm:$0xff]
    %v1477 = vadd.f32 %v1473, %v1384
    %v1478 = vadd.f32 %v1474, %v1410
    %v1479 = vadd.f32 %v1475, %v1436
    %v1480 = vadd.f32 %v1476, %v1462
    %v1481 = vld [vmem:[#allocation6] sm:$0xff]
    %v1482 = vmul.f32 %v1469, 0.5
    %v1483 = vtanh.pop %v1482
    %v1484 = vmul.f32 %v1483, 0.5
    %v1485 = vadd.f32 %v1484, 0.5
    %v1486 = vmul.f32 %v1470, 0.5
    %v1487 = vtanh.pop %v1486
    %v1488 = vmul.f32 %v1487, 0.5
    %v1489 = vadd.f32 %v1488, 0.5
    %v1490 = vtanh.pop %v1471
    %v1491 = vmul.f32 %v1472, 0.5
    %v1492 = vtanh.pop %v1491
    %v1493 = vmul.f32 %v1492, 0.5
    %v1494 = vadd.f32 %v1493, 0.5
    %v1495 = vmul.f32 %v1489, 0.0
    %v1496 = vmul.f32 %v1485, %v1490
    %v1497 = vadd.f32 %v1495, %v1496
    %v1498 = vmul.f32 %v1497, %v1481
    %v1499 = vtanh.pop %v1498
    %v1500 = vmul.f32 %v1494, %v1499
    %v1501 = vld [vmem:[#allocation6 + $0x18] sm:$0xff]
    %v1502 = vmul.f32 %v1477, 0.5
    %v1503 = vtanh.pop %v1502
    %v1504 = vmul.f32 %v1503, 0.5
    %v1505 = vadd.f32 %v1504, 0.5
    %v1506 = vmul.f32 %v1478, 0.5
    %v1507 = vtanh.pop %v1506
    %v1508 = vmul.f32 %v1507, 0.5
    %v1509 = vadd.f32 %v1508, 0.5
    %v1510 = vtanh.pop %v1479
    %v1511 = vmul.f32 %v1480, 0.5
    %v1512 = vtanh.pop %v1511
    %v1513 = vmul.f32 %v1512, 0.5
    %v1514 = vadd.f32 %v1513, 0.5
    %v1515 = vmul.f32 %v1509, 0.0
    %v1516 = vmul.f32 %v1505, %v1510
    %v1517 = vadd.f32 %v1515, %v1516
    %v1518 = vmul.f32 %v1517, %v1501
    %v1519 = vtanh.pop %v1518
    %v1520 = vmul.f32 %v1514, %v1519
    %v1521 = vadd.f32 %v1500, 0.0
    %v1522 = vadd.f32 %v1520, 0.0
    %v1523 = vld [vmem:[#allocation8] sm:$0xff]
    %v1524 = vadd.f32 %v1500, %v1523
    %v1525 = vmax.f32 %v1524, -1e+30
    %v1526 = vld [vmem:[#allocation8 + $0x18] sm:$0xff]
    %v1527 = vadd.f32 %v1520, %v1526
    %v1528 = vmax.f32 %v1527, -1e+30
    %v1529 = vpack.c.bf16 %v1500, %v1500
    %v1530 = vpack.c.bf16 %v1520, %v1520
    %1531 = vmatpush.bf16.msra.mxu0 %v1057
    %1532 = vmatpush.bf16.msra.mxu0 %v1049
    %1533 = vmatpush.bf16.msra.mxu0 %v1041
    %1534 = vmatpush.bf16.msra.mxu0 %v1033
    %1535 = vmatpush.bf16.msra.mxu0 %v1025
    %1536 = vmatpush.bf16.msra.mxu0 %v1017
    %1537 = vmatpush.bf16.msra.mxu0 %v1009
    %1538 = vmatpush.bf16.msra.mxu0 %v1001
    %1539 = vmatmul.bf16.gmra.mxu0 %v1529
    %v1540 = vpop.f32.mrf.mxu0
    %v1541 = vadd.f32 0.0, %v1540
    %v1542 = vpop.f32.mrf.mxu0
    %1543 = vdwg.mxu0
    %1544 = vmatpush.bf16.msra.mxu0 %v1121
    %1545 = vmatpush.bf16.msra.mxu0 %v1113
    %1546 = vmatpush.bf16.msra.mxu0 %v1105
    %1547 = vmatpush.bf16.msra.mxu0 %v1097
    %1548 = vmatpush.bf16.msra.mxu0 %v1089
    %1549 = vmatpush.bf16.msra.mxu0 %v1081
    %1550 = vmatpush.bf16.msra.mxu0 %v1073
    %1551 = vmatpush.bf16.msra.mxu0 %v1065
    %1552 = vmatmul.bf16.gmra.mxu0 %v1530
    %v1553 = vpop.f32.mrf.mxu0
    %v1554 = vadd.f32 %v1541, %v1553
    %v1555 = vpop.f32.mrf.mxu0
    %1556 = vdwg.mxu0
    %1557 = vmatpush.bf16.msra.mxu0 %v1058
    %1558 = vmatpush.bf16.msra.mxu0 %v1050
    %1559 = vmatpush.bf16.msra.mxu0 %v1042
    %1560 = vmatpush.bf16.msra.mxu0 %v1034
    %1561 = vmatpush.bf16.msra.mxu0 %v1026
    %1562 = vmatpush.bf16.msra.mxu0 %v1018
    %1563 = vmatpush.bf16.msra.mxu0 %v1010
    %1564 = vmatpush.bf16.msra.mxu0 %v1002
    %1565 = vmatmul.bf16.gmra.mxu0 %v1529
    %v1566 = vpop.f32.mrf.mxu0
    %v1567 = vadd.f32 0.0, %v1566
    %v1568 = vpop.f32.mrf.mxu0
    %1569 = vdwg.mxu0
    %1570 = vmatpush.bf16.msra.mxu0 %v1122
    %1571 = vmatpush.bf16.msra.mxu0 %v1114
    %1572 = vmatpush.bf16.msra.mxu0 %v1106
    %1573 = vmatpush.bf16.msra.mxu0 %v1098
    %1574 = vmatpush.bf16.msra.mxu0 %v1090
    %1575 = vmatpush.bf16.msra.mxu0 %v1082
    %1576 = vmatpush.bf16.msra.mxu0 %v1074
    %1577 = vmatpush.bf16.msra.mxu0 %v1066
    %1578 = vmatmul.bf16.gmra.mxu0 %v1530
    %v1579 = vpop.f32.mrf.mxu0
    %v1580 = vadd.f32 %v1567, %v1579
    %v1581 = vpop.f32.mrf.mxu0
    %1582 = vdwg.mxu0
    %1583 = vmatpush.bf16.msra.mxu0 %v1059
    %1584 = vmatpush.bf16.msra.mxu0 %v1051
    %1585 = vmatpush.bf16.msra.mxu0 %v1043
    %1586 = vmatpush.bf16.msra.mxu0 %v1035
    %1587 = vmatpush.bf16.msra.mxu0 %v1027
    %1588 = vmatpush.bf16.msra.mxu0 %v1019
    %1589 = vmatpush.bf16.msra.mxu0 %v1011
    %1590 = vmatpush.bf16.msra.mxu0 %v1003
    %1591 = vmatmul.bf16.gmra.mxu0 %v1529
    %v1592 = vpop.f32.mrf.mxu0
    %v1593 = vadd.f32 0.0, %v1592
    %v1594 = vpop.f32.mrf.mxu0
    %1595 = vdwg.mxu0
    %1596 = vmatpush.bf16.msra.mxu0 %v1123
    %1597 = vmatpush.bf16.msra.mxu0 %v1115
    %1598 = vmatpush.bf16.msra.mxu0 %v1107
    %1599 = vmatpush.bf16.msra.mxu0 %v1099
    %1600 = vmatpush.bf16.msra.mxu0 %v1091
    %1601 = vmatpush.bf16.msra.mxu0 %v1083
    %1602 = vmatpush.bf16.msra.mxu0 %v1075
    %1603 = vmatpush.bf16.msra.mxu0 %v1067
    %1604 = vmatmul.bf16.gmra.mxu0 %v1530
    %v1605 = vpop.f32.mrf.mxu0
    %v1606 = vadd.f32 %v1593, %v1605
    %v1607 = vpop.f32.mrf.mxu0
    %1608 = vdwg.mxu0
    %1609 = vmatpush.bf16.msra.mxu0 %v1060
    %1610 = vmatpush.bf16.msra.mxu0 %v1052
    %1611 = vmatpush.bf16.msra.mxu0 %v1044
    %1612 = vmatpush.bf16.msra.mxu0 %v1036
    %1613 = vmatpush.bf16.msra.mxu0 %v1028
    %1614 = vmatpush.bf16.msra.mxu0 %v1020
    %1615 = vmatpush.bf16.msra.mxu0 %v1012
    %1616 = vmatpush.bf16.msra.mxu0 %v1004
    %1617 = vmatmul.bf16.gmra.mxu0 %v1529
    %v1618 = vpop.f32.mrf.mxu0
    %v1619 = vadd.f32 0.0, %v1618
    %v1620 = vpop.f32.mrf.mxu0
    %1621 = vdwg.mxu0
    %1622 = vmatpush.bf16.msra.mxu0 %v1124
    %1623 = vmatpush.bf16.msra.mxu0 %v1116
    %1624 = vmatpush.bf16.msra.mxu0 %v1108
    %1625 = vmatpush.bf16.msra.mxu0 %v1100
    %1626 = vmatpush.bf16.msra.mxu0 %v1092
    %1627 = vmatpush.bf16.msra.mxu0 %v1084
    %1628 = vmatpush.bf16.msra.mxu0 %v1076
    %1629 = vmatpush.bf16.msra.mxu0 %v1068
    %1630 = vmatmul.bf16.gmra.mxu0 %v1530
    %v1631 = vpop.f32.mrf.mxu0
    %v1632 = vadd.f32 %v1619, %v1631
    %v1633 = vpop.f32.mrf.mxu0
    %1634 = vdwg.mxu0
    %1635 = vmatpush.bf16.msra.mxu0 %v1061
    %1636 = vmatpush.bf16.msra.mxu0 %v1053
    %1637 = vmatpush.bf16.msra.mxu0 %v1045
    %1638 = vmatpush.bf16.msra.mxu0 %v1037
    %1639 = vmatpush.bf16.msra.mxu0 %v1029
    %1640 = vmatpush.bf16.msra.mxu0 %v1021
    %1641 = vmatpush.bf16.msra.mxu0 %v1013
    %1642 = vmatpush.bf16.msra.mxu0 %v1005
    %1643 = vmatmul.bf16.gmra.mxu0 %v1529
    %v1644 = vpop.f32.mrf.mxu0
    %v1645 = vadd.f32 0.0, %v1644
    %v1646 = vpop.f32.mrf.mxu0
    %1647 = vdwg.mxu0
    %1648 = vmatpush.bf16.msra.mxu0 %v1125
    %1649 = vmatpush.bf16.msra.mxu0 %v1117
    %1650 = vmatpush.bf16.msra.mxu0 %v1109
    %1651 = vmatpush.bf16.msra.mxu0 %v1101
    %1652 = vmatpush.bf16.msra.mxu0 %v1093
    %1653 = vmatpush.bf16.msra.mxu0 %v1085
    %1654 = vmatpush.bf16.msra.mxu0 %v1077
    %1655 = vmatpush.bf16.msra.mxu0 %v1069
    %1656 = vmatmul.bf16.gmra.mxu0 %v1530
    %v1657 = vpop.f32.mrf.mxu0
    %v1658 = vadd.f32 %v1645, %v1657
    %v1659 = vpop.f32.mrf.mxu0
    %1660 = vdwg.mxu0
    %1661 = vmatpush.bf16.msra.mxu0 %v1062
    %1662 = vmatpush.bf16.msra.mxu0 %v1054
    %1663 = vmatpush.bf16.msra.mxu0 %v1046
    %1664 = vmatpush.bf16.msra.mxu0 %v1038
    %1665 = vmatpush.bf16.msra.mxu0 %v1030
    %1666 = vmatpush.bf16.msra.mxu0 %v1022
    %1667 = vmatpush.bf16.msra.mxu0 %v1014
    %1668 = vmatpush.bf16.msra.mxu0 %v1006
    %1669 = vmatmul.bf16.gmra.mxu0 %v1529
    %v1670 = vpop.f32.mrf.mxu0
    %v1671 = vadd.f32 0.0, %v1670
    %v1672 = vpop.f32.mrf.mxu0
    %1673 = vdwg.mxu0
    %1674 = vmatpush.bf16.msra.mxu0 %v1126
    %1675 = vmatpush.bf16.msra.mxu0 %v1118
    %1676 = vmatpush.bf16.msra.mxu0 %v1110
    %1677 = vmatpush.bf16.msra.mxu0 %v1102
    %1678 = vmatpush.bf16.msra.mxu0 %v1094
    %1679 = vmatpush.bf16.msra.mxu0 %v1086
    %1680 = vmatpush.bf16.msra.mxu0 %v1078
    %1681 = vmatpush.bf16.msra.mxu0 %v1070
    %1682 = vmatmul.bf16.gmra.mxu0 %v1530
    %v1683 = vpop.f32.mrf.mxu0
    %v1684 = vadd.f32 %v1671, %v1683
    %v1685 = vpop.f32.mrf.mxu0
    %1686 = vdwg.mxu0
    %1687 = vmatpush.bf16.msra.mxu0 %v1063
    %1688 = vmatpush.bf16.msra.mxu0 %v1055
    %1689 = vmatpush.bf16.msra.mxu0 %v1047
    %1690 = vmatpush.bf16.msra.mxu0 %v1039
    %1691 = vmatpush.bf16.msra.mxu0 %v1031
    %1692 = vmatpush.bf16.msra.mxu0 %v1023
    %1693 = vmatpush.bf16.msra.mxu0 %v1015
    %1694 = vmatpush.bf16.msra.mxu0 %v1007
    %1695 = vmatmul.bf16.gmra.mxu0 %v1529
    %v1696 = vpop.f32.mrf.mxu0
    %v1697 = vadd.f32 0.0, %v1696
    %v1698 = vpop.f32.mrf.mxu0
    %1699 = vdwg.mxu0
    %1700 = vmatpush.bf16.msra.mxu0 %v1127
    %1701 = vmatpush.bf16.msra.mxu0 %v1119
    %1702 = vmatpush.bf16.msra.mxu0 %v1111
    %1703 = vmatpush.bf16.msra.mxu0 %v1103
    %1704 = vmatpush.bf16.msra.mxu0 %v1095
    %1705 = vmatpush.bf16.msra.mxu0 %v1087
    %1706 = vmatpush.bf16.msra.mxu0 %v1079
    %1707 = vmatpush.bf16.msra.mxu0 %v1071
    %1708 = vmatmul.bf16.gmra.mxu0 %v1530
    %v1709 = vpop.f32.mrf.mxu0
    %v1710 = vadd.f32 %v1697, %v1709
    %v1711 = vpop.f32.mrf.mxu0
    %1712 = vdwg.mxu0
    %1713 = vmatpush.bf16.msra.mxu0 %v1064
    %1714 = vmatpush.bf16.msra.mxu0 %v1056
    %1715 = vmatpush.bf16.msra.mxu0 %v1048
    %1716 = vmatpush.bf16.msra.mxu0 %v1040
    %1717 = vmatpush.bf16.msra.mxu0 %v1032
    %1718 = vmatpush.bf16.msra.mxu0 %v1024
    %1719 = vmatpush.bf16.msra.mxu0 %v1016
    %1720 = vmatpush.bf16.msra.mxu0 %v1008
    %1721 = vmatmul.bf16.gmra.mxu0 %v1529
    %v1722 = vpop.f32.mrf.mxu0
    %v1723 = vadd.f32 0.0, %v1722
    %v1724 = vpop.f32.mrf.mxu0
    %1725 = vdwg.mxu0
    %1726 = vmatpush.bf16.msra.mxu0 %v1128
    %1727 = vmatpush.bf16.msra.mxu0 %v1120
    %1728 = vmatpush.bf16.msra.mxu0 %v1112
    %1729 = vmatpush.bf16.msra.mxu0 %v1104
    %1730 = vmatpush.bf16.msra.mxu0 %v1096
    %1731 = vmatpush.bf16.msra.mxu0 %v1088
    %1732 = vmatpush.bf16.msra.mxu0 %v1080
    %1733 = vmatpush.bf16.msra.mxu0 %v1072
    %1734 = vmatmul.bf16.gmra.mxu0 %v1530
    %v1735 = vpop.f32.mrf.mxu0
    %v1736 = vadd.f32 %v1723, %v1735
    %v1737 = vpop.f32.mrf.mxu0
    %1738 = vdwg.mxu0
    %v1739 = vld [vmem:[#allocation2 + $0x40] sm:$0xff]
    %v1740 = vld [vmem:[#allocation2 + $0x48] sm:$0xff]
    %v1741 = vld [vmem:[#allocation2 + $0x50] sm:$0xff]
    %v1742 = vld [vmem:[#allocation2 + $0x58] sm:$0xff]
    %v1743 = vadd.f32 %v1739, %v1554
    %v1744 = vadd.f32 %v1740, %v1580
    %v1745 = vadd.f32 %v1741, %v1606
    %v1746 = vadd.f32 %v1742, %v1632
    %v1747 = vld [vmem:[#allocation2 + $0xa0] sm:$0xff]
    %v1748 = vld [vmem:[#allocation2 + $0xa8] sm:$0xff]
    %v1749 = vld [vmem:[#allocation2 + $0xb0] sm:$0xff]
    %v1750 = vld [vmem:[#allocation2 + $0xb8] sm:$0xff]
    %v1751 = vadd.f32 %v1747, %v1658
    %v1752 = vadd.f32 %v1748, %v1684
    %v1753 = vadd.f32 %v1749, %v1710
    %v1754 = vadd.f32 %v1750, %v1736
    %v1755 = vld [vmem:[#allocation6 + $0x8] sm:$0xff]
    %v1756 = vmul.f32 %v1743, 0.5
    %v1757 = vtanh.pop %v1756
    %v1758 = vmul.f32 %v1757, 0.5
    %v1759 = vadd.f32 %v1758, 0.5
    %v1760 = vmul.f32 %v1744, 0.5
    %v1761 = vtanh.pop %v1760
    %v1762 = vmul.f32 %v1761, 0.5
    %v1763 = vadd.f32 %v1762, 0.5
    %v1764 = vtanh.pop %v1745
    %v1765 = vmul.f32 %v1746, 0.5
    %v1766 = vtanh.pop %v1765
    %v1767 = vmul.f32 %v1766, 0.5
    %v1768 = vadd.f32 %v1767, 0.5
    %v1769 = vmul.f32 %v1763, %v1498
    %v1770 = vmul.f32 %v1759, %v1764
    %v1771 = vadd.f32 %v1769, %v1770
    %v1772 = vmul.f32 %v1771, %v1755
    %v1773 = vtanh.pop %v1772
    %v1774 = vmul.f32 %v1768, %v1773
    %v1775 = vld [vmem:[#allocation6 + $0x10] sm:$0xff]
    %v1776 = vmul.f32 %v1751, 0.5
    %v1777 = vtanh.pop %v1776
    %v1778 = vmul.f32 %v1777, 0.5
    %v1779 = vadd.f32 %v1778, 0.5
    %v1780 = vmul.f32 %v1752, 0.5
    %v1781 = vtanh.pop %v1780
    %v1782 = vmul.f32 %v1781, 0.5
    %v1783 = vadd.f32 %v1782, 0.5
    %v1784 = vtanh.pop %v1753
    %v1785 = vmul.f32 %v1754, 0.5
    %v1786 = vtanh.pop %v1785
    %v1787 = vmul.f32 %v1786, 0.5
    %v1788 = vadd.f32 %v1787, 0.5
    %v1789 = vmul.f32 %v1783, %v1518
    %v1790 = vmul.f32 %v1779, %v1784
    %v1791 = vadd.f32 %v1789, %v1790
    %v1792 = vmul.f32 %v1791, %v1775
    %v1793 = vtanh.pop %v1792
    %v1794 = vmul.f32 %v1788, %v1793
    %v1795 = vadd.f32 %v1521, %v1774
    %v1796 = vadd.f32 %v1522, %v1794
    %v1797 = vld [vmem:[#allocation8 + $0x8] sm:$0xff]
    %v1798 = vadd.f32 %v1774, %v1797
    %v1799 = vmax.f32 %v1525, %v1798
    %v1800 = vld [vmem:[#allocation8 + $0x10] sm:$0xff]
    %v1801 = vadd.f32 %v1794, %v1800
    %v1802 = vmax.f32 %v1528, %v1801
    %v1803 = vpack.c.bf16 %v1774, %v1774
    %v1804 = vpack.c.bf16 %v1794, %v1794
    %1805 = vmatpush.bf16.msra.mxu0 %v1057
    %1806 = vmatpush.bf16.msra.mxu0 %v1049
    %1807 = vmatpush.bf16.msra.mxu0 %v1041
    %1808 = vmatpush.bf16.msra.mxu0 %v1033
    %1809 = vmatpush.bf16.msra.mxu0 %v1025
    %1810 = vmatpush.bf16.msra.mxu0 %v1017
    %1811 = vmatpush.bf16.msra.mxu0 %v1009
    %1812 = vmatpush.bf16.msra.mxu0 %v1001
    %1813 = vmatmul.bf16.gmra.mxu0 %v1803
    %v1814 = vpop.f32.mrf.mxu0
    %v1815 = vadd.f32 0.0, %v1814
    %v1816 = vpop.f32.mrf.mxu0
    %1817 = vdwg.mxu0
    %1818 = vmatpush.bf16.msra.mxu0 %v1121
    %1819 = vmatpush.bf16.msra.mxu0 %v1113
    %1820 = vmatpush.bf16.msra.mxu0 %v1105
    %1821 = vmatpush.bf16.msra.mxu0 %v1097
    %1822 = vmatpush.bf16.msra.mxu0 %v1089
    %1823 = vmatpush.bf16.msra.mxu0 %v1081
    %1824 = vmatpush.bf16.msra.mxu0 %v1073
    %1825 = vmatpush.bf16.msra.mxu0 %v1065
    %1826 = vmatmul.bf16.gmra.mxu0 %v1804
    %v1827 = vpop.f32.mrf.mxu0
    %v1828 = vadd.f32 %v1815, %v1827
    %v1829 = vpop.f32.mrf.mxu0
    %1830 = vdwg.mxu0
    %1831 = vmatpush.bf16.msra.mxu0 %v1058
    %1832 = vmatpush.bf16.msra.mxu0 %v1050
    %1833 = vmatpush.bf16.msra.mxu0 %v1042
    %1834 = vmatpush.bf16.msra.mxu0 %v1034
    %1835 = vmatpush.bf16.msra.mxu0 %v1026
    %1836 = vmatpush.bf16.msra.mxu0 %v1018
    %1837 = vmatpush.bf16.msra.mxu0 %v1010
    %1838 = vmatpush.bf16.msra.mxu0 %v1002
    %1839 = vmatmul.bf16.gmra.mxu0 %v1803
    %v1840 = vpop.f32.mrf.mxu0
    %v1841 = vadd.f32 0.0, %v1840
    %v1842 = vpop.f32.mrf.mxu0
    %1843 = vdwg.mxu0
    %1844 = vmatpush.bf16.msra.mxu0 %v1122
    %1845 = vmatpush.bf16.msra.mxu0 %v1114
    %1846 = vmatpush.bf16.msra.mxu0 %v1106
    %1847 = vmatpush.bf16.msra.mxu0 %v1098
    %1848 = vmatpush.bf16.msra.mxu0 %v1090
    %1849 = vmatpush.bf16.msra.mxu0 %v1082
    %1850 = vmatpush.bf16.msra.mxu0 %v1074
    %1851 = vmatpush.bf16.msra.mxu0 %v1066
    %1852 = vmatmul.bf16.gmra.mxu0 %v1804
    %v1853 = vpop.f32.mrf.mxu0
    %v1854 = vadd.f32 %v1841, %v1853
    %v1855 = vpop.f32.mrf.mxu0
    %1856 = vdwg.mxu0
    %1857 = vmatpush.bf16.msra.mxu0 %v1059
    %1858 = vmatpush.bf16.msra.mxu0 %v1051
    %1859 = vmatpush.bf16.msra.mxu0 %v1043
    %1860 = vmatpush.bf16.msra.mxu0 %v1035
    %1861 = vmatpush.bf16.msra.mxu0 %v1027
    %1862 = vmatpush.bf16.msra.mxu0 %v1019
    %1863 = vmatpush.bf16.msra.mxu0 %v1011
    %1864 = vmatpush.bf16.msra.mxu0 %v1003
    %1865 = vmatmul.bf16.gmra.mxu0 %v1803
    %v1866 = vpop.f32.mrf.mxu0
    %v1867 = vadd.f32 0.0, %v1866
    %v1868 = vpop.f32.mrf.mxu0
    %1869 = vdwg.mxu0
    %1870 = vmatpush.bf16.msra.mxu0 %v1123
    %1871 = vmatpush.bf16.msra.mxu0 %v1115
    %1872 = vmatpush.bf16.msra.mxu0 %v1107
    %1873 = vmatpush.bf16.msra.mxu0 %v1099
    %1874 = vmatpush.bf16.msra.mxu0 %v1091
    %1875 = vmatpush.bf16.msra.mxu0 %v1083
    %1876 = vmatpush.bf16.msra.mxu0 %v1075
    %1877 = vmatpush.bf16.msra.mxu0 %v1067
    %1878 = vmatmul.bf16.gmra.mxu0 %v1804
    %v1879 = vpop.f32.mrf.mxu0
    %v1880 = vadd.f32 %v1867, %v1879
    %v1881 = vpop.f32.mrf.mxu0
    %1882 = vdwg.mxu0
    %1883 = vmatpush.bf16.msra.mxu0 %v1060
    %1884 = vmatpush.bf16.msra.mxu0 %v1052
    %1885 = vmatpush.bf16.msra.mxu0 %v1044
    %1886 = vmatpush.bf16.msra.mxu0 %v1036
    %1887 = vmatpush.bf16.msra.mxu0 %v1028
    %1888 = vmatpush.bf16.msra.mxu0 %v1020
    %1889 = vmatpush.bf16.msra.mxu0 %v1012
    %1890 = vmatpush.bf16.msra.mxu0 %v1004
    %1891 = vmatmul.bf16.gmra.mxu0 %v1803
    %v1892 = vpop.f32.mrf.mxu0
    %v1893 = vadd.f32 0.0, %v1892
    %v1894 = vpop.f32.mrf.mxu0
    %1895 = vdwg.mxu0
    %1896 = vmatpush.bf16.msra.mxu0 %v1124
    %1897 = vmatpush.bf16.msra.mxu0 %v1116
    %1898 = vmatpush.bf16.msra.mxu0 %v1108
    %1899 = vmatpush.bf16.msra.mxu0 %v1100
    %1900 = vmatpush.bf16.msra.mxu0 %v1092
    %1901 = vmatpush.bf16.msra.mxu0 %v1084
    %1902 = vmatpush.bf16.msra.mxu0 %v1076
    %1903 = vmatpush.bf16.msra.mxu0 %v1068
    %1904 = vmatmul.bf16.gmra.mxu0 %v1804
    %v1905 = vpop.f32.mrf.mxu0
    %v1906 = vadd.f32 %v1893, %v1905
    %v1907 = vpop.f32.mrf.mxu0
    %1908 = vdwg.mxu0
    %1909 = vmatpush.bf16.msra.mxu0 %v1061
    %1910 = vmatpush.bf16.msra.mxu0 %v1053
    %1911 = vmatpush.bf16.msra.mxu0 %v1045
    %1912 = vmatpush.bf16.msra.mxu0 %v1037
    %1913 = vmatpush.bf16.msra.mxu0 %v1029
    %1914 = vmatpush.bf16.msra.mxu0 %v1021
    %1915 = vmatpush.bf16.msra.mxu0 %v1013
    %1916 = vmatpush.bf16.msra.mxu0 %v1005
    %1917 = vmatmul.bf16.gmra.mxu0 %v1803
    %v1918 = vpop.f32.mrf.mxu0
    %v1919 = vadd.f32 0.0, %v1918
    %v1920 = vpop.f32.mrf.mxu0
    %1921 = vdwg.mxu0
    %1922 = vmatpush.bf16.msra.mxu0 %v1125
    %1923 = vmatpush.bf16.msra.mxu0 %v1117
    %1924 = vmatpush.bf16.msra.mxu0 %v1109
    %1925 = vmatpush.bf16.msra.mxu0 %v1101
    %1926 = vmatpush.bf16.msra.mxu0 %v1093
    %1927 = vmatpush.bf16.msra.mxu0 %v1085
    %1928 = vmatpush.bf16.msra.mxu0 %v1077
    %1929 = vmatpush.bf16.msra.mxu0 %v1069
    %1930 = vmatmul.bf16.gmra.mxu0 %v1804
    %v1931 = vpop.f32.mrf.mxu0
    %v1932 = vadd.f32 %v1919, %v1931
    %v1933 = vpop.f32.mrf.mxu0
    %1934 = vdwg.mxu0
    %1935 = vmatpush.bf16.msra.mxu0 %v1062
    %1936 = vmatpush.bf16.msra.mxu0 %v1054
    %1937 = vmatpush.bf16.msra.mxu0 %v1046
    %1938 = vmatpush.bf16.msra.mxu0 %v1038
    %1939 = vmatpush.bf16.msra.mxu0 %v1030
    %1940 = vmatpush.bf16.msra.mxu0 %v1022
    %1941 = vmatpush.bf16.msra.mxu0 %v1014
    %1942 = vmatpush.bf16.msra.mxu0 %v1006
    %1943 = vmatmul.bf16.gmra.mxu0 %v1803
    %v1944 = vpop.f32.mrf.mxu0
    %v1945 = vadd.f32 0.0, %v1944
    %v1946 = vpop.f32.mrf.mxu0
    %1947 = vdwg.mxu0
    %1948 = vmatpush.bf16.msra.mxu0 %v1126
    %1949 = vmatpush.bf16.msra.mxu0 %v1118
    %1950 = vmatpush.bf16.msra.mxu0 %v1110
    %1951 = vmatpush.bf16.msra.mxu0 %v1102
    %1952 = vmatpush.bf16.msra.mxu0 %v1094
    %1953 = vmatpush.bf16.msra.mxu0 %v1086
    %1954 = vmatpush.bf16.msra.mxu0 %v1078
    %1955 = vmatpush.bf16.msra.mxu0 %v1070
    %1956 = vmatmul.bf16.gmra.mxu0 %v1804
    %v1957 = vpop.f32.mrf.mxu0
    %v1958 = vadd.f32 %v1945, %v1957
    %v1959 = vpop.f32.mrf.mxu0
    %1960 = vdwg.mxu0
    %1961 = vmatpush.bf16.msra.mxu0 %v1063
    %1962 = vmatpush.bf16.msra.mxu0 %v1055
    %1963 = vmatpush.bf16.msra.mxu0 %v1047
    %1964 = vmatpush.bf16.msra.mxu0 %v1039
    %1965 = vmatpush.bf16.msra.mxu0 %v1031
    %1966 = vmatpush.bf16.msra.mxu0 %v1023
    %1967 = vmatpush.bf16.msra.mxu0 %v1015
    %1968 = vmatpush.bf16.msra.mxu0 %v1007
    %1969 = vmatmul.bf16.gmra.mxu0 %v1803
    %v1970 = vpop.f32.mrf.mxu0
    %v1971 = vadd.f32 0.0, %v1970
    %v1972 = vpop.f32.mrf.mxu0
    %1973 = vdwg.mxu0
    %1974 = vmatpush.bf16.msra.mxu0 %v1127
    %1975 = vmatpush.bf16.msra.mxu0 %v1119
    %1976 = vmatpush.bf16.msra.mxu0 %v1111
    %1977 = vmatpush.bf16.msra.mxu0 %v1103
    %1978 = vmatpush.bf16.msra.mxu0 %v1095
    %1979 = vmatpush.bf16.msra.mxu0 %v1087
    %1980 = vmatpush.bf16.msra.mxu0 %v1079
    %1981 = vmatpush.bf16.msra.mxu0 %v1071
    %1982 = vmatmul.bf16.gmra.mxu0 %v1804
    %v1983 = vpop.f32.mrf.mxu0
    %v1984 = vadd.f32 %v1971, %v1983
    %v1985 = vpop.f32.mrf.mxu0
    %1986 = vdwg.mxu0
    %1987 = vmatpush.bf16.msra.mxu0 %v1064
    %1988 = vmatpush.bf16.msra.mxu0 %v1056
    %1989 = vmatpush.bf16.msra.mxu0 %v1048
    %1990 = vmatpush.bf16.msra.mxu0 %v1040
    %1991 = vmatpush.bf16.msra.mxu0 %v1032
    %1992 = vmatpush.bf16.msra.mxu0 %v1024
    %1993 = vmatpush.bf16.msra.mxu0 %v1016
    %1994 = vmatpush.bf16.msra.mxu0 %v1008
    %1995 = vmatmul.bf16.gmra.mxu0 %v1803
    %v1996 = vpop.f32.mrf.mxu0
    %v1997 = vadd.f32 0.0, %v1996
    %v1998 = vpop.f32.mrf.mxu0
    %1999 = vdwg.mxu0
    %2000 = vmatpush.bf16.msra.mxu0 %v1128
    %2001 = vmatpush.bf16.msra.mxu0 %v1120
    %2002 = vmatpush.bf16.msra.mxu0 %v1112
    %2003 = vmatpush.bf16.msra.mxu0 %v1104
    %2004 = vmatpush.bf16.msra.mxu0 %v1096
    %2005 = vmatpush.bf16.msra.mxu0 %v1088
    %2006 = vmatpush.bf16.msra.mxu0 %v1080
    %2007 = vmatpush.bf16.msra.mxu0 %v1072
    %2008 = vmatmul.bf16.gmra.mxu0 %v1804
    %v2009 = vpop.f32.mrf.mxu0
    %v2010 = vadd.f32 %v1997, %v2009
    %v2011 = vpop.f32.mrf.mxu0
    %2012 = vdwg.mxu0
    %v2013 = vld [vmem:[#allocation2 + $0x80] sm:$0xff]
    %v2014 = vld [vmem:[#allocation2 + $0x88] sm:$0xff]
    %v2015 = vld [vmem:[#allocation2 + $0x90] sm:$0xff]
    %v2016 = vld [vmem:[#allocation2 + $0x98] sm:$0xff]
    %v2017 = vadd.f32 %v2013, %v1828
    %v2018 = vadd.f32 %v2014, %v1854
    %v2019 = vadd.f32 %v2015, %v1880
    %v2020 = vadd.f32 %v2016, %v1906
    %v2021 = vld [vmem:[#allocation2 + $0x60] sm:$0xff]
    %v2022 = vld [vmem:[#allocation2 + $0x68] sm:$0xff]
    %v2023 = vld [vmem:[#allocation2 + $0x70] sm:$0xff]
    %v2024 = vld [vmem:[#allocation2 + $0x78] sm:$0xff]
    %v2025 = vadd.f32 %v2021, %v1932
    %v2026 = vadd.f32 %v2022, %v1958
    %v2027 = vadd.f32 %v2023, %v1984
    %v2028 = vadd.f32 %v2024, %v2010
    %v2029 = vmul.f32 %v2017, 0.5
    %v2030 = vtanh.pop %v2029
    %v2031 = vmul.f32 %v2030, 0.5
    %v2032 = vadd.f32 %v2031, 0.5
    %v2033 = vmul.f32 %v2018, 0.5
    %v2034 = vtanh.pop %v2033
    %v2035 = vmul.f32 %v2034, 0.5
    %v2036 = vadd.f32 %v2035, 0.5
    %v2037 = vtanh.pop %v2019
    %v2038 = vmul.f32 %v2020, 0.5
    %v2039 = vtanh.pop %v2038
    %v2040 = vmul.f32 %v2039, 0.5
    %v2041 = vadd.f32 %v2040, 0.5
    %v2042 = vmul.f32 %v2036, %v1772
    %v2043 = vmul.f32 %v2032, %v2037
    %v2044 = vadd.f32 %v2042, %v2043
    %v2045 = vmul.f32 %v2044, %v1775
    %v2046 = vtanh.pop %v2045
    %v2047 = vmul.f32 %v2041, %v2046
    %v2048 = vmul.f32 %v2025, 0.5
    %v2049 = vtanh.pop %v2048
    %v2050 = vmul.f32 %v2049, 0.5
    %v2051 = vadd.f32 %v2050, 0.5
    %v2052 = vmul.f32 %v2026, 0.5
    %v2053 = vtanh.pop %v2052
    %v2054 = vmul.f32 %v2053, 0.5
    %v2055 = vadd.f32 %v2054, 0.5
    %v2056 = vtanh.pop %v2027
    %v2057 = vmul.f32 %v2028, 0.5
    %v2058 = vtanh.pop %v2057
    %v2059 = vmul.f32 %v2058, 0.5
    %v2060 = vadd.f32 %v2059, 0.5
    %v2061 = vmul.f32 %v2055, %v1792
    %v2062 = vmul.f32 %v2051, %v2056
    %v2063 = vadd.f32 %v2061, %v2062
    %v2064 = vmul.f32 %v2063, %v1755
    %v2065 = vtanh.pop %v2064
    %v2066 = vmul.f32 %v2060, %v2065
    %v2067 = vadd.f32 %v1795, %v2047
    %v2068 = vadd.f32 %v1796, %v2066
    %v2069 = vadd.f32 %v2047, %v1800
    %v2070 = vmax.f32 %v1799, %v2069
    %v2071 = vadd.f32 %v2066, %v1797
    %v2072 = vmax.f32 %v1802, %v2071
    %v2073 = vpack.c.bf16 %v2047, %v2047
    %v2074 = vpack.c.bf16 %v2066, %v2066
    %2075 = vmatpush.bf16.msra.mxu0 %v1057
    %2076 = vmatpush.bf16.msra.mxu0 %v1049
    %2077 = vmatpush.bf16.msra.mxu0 %v1041
    %2078 = vmatpush.bf16.msra.mxu0 %v1033
    %2079 = vmatpush.bf16.msra.mxu0 %v1025
    %2080 = vmatpush.bf16.msra.mxu0 %v1017
    %2081 = vmatpush.bf16.msra.mxu0 %v1009
    %2082 = vmatpush.bf16.msra.mxu0 %v1001
    %2083 = vmatmul.bf16.gmra.mxu0 %v2073
    %v2084 = vpop.f32.mrf.mxu0
    %v2085 = vadd.f32 0.0, %v2084
    %v2086 = vpop.f32.mrf.mxu0
    %2087 = vdwg.mxu0
    %2088 = vmatpush.bf16.msra.mxu0 %v1121
    %2089 = vmatpush.bf16.msra.mxu0 %v1113
    %2090 = vmatpush.bf16.msra.mxu0 %v1105
    %2091 = vmatpush.bf16.msra.mxu0 %v1097
    %2092 = vmatpush.bf16.msra.mxu0 %v1089
    %2093 = vmatpush.bf16.msra.mxu0 %v1081
    %2094 = vmatpush.bf16.msra.mxu0 %v1073
    %2095 = vmatpush.bf16.msra.mxu0 %v1065
    %2096 = vmatmul.bf16.gmra.mxu0 %v2074
    %v2097 = vpop.f32.mrf.mxu0
    %v2098 = vadd.f32 %v2085, %v2097
    %v2099 = vpop.f32.mrf.mxu0
    %2100 = vdwg.mxu0
    %2101 = vmatpush.bf16.msra.mxu0 %v1058
    %2102 = vmatpush.bf16.msra.mxu0 %v1050
    %2103 = vmatpush.bf16.msra.mxu0 %v1042
    %2104 = vmatpush.bf16.msra.mxu0 %v1034
    %2105 = vmatpush.bf16.msra.mxu0 %v1026
    %2106 = vmatpush.bf16.msra.mxu0 %v1018
    %2107 = vmatpush.bf16.msra.mxu0 %v1010
    %2108 = vmatpush.bf16.msra.mxu0 %v1002
    %2109 = vmatmul.bf16.gmra.mxu0 %v2073
    %v2110 = vpop.f32.mrf.mxu0
    %v2111 = vadd.f32 0.0, %v2110
    %v2112 = vpop.f32.mrf.mxu0
    %2113 = vdwg.mxu0
    %2114 = vmatpush.bf16.msra.mxu0 %v1122
    %2115 = vmatpush.bf16.msra.mxu0 %v1114
    %2116 = vmatpush.bf16.msra.mxu0 %v1106
    %2117 = vmatpush.bf16.msra.mxu0 %v1098
    %2118 = vmatpush.bf16.msra.mxu0 %v1090
    %2119 = vmatpush.bf16.msra.mxu0 %v1082
    %2120 = vmatpush.bf16.msra.mxu0 %v1074
    %2121 = vmatpush.bf16.msra.mxu0 %v1066
    %2122 = vmatmul.bf16.gmra.mxu0 %v2074
    %v2123 = vpop.f32.mrf.mxu0
    %v2124 = vadd.f32 %v2111, %v2123
    %v2125 = vpop.f32.mrf.mxu0
    %2126 = vdwg.mxu0
    %2127 = vmatpush.bf16.msra.mxu0 %v1059
    %2128 = vmatpush.bf16.msra.mxu0 %v1051
    %2129 = vmatpush.bf16.msra.mxu0 %v1043
    %2130 = vmatpush.bf16.msra.mxu0 %v1035
    %2131 = vmatpush.bf16.msra.mxu0 %v1027
    %2132 = vmatpush.bf16.msra.mxu0 %v1019
    %2133 = vmatpush.bf16.msra.mxu0 %v1011
    %2134 = vmatpush.bf16.msra.mxu0 %v1003
    %2135 = vmatmul.bf16.gmra.mxu0 %v2073
    %v2136 = vpop.f32.mrf.mxu0
    %v2137 = vadd.f32 0.0, %v2136
    %v2138 = vpop.f32.mrf.mxu0
    %2139 = vdwg.mxu0
    %2140 = vmatpush.bf16.msra.mxu0 %v1123
    %2141 = vmatpush.bf16.msra.mxu0 %v1115
    %2142 = vmatpush.bf16.msra.mxu0 %v1107
    %2143 = vmatpush.bf16.msra.mxu0 %v1099
    %2144 = vmatpush.bf16.msra.mxu0 %v1091
    %2145 = vmatpush.bf16.msra.mxu0 %v1083
    %2146 = vmatpush.bf16.msra.mxu0 %v1075
    %2147 = vmatpush.bf16.msra.mxu0 %v1067
    %2148 = vmatmul.bf16.gmra.mxu0 %v2074
    %v2149 = vpop.f32.mrf.mxu0
    %v2150 = vadd.f32 %v2137, %v2149
    %v2151 = vpop.f32.mrf.mxu0
    %2152 = vdwg.mxu0
    %2153 = vmatpush.bf16.msra.mxu0 %v1060
    %2154 = vmatpush.bf16.msra.mxu0 %v1052
    %2155 = vmatpush.bf16.msra.mxu0 %v1044
    %2156 = vmatpush.bf16.msra.mxu0 %v1036
    %2157 = vmatpush.bf16.msra.mxu0 %v1028
    %2158 = vmatpush.bf16.msra.mxu0 %v1020
    %2159 = vmatpush.bf16.msra.mxu0 %v1012
    %2160 = vmatpush.bf16.msra.mxu0 %v1004
    %2161 = vmatmul.bf16.gmra.mxu0 %v2073
    %v2162 = vpop.f32.mrf.mxu0
    %v2163 = vadd.f32 0.0, %v2162
    %v2164 = vpop.f32.mrf.mxu0
    %2165 = vdwg.mxu0
    %2166 = vmatpush.bf16.msra.mxu0 %v1124
    %2167 = vmatpush.bf16.msra.mxu0 %v1116
    %2168 = vmatpush.bf16.msra.mxu0 %v1108
    %2169 = vmatpush.bf16.msra.mxu0 %v1100
    %2170 = vmatpush.bf16.msra.mxu0 %v1092
    %2171 = vmatpush.bf16.msra.mxu0 %v1084
    %2172 = vmatpush.bf16.msra.mxu0 %v1076
    %2173 = vmatpush.bf16.msra.mxu0 %v1068
    %2174 = vmatmul.bf16.gmra.mxu0 %v2074
    %v2175 = vpop.f32.mrf.mxu0
    %v2176 = vadd.f32 %v2163, %v2175
    %v2177 = vpop.f32.mrf.mxu0
    %2178 = vdwg.mxu0
    %2179 = vmatpush.bf16.msra.mxu0 %v1061
    %2180 = vmatpush.bf16.msra.mxu0 %v1053
    %2181 = vmatpush.bf16.msra.mxu0 %v1045
    %2182 = vmatpush.bf16.msra.mxu0 %v1037
    %2183 = vmatpush.bf16.msra.mxu0 %v1029
    %2184 = vmatpush.bf16.msra.mxu0 %v1021
    %2185 = vmatpush.bf16.msra.mxu0 %v1013
    %2186 = vmatpush.bf16.msra.mxu0 %v1005
    %2187 = vmatmul.bf16.gmra.mxu0 %v2073
    %v2188 = vpop.f32.mrf.mxu0
    %v2189 = vadd.f32 0.0, %v2188
    %v2190 = vpop.f32.mrf.mxu0
    %2191 = vdwg.mxu0
    %2192 = vmatpush.bf16.msra.mxu0 %v1125
    %2193 = vmatpush.bf16.msra.mxu0 %v1117
    %2194 = vmatpush.bf16.msra.mxu0 %v1109
    %2195 = vmatpush.bf16.msra.mxu0 %v1101
    %2196 = vmatpush.bf16.msra.mxu0 %v1093
    %2197 = vmatpush.bf16.msra.mxu0 %v1085
    %2198 = vmatpush.bf16.msra.mxu0 %v1077
    %2199 = vmatpush.bf16.msra.mxu0 %v1069
    %2200 = vmatmul.bf16.gmra.mxu0 %v2074
    %v2201 = vpop.f32.mrf.mxu0
    %v2202 = vadd.f32 %v2189, %v2201
    %v2203 = vpop.f32.mrf.mxu0
    %2204 = vdwg.mxu0
    %2205 = vmatpush.bf16.msra.mxu0 %v1062
    %2206 = vmatpush.bf16.msra.mxu0 %v1054
    %2207 = vmatpush.bf16.msra.mxu0 %v1046
    %2208 = vmatpush.bf16.msra.mxu0 %v1038
    %2209 = vmatpush.bf16.msra.mxu0 %v1030
    %2210 = vmatpush.bf16.msra.mxu0 %v1022
    %2211 = vmatpush.bf16.msra.mxu0 %v1014
    %2212 = vmatpush.bf16.msra.mxu0 %v1006
    %2213 = vmatmul.bf16.gmra.mxu0 %v2073
    %v2214 = vpop.f32.mrf.mxu0
    %v2215 = vadd.f32 0.0, %v2214
    %v2216 = vpop.f32.mrf.mxu0
    %2217 = vdwg.mxu0
    %2218 = vmatpush.bf16.msra.mxu0 %v1126
    %2219 = vmatpush.bf16.msra.mxu0 %v1118
    %2220 = vmatpush.bf16.msra.mxu0 %v1110
    %2221 = vmatpush.bf16.msra.mxu0 %v1102
    %2222 = vmatpush.bf16.msra.mxu0 %v1094
    %2223 = vmatpush.bf16.msra.mxu0 %v1086
    %2224 = vmatpush.bf16.msra.mxu0 %v1078
    %2225 = vmatpush.bf16.msra.mxu0 %v1070
    %2226 = vmatmul.bf16.gmra.mxu0 %v2074
    %v2227 = vpop.f32.mrf.mxu0
    %v2228 = vadd.f32 %v2215, %v2227
    %v2229 = vpop.f32.mrf.mxu0
    %2230 = vdwg.mxu0
    %2231 = vmatpush.bf16.msra.mxu0 %v1063
    %2232 = vmatpush.bf16.msra.mxu0 %v1055
    %2233 = vmatpush.bf16.msra.mxu0 %v1047
    %2234 = vmatpush.bf16.msra.mxu0 %v1039
    %2235 = vmatpush.bf16.msra.mxu0 %v1031
    %2236 = vmatpush.bf16.msra.mxu0 %v1023
    %2237 = vmatpush.bf16.msra.mxu0 %v1015
    %2238 = vmatpush.bf16.msra.mxu0 %v1007
    %2239 = vmatmul.bf16.gmra.mxu0 %v2073
    %v2240 = vpop.f32.mrf.mxu0
    %v2241 = vadd.f32 0.0, %v2240
    %v2242 = vpop.f32.mrf.mxu0
    %2243 = vdwg.mxu0
    %2244 = vmatpush.bf16.msra.mxu0 %v1127
    %2245 = vmatpush.bf16.msra.mxu0 %v1119
    %2246 = vmatpush.bf16.msra.mxu0 %v1111
    %2247 = vmatpush.bf16.msra.mxu0 %v1103
    %2248 = vmatpush.bf16.msra.mxu0 %v1095
    %2249 = vmatpush.bf16.msra.mxu0 %v1087
    %2250 = vmatpush.bf16.msra.mxu0 %v1079
    %2251 = vmatpush.bf16.msra.mxu0 %v1071
    %2252 = vmatmul.bf16.gmra.mxu0 %v2074
    %v2253 = vpop.f32.mrf.mxu0
    %v2254 = vadd.f32 %v2241, %v2253
    %v2255 = vpop.f32.mrf.mxu0
    %2256 = vdwg.mxu0
    %2257 = vmatpush.bf16.msra.mxu0 %v1064
    %2258 = vmatpush.bf16.msra.mxu0 %v1056
    %2259 = vmatpush.bf16.msra.mxu0 %v1048
    %2260 = vmatpush.bf16.msra.mxu0 %v1040
    %2261 = vmatpush.bf16.msra.mxu0 %v1032
    %2262 = vmatpush.bf16.msra.mxu0 %v1024
    %2263 = vmatpush.bf16.msra.mxu0 %v1016
    %2264 = vmatpush.bf16.msra.mxu0 %v1008
    %2265 = vmatmul.bf16.gmra.mxu0 %v2073
    %v2266 = vpop.f32.mrf.mxu0
    %v2267 = vadd.f32 0.0, %v2266
    %v2268 = vpop.f32.mrf.mxu0
    %2269 = vdwg.mxu0
    %2270 = vmatpush.bf16.msra.mxu0 %v1128
    %2271 = vmatpush.bf16.msra.mxu0 %v1120
    %2272 = vmatpush.bf16.msra.mxu0 %v1112
    %2273 = vmatpush.bf16.msra.mxu0 %v1104
    %2274 = vmatpush.bf16.msra.mxu0 %v1096
    %2275 = vmatpush.bf16.msra.mxu0 %v1088
    %2276 = vmatpush.bf16.msra.mxu0 %v1080
    %2277 = vmatpush.bf16.msra.mxu0 %v1072
    %2278 = vmatmul.bf16.gmra.mxu0 %v2074
    %v2279 = vpop.f32.mrf.mxu0
    %v2280 = vadd.f32 %v2267, %v2279
    %v2281 = vpop.f32.mrf.mxu0
    %2282 = vdwg.mxu0
    %v2283 = vld [vmem:[#allocation2 + $0xc0] sm:$0xff]
    %v2284 = vld [vmem:[#allocation2 + $0xc8] sm:$0xff]
    %v2285 = vld [vmem:[#allocation2 + $0xd0] sm:$0xff]
    %v2286 = vld [vmem:[#allocation2 + $0xd8] sm:$0xff]
    %v2287 = vadd.f32 %v2283, %v2098
    %v2288 = vadd.f32 %v2284, %v2124
    %v2289 = vadd.f32 %v2285, %v2150
    %v2290 = vadd.f32 %v2286, %v2176
    %v2291 = vld [vmem:[#allocation2 + $0x20] sm:$0xff]
    %v2292 = vld [vmem:[#allocation2 + $0x28] sm:$0xff]
    %v2293 = vld [vmem:[#allocation2 + $0x30] sm:$0xff]
    %v2294 = vld [vmem:[#allocation2 + $0x38] sm:$0xff]
    %v2295 = vadd.f32 %v2291, %v2202
    %v2296 = vadd.f32 %v2292, %v2228
    %v2297 = vadd.f32 %v2293, %v2254
    %v2298 = vadd.f32 %v2294, %v2280
    %v2299 = vmul.f32 %v2287, 0.5
    %v2300 = vtanh.pop %v2299
    %v2301 = vmul.f32 %v2300, 0.5
    %v2302 = vadd.f32 %v2301, 0.5
    %v2303 = vmul.f32 %v2288, 0.5
    %v2304 = vtanh.pop %v2303
    %v2305 = vmul.f32 %v2304, 0.5
    %v2306 = vadd.f32 %v2305, 0.5
    %v2307 = vtanh.pop %v2289
    %v2308 = vmul.f32 %v2290, 0.5
    %v2309 = vtanh.pop %v2308
    %v2310 = vmul.f32 %v2309, 0.5
    %v2311 = vadd.f32 %v2310, 0.5
    %v2312 = vmul.f32 %v2306, %v2045
    %v2313 = vmul.f32 %v2302, %v2307
    %v2314 = vadd.f32 %v2312, %v2313
    %v2315 = vmul.f32 %v2314, %v1501
    %v2316 = vtanh.pop %v2315
    %v2317 = vmul.f32 %v2311, %v2316
    %v2318 = vmul.f32 %v2295, 0.5
    %v2319 = vtanh.pop %v2318
    %v2320 = vmul.f32 %v2319, 0.5
    %v2321 = vadd.f32 %v2320, 0.5
    %v2322 = vmul.f32 %v2296, 0.5
    %v2323 = vtanh.pop %v2322
    %v2324 = vmul.f32 %v2323, 0.5
    %v2325 = vadd.f32 %v2324, 0.5
    %v2326 = vtanh.pop %v2297
    %v2327 = vmul.f32 %v2298, 0.5
    %v2328 = vtanh.pop %v2327
    %v2329 = vmul.f32 %v2328, 0.5
    %v2330 = vadd.f32 %v2329, 0.5
    %v2331 = vmul.f32 %v2325, %v2064
    %v2332 = vmul.f32 %v2321, %v2326
    %v2333 = vadd.f32 %v2331, %v2332
    %v2334 = vmul.f32 %v2333, %v1481
    %v2335 = vtanh.pop %v2334
    %v2336 = vmul.f32 %v2330, %v2335
    %v2337 = vadd.f32 %v2067, %v2317
    %v2338 = vadd.f32 %v2068, %v2336
    %v2339 = vadd.f32 %v2317, %v1526
    %v2340 = vmax.f32 %v2070, %v2339
    %v2341 = vadd.f32 %v2336, %v1523
    %v2342 = vmax.f32 %v2072, %v2341
    %v2343 = vld [vmem:[#allocation9] sm:$0xff]
    %v2344 = vmul.f32 %v2337, %v2343
    %v2345 = vmul.f32 %v2338, %v2343
    %v2346 = vpack.c.bf16 %v2344, %v2344
    %v2347 = vpack.c.bf16 %v2345, %v2345
    %v2348 = vpack.c.bf16 %v2340, %v2340
    %v2349 = vpack.c.bf16 %v2342, %v2342
    %v2350 = vld [vmem:[#allocation14] sm:$0xff]
    %v2351 = vld [vmem:[#allocation14 + $0x8] sm:$0xff]
    %v2352 = vld [vmem:[#allocation14 + $0x10] sm:$0xff]
    %v2353 = vld [vmem:[#allocation14 + $0x18] sm:$0xff]
    %v2354 = vld [vmem:[#allocation14 + $0x20] sm:$0xff]
    %v2355 = vld [vmem:[#allocation14 + $0x28] sm:$0xff]
    %v2356 = vld [vmem:[#allocation14 + $0x30] sm:$0xff]
    %v2357 = vld [vmem:[#allocation14 + $0x38] sm:$0xff]
    %v2358 = vld [vmem:[#allocation14 + $0x40] sm:$0xff]
    %v2359 = vld [vmem:[#allocation14 + $0x48] sm:$0xff]
    %v2360 = vld [vmem:[#allocation14 + $0x50] sm:$0xff]
    %v2361 = vld [vmem:[#allocation14 + $0x58] sm:$0xff]
    %v2362 = vld [vmem:[#allocation14 + $0x60] sm:$0xff]
    %v2363 = vld [vmem:[#allocation14 + $0x68] sm:$0xff]
    %v2364 = vld [vmem:[#allocation14 + $0x70] sm:$0xff]
    %v2365 = vld [vmem:[#allocation14 + $0x78] sm:$0xff]
    %v2366 = vld [vmem:[#allocation14 + $0x80] sm:$0xff]
    %v2367 = vld [vmem:[#allocation14 + $0x88] sm:$0xff]
    %v2368 = vld [vmem:[#allocation14 + $0x90] sm:$0xff]
    %v2369 = vld [vmem:[#allocation14 + $0x98] sm:$0xff]
    %v2370 = vld [vmem:[#allocation14 + $0xa0] sm:$0xff]
    %v2371 = vld [vmem:[#allocation14 + $0xa8] sm:$0xff]
    %v2372 = vld [vmem:[#allocation14 + $0xb0] sm:$0xff]
    %v2373 = vld [vmem:[#allocation14 + $0xb8] sm:$0xff]
    %v2374 = vld [vmem:[#allocation14 + $0xc0] sm:$0xff]
    %v2375 = vld [vmem:[#allocation14 + $0xc8] sm:$0xff]
    %v2376 = vld [vmem:[#allocation14 + $0xd0] sm:$0xff]
    %v2377 = vld [vmem:[#allocation14 + $0xd8] sm:$0xff]
    %v2378 = vld [vmem:[#allocation14 + $0xe0] sm:$0xff]
    %v2379 = vld [vmem:[#allocation14 + $0xe8] sm:$0xff]
    %v2380 = vld [vmem:[#allocation14 + $0xf0] sm:$0xff]
    %v2381 = vld [vmem:[#allocation14 + $0xf8] sm:$0xff]
    %v2382 = vld [vmem:[#allocation14 + $0x100] sm:$0xff]
    %v2383 = vld [vmem:[#allocation14 + $0x108] sm:$0xff]
    %v2384 = vld [vmem:[#allocation14 + $0x110] sm:$0xff]
    %v2385 = vld [vmem:[#allocation14 + $0x118] sm:$0xff]
    %v2386 = vld [vmem:[#allocation14 + $0x120] sm:$0xff]
    %v2387 = vld [vmem:[#allocation14 + $0x128] sm:$0xff]
    %v2388 = vld [vmem:[#allocation14 + $0x130] sm:$0xff]
    %v2389 = vld [vmem:[#allocation14 + $0x138] sm:$0xff]
    %v2390 = vld [vmem:[#allocation14 + $0x140] sm:$0xff]
    %v2391 = vld [vmem:[#allocation14 + $0x148] sm:$0xff]
    %v2392 = vld [vmem:[#allocation14 + $0x150] sm:$0xff]
    %v2393 = vld [vmem:[#allocation14 + $0x158] sm:$0xff]
    %v2394 = vld [vmem:[#allocation14 + $0x160] sm:$0xff]
    %v2395 = vld [vmem:[#allocation14 + $0x168] sm:$0xff]
    %v2396 = vld [vmem:[#allocation14 + $0x170] sm:$0xff]
    %v2397 = vld [vmem:[#allocation14 + $0x178] sm:$0xff]
    %v2398 = vld [vmem:[#allocation14 + $0x180] sm:$0xff]
    %v2399 = vld [vmem:[#allocation14 + $0x188] sm:$0xff]
    %v2400 = vld [vmem:[#allocation14 + $0x190] sm:$0xff]
    %v2401 = vld [vmem:[#allocation14 + $0x198] sm:$0xff]
    %v2402 = vld [vmem:[#allocation14 + $0x1a0] sm:$0xff]
    %v2403 = vld [vmem:[#allocation14 + $0x1a8] sm:$0xff]
    %v2404 = vld [vmem:[#allocation14 + $0x1b0] sm:$0xff]
    %v2405 = vld [vmem:[#allocation14 + $0x1b8] sm:$0xff]
    %v2406 = vld [vmem:[#allocation14 + $0x1c0] sm:$0xff]
    %v2407 = vld [vmem:[#allocation14 + $0x1c8] sm:$0xff]
    %v2408 = vld [vmem:[#allocation14 + $0x1d0] sm:$0xff]
    %v2409 = vld [vmem:[#allocation14 + $0x1d8] sm:$0xff]
    %v2410 = vld [vmem:[#allocation14 + $0x1e0] sm:$0xff]
    %v2411 = vld [vmem:[#allocation14 + $0x1e8] sm:$0xff]
    %v2412 = vld [vmem:[#allocation14 + $0x1f0] sm:$0xff]
    %v2413 = vld [vmem:[#allocation14 + $0x1f8] sm:$0xff]
    %v2478 = vunpack.c.l.b16 %v2350
    %v2479 = vunpack.c.h.b16 %v2350
    %v2480 = vunpack.c.l.b16 %v2351
    %v2481 = vunpack.c.h.b16 %v2351
    %v2482 = vunpack.c.l.b16 %v2352
    %v2483 = vunpack.c.h.b16 %v2352
    %v2484 = vunpack.c.l.b16 %v2353
    %v2485 = vunpack.c.h.b16 %v2353
    %v2486 = vunpack.c.l.b16 %v2354
    %v2487 = vunpack.c.h.b16 %v2354
    %v2488 = vunpack.c.l.b16 %v2355
    %v2489 = vunpack.c.h.b16 %v2355
    %v2490 = vunpack.c.l.b16 %v2356
    %v2491 = vunpack.c.h.b16 %v2356
    %v2492 = vunpack.c.l.b16 %v2357
    %v2493 = vunpack.c.h.b16 %v2357
    %v2494 = vunpack.c.l.b16 %v2358
    %v2495 = vunpack.c.h.b16 %v2358
    %v2496 = vunpack.c.l.b16 %v2359
    %v2497 = vunpack.c.h.b16 %v2359
    %v2498 = vunpack.c.l.b16 %v2360
    %v2499 = vunpack.c.h.b16 %v2360
    %v2500 = vunpack.c.l.b16 %v2361
    %v2501 = vunpack.c.h.b16 %v2361
    %v2502 = vunpack.c.l.b16 %v2362
    %v2503 = vunpack.c.h.b16 %v2362
    %v2504 = vunpack.c.l.b16 %v2363
    %v2505 = vunpack.c.h.b16 %v2363
    %v2506 = vunpack.c.l.b16 %v2364
    %v2507 = vunpack.c.h.b16 %v2364
    %v2508 = vunpack.c.l.b16 %v2365
    %v2509 = vunpack.c.h.b16 %v2365
    %v2510 = vunpack.c.l.b16 %v2366
    %v2511 = vunpack.c.h.b16 %v2366
    %v2512 = vunpack.c.l.b16 %v2367
    %v2513 = vunpack.c.h.b16 %v2367
    %v2514 = vunpack.c.l.b16 %v2368
    %v2515 = vunpack.c.h.b16 %v2368
    %v2516 = vunpack.c.l.b16 %v2369
    %v2517 = vunpack.c.h.b16 %v2369
    %v2518 = vunpack.c.l.b16 %v2370
    %v2519 = vunpack.c.h.b16 %v2370
    %v2520 = vunpack.c.l.b16 %v2371
    %v2521 = vunpack.c.h.b16 %v2371
    %v2522 = vunpack.c.l.b16 %v2372
    %v2523 = vunpack.c.h.b16 %v2372
    %v2524 = vunpack.c.l.b16 %v2373
    %v2525 = vunpack.c.h.b16 %v2373
    %v2526 = vunpack.c.l.b16 %v2374
    %v2527 = vunpack.c.h.b16 %v2374
    %v2528 = vunpack.c.l.b16 %v2375
    %v2529 = vunpack.c.h.b16 %v2375
    %v2530 = vunpack.c.l.b16 %v2376
    %v2531 = vunpack.c.h.b16 %v2376
    %v2532 = vunpack.c.l.b16 %v2377
    %v2533 = vunpack.c.h.b16 %v2377
    %v2534 = vunpack.c.l.b16 %v2378
    %v2535 = vunpack.c.h.b16 %v2378
    %v2536 = vunpack.c.l.b16 %v2379
    %v2537 = vunpack.c.h.b16 %v2379
    %v2538 = vunpack.c.l.b16 %v2380
    %v2539 = vunpack.c.h.b16 %v2380
    %v2540 = vunpack.c.l.b16 %v2381
    %v2541 = vunpack.c.h.b16 %v2381
    %v2542 = vunpack.c.l.b16 %v2382
    %v2543 = vunpack.c.h.b16 %v2382
    %v2544 = vunpack.c.l.b16 %v2383
    %v2545 = vunpack.c.h.b16 %v2383
    %v2546 = vunpack.c.l.b16 %v2384
    %v2547 = vunpack.c.h.b16 %v2384
    %v2548 = vunpack.c.l.b16 %v2385
    %v2549 = vunpack.c.h.b16 %v2385
    %v2550 = vunpack.c.l.b16 %v2386
    %v2551 = vunpack.c.h.b16 %v2386
    %v2552 = vunpack.c.l.b16 %v2387
    %v2553 = vunpack.c.h.b16 %v2387
    %v2554 = vunpack.c.l.b16 %v2388
    %v2555 = vunpack.c.h.b16 %v2388
    %v2556 = vunpack.c.l.b16 %v2389
    %v2557 = vunpack.c.h.b16 %v2389
    %v2558 = vunpack.c.l.b16 %v2390
    %v2559 = vunpack.c.h.b16 %v2390
    %v2560 = vunpack.c.l.b16 %v2391
    %v2561 = vunpack.c.h.b16 %v2391
    %v2562 = vunpack.c.l.b16 %v2392
    %v2563 = vunpack.c.h.b16 %v2392
    %v2564 = vunpack.c.l.b16 %v2393
    %v2565 = vunpack.c.h.b16 %v2393
    %v2566 = vunpack.c.l.b16 %v2394
    %v2567 = vunpack.c.h.b16 %v2394
    %v2568 = vunpack.c.l.b16 %v2395
    %v2569 = vunpack.c.h.b16 %v2395
    %v2570 = vunpack.c.l.b16 %v2396
    %v2571 = vunpack.c.h.b16 %v2396
    %v2572 = vunpack.c.l.b16 %v2397
    %v2573 = vunpack.c.h.b16 %v2397
    %v2574 = vunpack.c.l.b16 %v2398
    %v2575 = vunpack.c.h.b16 %v2398
    %v2576 = vunpack.c.l.b16 %v2399
    %v2577 = vunpack.c.h.b16 %v2399
    %v2578 = vunpack.c.l.b16 %v2400
    %v2579 = vunpack.c.h.b16 %v2400
    %v2580 = vunpack.c.l.b16 %v2401
    %v2581 = vunpack.c.h.b16 %v2401
    %v2582 = vunpack.c.l.b16 %v2402
    %v2583 = vunpack.c.h.b16 %v2402
    %v2584 = vunpack.c.l.b16 %v2403
    %v2585 = vunpack.c.h.b16 %v2403
    %v2586 = vunpack.c.l.b16 %v2404
    %v2587 = vunpack.c.h.b16 %v2404
    %v2588 = vunpack.c.l.b16 %v2405
    %v2589 = vunpack.c.h.b16 %v2405
    %v2590 = vunpack.c.l.b16 %v2406
    %v2591 = vunpack.c.h.b16 %v2406
    %v2592 = vunpack.c.l.b16 %v2407
    %v2593 = vunpack.c.h.b16 %v2407
    %v2594 = vunpack.c.l.b16 %v2408
    %v2595 = vunpack.c.h.b16 %v2408
    %v2596 = vunpack.c.l.b16 %v2409
    %v2597 = vunpack.c.h.b16 %v2409
    %v2598 = vunpack.c.l.b16 %v2410
    %v2599 = vunpack.c.h.b16 %v2410
    %v2600 = vunpack.c.l.b16 %v2411
    %v2601 = vunpack.c.h.b16 %v2411
    %v2602 = vunpack.c.l.b16 %v2412
    %v2603 = vunpack.c.h.b16 %v2412
    %v2604 = vunpack.c.l.b16 %v2413
    %v2605 = vunpack.c.h.b16 %v2413
    %v2606 = vpack.c.b16 %v2480, %v2478
    %v2607 = vpack.c.b16 %v2481, %v2479
    %v2608 = vpack.c.b16 %v2484, %v2482
    %v2609 = vpack.c.b16 %v2485, %v2483
    %v2610 = vpack.c.b16 %v2488, %v2486
    %v2611 = vpack.c.b16 %v2489, %v2487
    %v2612 = vpack.c.b16 %v2492, %v2490
    %v2613 = vpack.c.b16 %v2493, %v2491
    %v2614 = vpack.c.b16 %v2496, %v2494
    %v2615 = vpack.c.b16 %v2497, %v2495
    %v2616 = vpack.c.b16 %v2500, %v2498
    %v2617 = vpack.c.b16 %v2501, %v2499
    %v2618 = vpack.c.b16 %v2504, %v2502
    %v2619 = vpack.c.b16 %v2505, %v2503
    %v2620 = vpack.c.b16 %v2508, %v2506
    %v2621 = vpack.c.b16 %v2509, %v2507
    %v2622 = vpack.c.b16 %v2512, %v2510
    %v2623 = vpack.c.b16 %v2513, %v2511
    %v2624 = vpack.c.b16 %v2516, %v2514
    %v2625 = vpack.c.b16 %v2517, %v2515
    %v2626 = vpack.c.b16 %v2520, %v2518
    %v2627 = vpack.c.b16 %v2521, %v2519
    %v2628 = vpack.c.b16 %v2524, %v2522
    %v2629 = vpack.c.b16 %v2525, %v2523
    %v2630 = vpack.c.b16 %v2528, %v2526
    %v2631 = vpack.c.b16 %v2529, %v2527
    %v2632 = vpack.c.b16 %v2532, %v2530
    %v2633 = vpack.c.b16 %v2533, %v2531
    %v2634 = vpack.c.b16 %v2536, %v2534
    %v2635 = vpack.c.b16 %v2537, %v2535
    %v2636 = vpack.c.b16 %v2540, %v2538
    %v2637 = vpack.c.b16 %v2541, %v2539
    %v2638 = vpack.c.b16 %v2544, %v2542
    %v2639 = vpack.c.b16 %v2545, %v2543
    %v2640 = vpack.c.b16 %v2548, %v2546
    %v2641 = vpack.c.b16 %v2549, %v2547
    %v2642 = vpack.c.b16 %v2552, %v2550
    %v2643 = vpack.c.b16 %v2553, %v2551
    %v2644 = vpack.c.b16 %v2556, %v2554
    %v2645 = vpack.c.b16 %v2557, %v2555
    %v2646 = vpack.c.b16 %v2560, %v2558
    %v2647 = vpack.c.b16 %v2561, %v2559
    %v2648 = vpack.c.b16 %v2564, %v2562
    %v2649 = vpack.c.b16 %v2565, %v2563
    %v2650 = vpack.c.b16 %v2568, %v2566
    %v2651 = vpack.c.b16 %v2569, %v2567
    %v2652 = vpack.c.b16 %v2572, %v2570
    %v2653 = vpack.c.b16 %v2573, %v2571
    %v2654 = vpack.c.b16 %v2576, %v2574
    %v2655 = vpack.c.b16 %v2577, %v2575
    %v2656 = vpack.c.b16 %v2580, %v2578
    %v2657 = vpack.c.b16 %v2581, %v2579
    %v2658 = vpack.c.b16 %v2584, %v2582
    %v2659 = vpack.c.b16 %v2585, %v2583
    %v2660 = vpack.c.b16 %v2588, %v2586
    %v2661 = vpack.c.b16 %v2589, %v2587
    %v2662 = vpack.c.b16 %v2592, %v2590
    %v2663 = vpack.c.b16 %v2593, %v2591
    %v2664 = vpack.c.b16 %v2596, %v2594
    %v2665 = vpack.c.b16 %v2597, %v2595
    %v2666 = vpack.c.b16 %v2600, %v2598
    %v2667 = vpack.c.b16 %v2601, %v2599
    %v2668 = vpack.c.b16 %v2604, %v2602
    %v2669 = vpack.c.b16 %v2605, %v2603
    %2734 = vmatpush.bf16.msra.mxu0 %v2620
    %2735 = vmatpush.bf16.msra.mxu0 %v2618
    %2736 = vmatpush.bf16.msra.mxu0 %v2616
    %2737 = vmatpush.bf16.msra.mxu0 %v2614
    %2738 = vmatpush.bf16.msra.mxu0 %v2612
    %2739 = vmatpush.bf16.msra.mxu0 %v2610
    %2740 = vmatpush.bf16.msra.mxu0 %v2608
    %2741 = vmatpush.bf16.msra.mxu0 %v2606
    %2742 = vmatmul.bf16.gmra.mxu0 %v2346
    %v2743 = vpop.f32.mrf.mxu0
    %v2744 = vadd.f32 0.0, %v2743
    %v2745 = vpop.f32.mrf.mxu0
    %2746 = vdwg.mxu0
    %2747 = vmatpush.bf16.msra.mxu0 %v2636
    %2748 = vmatpush.bf16.msra.mxu0 %v2634
    %2749 = vmatpush.bf16.msra.mxu0 %v2632
    %2750 = vmatpush.bf16.msra.mxu0 %v2630
    %2751 = vmatpush.bf16.msra.mxu0 %v2628
    %2752 = vmatpush.bf16.msra.mxu0 %v2626
    %2753 = vmatpush.bf16.msra.mxu0 %v2624
    %2754 = vmatpush.bf16.msra.mxu0 %v2622
    %2755 = vmatmul.bf16.gmra.mxu0 %v2347
    %v2756 = vpop.f32.mrf.mxu0
    %v2757 = vadd.f32 %v2744, %v2756
    %v2758 = vpop.f32.mrf.mxu0
    %2759 = vdwg.mxu0
    %2760 = vmatpush.bf16.msra.mxu0 %v2652
    %2761 = vmatpush.bf16.msra.mxu0 %v2650
    %2762 = vmatpush.bf16.msra.mxu0 %v2648
    %2763 = vmatpush.bf16.msra.mxu0 %v2646
    %2764 = vmatpush.bf16.msra.mxu0 %v2644
    %2765 = vmatpush.bf16.msra.mxu0 %v2642
    %2766 = vmatpush.bf16.msra.mxu0 %v2640
    %2767 = vmatpush.bf16.msra.mxu0 %v2638
    %2768 = vmatmul.bf16.gmra.mxu0 %v2348
    %v2769 = vpop.f32.mrf.mxu0
    %v2770 = vadd.f32 %v2757, %v2769
    %v2771 = vpop.f32.mrf.mxu0
    %2772 = vdwg.mxu0
    %2773 = vmatpush.bf16.msra.mxu0 %v2668
    %2774 = vmatpush.bf16.msra.mxu0 %v2666
    %2775 = vmatpush.bf16.msra.mxu0 %v2664
    %2776 = vmatpush.bf16.msra.mxu0 %v2662
    %2777 = vmatpush.bf16.msra.mxu0 %v2660
    %2778 = vmatpush.bf16.msra.mxu0 %v2658
    %2779 = vmatpush.bf16.msra.mxu0 %v2656
    %2780 = vmatpush.bf16.msra.mxu0 %v2654
    %2781 = vmatmul.bf16.gmra.mxu0 %v2349
    %v2782 = vpop.f32.mrf.mxu0
    %v2783 = vadd.f32 %v2770, %v2782
    %v2784 = vpop.f32.mrf.mxu0
    %2785 = vdwg.mxu0
    %2786 = vmatpush.bf16.msra.mxu0 %v2621
    %2787 = vmatpush.bf16.msra.mxu0 %v2619
    %2788 = vmatpush.bf16.msra.mxu0 %v2617
    %2789 = vmatpush.bf16.msra.mxu0 %v2615
    %2790 = vmatpush.bf16.msra.mxu0 %v2613
    %2791 = vmatpush.bf16.msra.mxu0 %v2611
    %2792 = vmatpush.bf16.msra.mxu0 %v2609
    %2793 = vmatpush.bf16.msra.mxu0 %v2607
    %2794 = vmatmul.bf16.gmra.mxu0 %v2346
    %v2795 = vpop.f32.mrf.mxu0
    %v2796 = vadd.f32 0.0, %v2795
    %v2797 = vpop.f32.mrf.mxu0
    %2798 = vdwg.mxu0
    %2799 = vmatpush.bf16.msra.mxu0 %v2637
    %2800 = vmatpush.bf16.msra.mxu0 %v2635
    %2801 = vmatpush.bf16.msra.mxu0 %v2633
    %2802 = vmatpush.bf16.msra.mxu0 %v2631
    %2803 = vmatpush.bf16.msra.mxu0 %v2629
    %2804 = vmatpush.bf16.msra.mxu0 %v2627
    %2805 = vmatpush.bf16.msra.mxu0 %v2625
    %2806 = vmatpush.bf16.msra.mxu0 %v2623
    %2807 = vmatmul.bf16.gmra.mxu0 %v2347
    %v2808 = vpop.f32.mrf.mxu0
    %v2809 = vadd.f32 %v2796, %v2808
    %v2810 = vpop.f32.mrf.mxu0
    %2811 = vdwg.mxu0
    %2812 = vmatpush.bf16.msra.mxu0 %v2653
    %2813 = vmatpush.bf16.msra.mxu0 %v2651
    %2814 = vmatpush.bf16.msra.mxu0 %v2649
    %2815 = vmatpush.bf16.msra.mxu0 %v2647
    %2816 = vmatpush.bf16.msra.mxu0 %v2645
    %2817 = vmatpush.bf16.msra.mxu0 %v2643
    %2818 = vmatpush.bf16.msra.mxu0 %v2641
    %2819 = vmatpush.bf16.msra.mxu0 %v2639
    %2820 = vmatmul.bf16.gmra.mxu0 %v2348
    %v2821 = vpop.f32.mrf.mxu0
    %v2822 = vadd.f32 %v2809, %v2821
    %v2823 = vpop.f32.mrf.mxu0
    %2824 = vdwg.mxu0
    %2825 = vmatpush.bf16.msra.mxu0 %v2669
    %2826 = vmatpush.bf16.msra.mxu0 %v2667
    %2827 = vmatpush.bf16.msra.mxu0 %v2665
    %2828 = vmatpush.bf16.msra.mxu0 %v2663
    %2829 = vmatpush.bf16.msra.mxu0 %v2661
    %2830 = vmatpush.bf16.msra.mxu0 %v2659
    %2831 = vmatpush.bf16.msra.mxu0 %v2657
    %2832 = vmatpush.bf16.msra.mxu0 %v2655
    %2833 = vmatmul.bf16.gmra.mxu0 %v2349
    %v2834 = vpop.f32.mrf.mxu0
    %v2835 = vadd.f32 %v2822, %v2834
    %v2836 = vpop.f32.mrf.mxu0
    %2837 = vdwg.mxu0
    %v2839 = vrot.slane %v2835, 2
    %v2841 = vadd.f32 %v2783, %v2839
    %v2842 = vld [vmem:[%s7] sm:$0x1]
    %v2844 = vperm.slane %v2842, 0
    %v2846 = vadd.f32 %v2841, %v2844
    %vm2847 = vcmask 1041408
    %v2848 = vsel %vm2847, %v2846, -inf
    %2849 = vmax.xlane.f32.xlu0 %v2848
    %v2850 = vpop.xlane.xlu0 %2849
    %v2851 = vsub.f32 %v2846, %v2850
    %v2852 = vmul.f32 %v2851, 1.442695
    %v2853 = vpow.pop %v2852
    %v2854 = vsel %vm2847, %v2853, 0.0
    %2855 = vadd.xlane.f32.xlu0 %v2854
    %v2856 = vpop.xlane.xlu0 %2855
    %v2857 = vrcp.pop %v2856
    %v2858 = vmul.f32 %v2856, %v2857
    %v2859 = vsub.f32 1.0, %v2858
    %v2860 = vmul.f32 %v2857, %v2859
    %v2861 = vadd.f32 %v2857, %v2860
    %vm2862 = vweird.f32 %v2856
    %vm2863 = vweird.f32 %v2857
    %vm2864 = vmor %vm2862, %vm2863
    %v2865 = vsel %vm2864, %v2857, %v2861
    %v2866 = vand.u32 2147483647, %v2856
    %vm2867 = vcmp.eq.f32.partialorder %v2866, 8.507059e+37
    %v2868 = vand.u32 %v2856, 2147483648
    %v2869 = vor.u32 1.1754944e-38, %v2868
    %v2870 = vsel %vm2867, %v2869, %v2865
    %v2871 = vmul.f32 %v2853, %v2870
    %2872 = vst [vmem:[#allocation15] sm:$0x3] %v2871
    // Predicated region
    $region62: #{tpu_custom_call.1} parent=1 // pred_check
      _
    $region63: #{tpu_custom_call.1} parent=1 // pred_check_branch
      %2874 = sbr.rel (0) target = $region65
    $region64: #{tpu_custom_call.1} parent=1 // pred_region
      %2876 = vsyncadd [#allocation5], 0
      %s2878 = sshll.u32 [#allocation15], 4
      %s2879 = int_to_ptr.vmem [resolvable:$true] %s2878
      %s2880 = sshll.u32 %s8, 4
      %s2881 = int_to_ptr.hbm [resolvable:$true] %s2880
      %2883 = dma.vmem_to_hbm [thread:$0]  %s2879, 32, %s2881, [#allocation5]
    $region65: #{tpu_custom_call.1} parent=1 // pred_fallthru
      _
    // Predicated region
    $region66: #{tpu_custom_call.1} parent=1 // pred_check
      _
    $region67: #{tpu_custom_call.1} parent=1 // pred_check_branch
      %2885 = sbr.rel (0) target = $region69
    $region68: #{tpu_custom_call.1} parent=1 // pred_region
      %2887 = dma.done [#allocation5], 32
    $region69: #{tpu_custom_call.1} parent=1 // pred_fallthru
      _
    %2888 = vsyncpa [#allocation4], 1
    %2889 = vsyncpa [#allocation7], 1
    %2890 = vsyncpa [#allocation10], 1
    %2891 = vsyncpa [#allocation13], 1
    %2892 = vsyncpa [#allocation5], 1

</llo_original>
